<compile_context>
chip_gen: v7x
topology: tpu7x:2x2x1
jax: 0.10.0
libtpu: 0.0.40
codegen_flags: <defaults>
</compile_context>

<pallas_src>
import functools

import jax
import jax.numpy as jnp
from jax import lax
from jax.experimental import pallas as pl
from jax.experimental.pallas import tpu as pltpu

EPS = 1e-5          # InstanceNorm3d default eps
NEG_SLOPE = 0.01    # LeakyReLU default negative slope

# Tap enumeration order == conv-weight K order (kd, kh, kw), kw fastest.
_TAPS = [(od, oh, ow) for od in (-1, 0, 1) for oh in (-1, 0, 1) for ow in (-1, 0, 1)]


def _k_layout(c):
    """im2col row layout for a conv with `c` input channels.

    Taps are written to the bf16 scratch in groups whose row count is a
    multiple of 16 (the native bf16 sublane tile), so every scratch store is
    tile-aligned.  Returns (taps_per_write, num_groups, padded_K).
    """
    tpw = max(1, 16 // c)
    assert (tpw * c) % 16 == 0, (
        f"channel count {c} must divide 16 or be a multiple of 16")
    ngrp = -(-len(_TAPS) // tpw)
    return tpw, ngrp, ngrp * tpw * c


# --------------------- Conv + InstanceNorm + LeakyReLU (in-kernel) ----------

def _conv3_in_lrelu(x_bf, w_ref, b_ref, mask_ref, im2col_ref, *, dims):
    """Conv3d(k=3,s=1,p=1) + bias -> InstanceNorm3d -> LeakyReLU.

    x_bf:       (C, S) bf16, S = D*H*W flattened in (d, h, w) order (lanes).
    w_ref:      (Cout, Kpad) bf16 ref, K ordered (kd, kh, kw, cin), zero-padded.
    b_ref:      (Cout, 1) f32 ref.
    mask_ref:   (27, S) f32 ref: conv zero-padding mask per tap.
    im2col_ref: (Kmax, S) bf16 VMEM scratch.
    returns (Cout, S) f32.
    """
    _, H, W = dims
    C, S = x_bf.shape
    HW = H * W
    tpw, ngrp, kpad = _k_layout(C)
    rows = tpw * C

    # Build im2col directly into the VMEM scratch (bounded live ranges; each
    # store is a full 16-row-aligned bf16 tile group).
    for g in range(ngrp):
        parts = []
        for j in range(tpw):
            t = g * tpw + j
            if t < len(_TAPS):
                od, oh, ow = _TAPS[t]
                off = od * HW + oh * W + ow
                # Rotate so lane s holds x[:, s + off]; out-of-volume lanes
                # (including rotation wrap-around) are zeroed by the mask,
                # which implements the conv's zero padding.
                tap = x_bf if off == 0 else jnp.roll(x_bf, -off, axis=1)
                if od == 0 and oh == 0 and ow == 0:
                    parts.append(tap)          # center tap mask is all-ones
                else:
                    m = mask_ref[t:t + 1, :].astype(jnp.bfloat16)
                    parts.append(tap * m)      # single bf16 multiply per tap
            else:                              # K zero-pad slot (alignment)
                parts.append(jnp.zeros((C, S), jnp.bfloat16))
        blk = parts[0] if len(parts) == 1 else jnp.concatenate(parts, axis=0)
        im2col_ref[g * rows:(g + 1) * rows, :] = blk

    # One deep-K MXU matmul, bf16 operands streamed from the scratch, f32 acc.
    y = jnp.dot(w_ref[...], im2col_ref[0:kpad, :],
                preferred_element_type=jnp.float32) + b_ref[...]

    # InstanceNorm3d: single-pass statistics (var = E[y^2] - mean^2; safe here
    # since post-conv activations are O(1); clamp guards tiny negatives).
    inv_s = 1.0 / S
    mean = jnp.sum(y, axis=1, keepdims=True) * inv_s
    ex2 = jnp.sum(y * y, axis=1, keepdims=True) * inv_s
    var = jnp.maximum(ex2 - mean * mean, 0.0)
    yn = (y - mean) * lax.rsqrt(var + EPS)
    # Dropout3d == identity (eval), then LeakyReLU.
    return jnp.where(yn >= 0.0, yn, NEG_SLOPE * yn)


# --------------------- MaxPool3d(2,2) + argmax (in-kernel) -------------------

def _maxpool2_argmax(y, *, dims):
    """2x2x2 max + argmax in flat (C, S) layout, all-integer index path.

    The result for the window whose base flat index is s0 (even d, h, w) ends
    up at lane s0; every other lane holds partial reductions / rotation
    wrap-around and is discarded by the wrapper's stride-2 slice.
    Tie-break matches PyTorch (first max in (kd, kh, kw) scan order).
    NaN handling differs slightly from torch.max (strict '>' drops later NaNs).
    """
    _, H, W = dims
    _, S = y.shape
    HW = H * W
    s_iota = lax.broadcasted_iota(jnp.int32, (1, S), 1)

    # w direction (ow = 0 vs 1)
    cv = jnp.roll(y, -1, axis=1)
    take = cv > y
    vals = jnp.where(take, cv, y)
    idx = jnp.where(take, s_iota + 1, s_iota)
    # h direction
    cv, ci = jnp.roll(vals, -W, axis=1), jnp.roll(idx, -W, axis=1)
    take = cv > vals
    vals = jnp.where(take, cv, vals)
    idx = jnp.where(take, ci, idx)
    # d direction
    cv, ci = jnp.roll(vals, -HW, axis=1), jnp.roll(idx, -HW, axis=1)
    take = cv > vals
    vals = jnp.where(take, cv, vals)
    idx = jnp.where(take, ci, idx)
    return vals, idx


# --------------------- Fused Down kernel ------------------------------------

def _down_kernel(mask_ref, x_ref, w1_ref, b1_ref, w2_ref, b2_ref,
                 vals_ref, idx_ref, im2col_ref, *, dims):
    y1 = _conv3_in_lrelu(x_ref[...], w1_ref, b1_ref, mask_ref, im2col_ref,
                         dims=dims)
    y2 = _conv3_in_lrelu(y1.astype(jnp.bfloat16), w2_ref, b2_ref, mask_ref,
                         im2col_ref, dims=dims)
    vals, idx = _maxpool2_argmax(y2, dims=dims)
    vals_ref[...] = vals      # (Cout, S) f32, lane-dense
    idx_ref[...] = idx        # (Cout, S) int32, lane-dense


# --------------------- Down module wrapper -----------------------------------

def init_down_params(key, in_channels):
    out_channels = in_channels * 2
    k1, k2, k3, k4 = jax.random.split(key, 4)
    return {
        "w1": 0.1 * jax.random.normal(
            k1, (out_channels, in_channels, 3, 3, 3), jnp.float32),
        "b1": 0.01 * jax.random.normal(k2, (out_channels,), jnp.float32),
        "w2": 0.1 * jax.random.normal(
            k3, (out_channels, out_channels, 3, 3, 3), jnp.float32),
        "b2": 0.01 * jax.random.normal(k4, (out_channels,), jnp.float32),
    }


def _pack_weight(w):
    """(Cout, Cin, 3, 3, 3) -> (Cout, Kpad) bf16, K ordered (kd, kh, kw, cin)."""
    cout, cin = w.shape[0], w.shape[1]
    _, _, kpad = _k_layout(cin)
    wmat = jnp.transpose(w, (0, 2, 3, 4, 1)).reshape(cout, 27 * cin)
    wmat = jnp.pad(wmat, ((0, 0), (0, kpad - 27 * cin)))
    return wmat.astype(jnp.bfloat16)


def _boundary_masks(D, H, W):
    """(27, S) f32: mask[t, s] == 1 iff tap t of flat position s is in-bounds."""
    dd = jnp.arange(D, dtype=jnp.int32)[:, None, None]
    hh = jnp.arange(H, dtype=jnp.int32)[None, :, None]
    ww = jnp.arange(W, dtype=jnp.int32)[None, None, :]
    rows = []
    for od, oh, ow in _TAPS:
        m = ((dd + od >= 0) & (dd + od < D) &
             (hh + oh >= 0) & (hh + oh < H) &
             (ww + ow >= 0) & (ww + ow < W))
        rows.append(m.reshape(D * H * W))
    return jnp.stack(rows, axis=0).astype(jnp.float32)


@jax.jit
def down_forward(x_ncdhw, params):
    N, Cin, D, H, W = x_ncdhw.shape
    Cout = params["w1"].shape[0]
    S = D * H * W
    D2, H2, W2 = D // 2, H // 2, W // 2

    # ---- wrapper glue: free reshapes + tiny constant tables only ----
    x_flat = x_ncdhw.reshape(N, Cin, S).astype(jnp.bfloat16)
    w1 = _pack_weight(params["w1"])
    w2 = _pack_weight(params["w2"])
    b1 = params["b1"].reshape(Cout, 1).astype(jnp.float32)
    b2 = params["b2"].reshape(Cout, 1).astype(jnp.float32)
    mask = _boundary_masks(D, H, W)                     # (27, S)

    k1 = w1.shape[1]
    k2 = w2.shape[1]
    kmax = max(k1, k2)

    kernel = functools.partial(_down_kernel, dims=(D, H, W))
    vals_full, idx_full = pl.pallas_call(
        kernel,
        out_shape=(jax.ShapeDtypeStruct((N, Cout, S), jnp.float32),
                   jax.ShapeDtypeStruct((N, Cout, S), jnp.int32)),
        grid=(N,),
        in_specs=[
            pl.BlockSpec((27, S), lambda n: (0, 0)),            # boundary masks
            pl.BlockSpec((None, Cin, S), lambda n: (n, 0, 0)),  # x (bf16)
            pl.BlockSpec((Cout, k1), lambda n: (0, 0)),         # w1 (bf16)
            pl.BlockSpec((Cout, 1), lambda n: (0, 0)),          # b1
            pl.BlockSpec((Cout, k2), lambda n: (0, 0)),         # w2 (bf16)
            pl.BlockSpec((Cout, 1), lambda n: (0, 0)),          # b2
        ],
        out_specs=(pl.BlockSpec((None, Cout, S), lambda n: (n, 0, 0)),
                   pl.BlockSpec((None, Cout, S), lambda n: (n, 0, 0))),
        scratch_shapes=[pltpu.VMEM((kmax, S), jnp.bfloat16)],   # im2col scratch
        compiler_params=pltpu.CompilerParams(
            dimension_semantics=("parallel",),      # batch across v7x's two TCs
            vmem_limit_bytes=32 * 1024 * 1024),
    )(mask, x_flat, w1, b1, w2, b2)

    # Stride-2 decimation of the lane-dense full-resolution max/argmax planes:
    # each 2x2x2 window's result sits at its base (even d, h, w) lane; the rest
    # are discarded partials.  This is a cheap XLA slice, no in-kernel gather.
    vals_full = vals_full.reshape(N, Cout, D2, 2, H2, 2, W2, 2)
    idx_full = idx_full.reshape(N, Cout, D2, 2, H2, 2, W2, 2)
    pooled = vals_full[:, :, :, 0, :, 0, :, 0]
    indices = idx_full[:, :, :, 0, :, 0, :, 0]
    return pooled, indices


if __name__ == "__main__":
    key = jax.random.PRNGKey(0)
    kx, kp = jax.random.split(key)

    N, Cin, D, H, W = 2, 4, 8, 8, 8
    x = jax.random.normal(kx, (N, Cin, D, H, W), jnp.float32)
    params = init_down_params(kp, Cin)

    pooled, indices = down_forward(x, params)
    jax.block_until_ready((pooled, indices))

    assert pooled.shape == (N, 2 * Cin, D // 2, H // 2, W // 2)
    assert indices.shape == (N, 2 * Cin, D // 2, H // 2, W // 2)
    assert indices.dtype == jnp.int32

    print("KERNEL_OK")
</pallas_src>

<mosaic_0001>
module attributes {stable_mosaic.version = 11 : i64} {
  func.func @_down_kernel(%arg0: i32, %arg1: memref<27x512xf32, #tpu.memory_space<vmem>>, %arg2: memref<1x4x512xbf16, #tpu.memory_space<vmem>>, %arg3: memref<8x112xbf16, #tpu.memory_space<vmem>>, %arg4: memref<8x1xf32, #tpu.memory_space<vmem>>, %arg5: memref<8x224xbf16, #tpu.memory_space<vmem>>, %arg6: memref<8x1xf32, #tpu.memory_space<vmem>>, %arg7: memref<1x8x512xf32, #tpu.memory_space<vmem>>, %arg8: memref<1x8x512xi32, #tpu.memory_space<vmem>>, %arg9: memref<224x512xbf16, #tpu.memory_space<vmem>>) attributes {dimension_semantics = [#tpu.dimension_semantics<parallel>], iteration_bounds = array<i64: 2>, scalar_prefetch = 0 : i64, scratch_operands = 1 : i64, tpu.core_type = #tpu.core_type<tc>, window_params = [{pipeline_mode = #tpu.pipeline_mode<synchronous>, transform_indices = @transform_0, window_bounds = array<i64: 27, 512>}, {transform_indices = @transform_1, window_bounds = array<i64: 1, 4, 512>}, {pipeline_mode = #tpu.pipeline_mode<synchronous>, transform_indices = @transform_2, window_bounds = array<i64: 8, 112>}, {pipeline_mode = #tpu.pipeline_mode<synchronous>, transform_indices = @transform_3, window_bounds = array<i64: 8, 1>}, {pipeline_mode = #tpu.pipeline_mode<synchronous>, transform_indices = @transform_4, window_bounds = array<i64: 8, 224>}, {pipeline_mode = #tpu.pipeline_mode<synchronous>, transform_indices = @transform_5, window_bounds = array<i64: 8, 1>}, {transform_indices = @transform_6, window_bounds = array<i64: 1, 8, 512>}, {transform_indices = @transform_7, window_bounds = array<i64: 1, 8, 512>}]} {
    %c0 = arith.constant 0 : index
    %c0_0 = arith.constant 0 : index
    %c0_1 = arith.constant 0 : index
    %0 = vector.load %arg2[%c0, %c0_0, %c0_1] : memref<1x4x512xbf16, #tpu.memory_space<vmem>>, vector<1x4x512xbf16>
    %1 = vector.shape_cast %0 : vector<1x4x512xbf16> to vector<4x512xbf16>
    %2 = vector.extract_strided_slice %1 {offsets = [0, 439], sizes = [4, 73], strides = [1, 1]} : vector<4x512xbf16> to vector<4x73xbf16>
    %3 = vector.extract_strided_slice %1 {offsets = [0, 0], sizes = [4, 439], strides = [1, 1]} : vector<4x512xbf16> to vector<4x439xbf16>
    %4 = tpu.concatenate %2, %3 in 1 : vector<4x73xbf16>, vector<4x439xbf16> -> vector<4x512xbf16>
    %c0_2 = arith.constant 0 : index
    %c0_3 = arith.constant 0 : index
    %5 = vector.load %arg1[%c0_2, %c0_3] : memref<27x512xf32, #tpu.memory_space<vmem>>, vector<1x512xf32>
    %6 = arith.truncf %5 : vector<1x512xf32> to vector<1x512xbf16>
    %7 = vector.broadcast %6 : vector<1x512xbf16> to vector<4x512xbf16>
    %8 = arith.mulf %4, %7 : vector<4x512xbf16>
    %9 = vector.extract_strided_slice %1 {offsets = [0, 440], sizes = [4, 72], strides = [1, 1]} : vector<4x512xbf16> to vector<4x72xbf16>
    %10 = vector.extract_strided_slice %1 {offsets = [0, 0], sizes = [4, 440], strides = [1, 1]} : vector<4x512xbf16> to vector<4x440xbf16>
    %11 = tpu.concatenate %9, %10 in 1 : vector<4x72xbf16>, vector<4x440xbf16> -> vector<4x512xbf16>
    %c1 = arith.constant 1 : index
    %c0_4 = arith.constant 0 : index
    %12 = vector.load %arg1[%c1, %c0_4] : memref<27x512xf32, #tpu.memory_space<vmem>>, vector<1x512xf32>
    %13 = arith.truncf %12 : vector<1x512xf32> to vector<1x512xbf16>
    %14 = vector.broadcast %13 : vector<1x512xbf16> to vector<4x512xbf16>
    %15 = arith.mulf %11, %14 : vector<4x512xbf16>
    %16 = vector.extract_strided_slice %1 {offsets = [0, 441], sizes = [4, 71], strides = [1, 1]} : vector<4x512xbf16> to vector<4x71xbf16>
    %17 = vector.extract_strided_slice %1 {offsets = [0, 0], sizes = [4, 441], strides = [1, 1]} : vector<4x512xbf16> to vector<4x441xbf16>
    %18 = tpu.concatenate %16, %17 in 1 : vector<4x71xbf16>, vector<4x441xbf16> -> vector<4x512xbf16>
    %c2 = arith.constant 2 : index
    %c0_5 = arith.constant 0 : index
    %19 = vector.load %arg1[%c2, %c0_5] : memref<27x512xf32, #tpu.memory_space<vmem>>, vector<1x512xf32>
    %20 = arith.truncf %19 : vector<1x512xf32> to vector<1x512xbf16>
    %21 = vector.broadcast %20 : vector<1x512xbf16> to vector<4x512xbf16>
    %22 = arith.mulf %18, %21 : vector<4x512xbf16>
    %23 = vector.extract_strided_slice %1 {offsets = [0, 447], sizes = [4, 65], strides = [1, 1]} : vector<4x512xbf16> to vector<4x65xbf16>
    %24 = vector.extract_strided_slice %1 {offsets = [0, 0], sizes = [4, 447], strides = [1, 1]} : vector<4x512xbf16> to vector<4x447xbf16>
    %25 = tpu.concatenate %23, %24 in 1 : vector<4x65xbf16>, vector<4x447xbf16> -> vector<4x512xbf16>
    %c3 = arith.constant 3 : index
    %c0_6 = arith.constant 0 : index
    %26 = vector.load %arg1[%c3, %c0_6] : memref<27x512xf32, #tpu.memory_space<vmem>>, vector<1x512xf32>
    %27 = arith.truncf %26 : vector<1x512xf32> to vector<1x512xbf16>
    %28 = vector.broadcast %27 : vector<1x512xbf16> to vector<4x512xbf16>
    %29 = arith.mulf %25, %28 : vector<4x512xbf16>
    %30 = tpu.concatenate %8, %15, %22, %29 in 0 : vector<4x512xbf16>, vector<4x512xbf16>, vector<4x512xbf16>, vector<4x512xbf16> -> vector<16x512xbf16>
    %c0_7 = arith.constant 0 : index
    %c0_8 = arith.constant 0 : index
    %31 = vector.load %arg9[%c0_7, %c0_8] : memref<224x512xbf16, #tpu.memory_space<vmem>>, vector<16x512xbf16>
    tpu.vector_store %arg9[%c0_7, %c0_8], %30 {strides = array<i32>} : memref<224x512xbf16, #tpu.memory_space<vmem>>, vector<16x512xbf16>,
    %32 = vector.extract_strided_slice %1 {offsets = [0, 448], sizes = [4, 64], strides = [1, 1]} : vector<4x512xbf16> to vector<4x64xbf16>
    %33 = vector.extract_strided_slice %1 {offsets = [0, 0], sizes = [4, 448], strides = [1, 1]} : vector<4x512xbf16> to vector<4x448xbf16>
    %34 = tpu.concatenate %32, %33 in 1 : vector<4x64xbf16>, vector<4x448xbf16> -> vector<4x512xbf16>
    %c4 = arith.constant 4 : index
    %c0_9 = arith.constant 0 : index
    %35 = vector.load %arg1[%c4, %c0_9] : memref<27x512xf32, #tpu.memory_space<vmem>>, vector<1x512xf32>
    %36 = arith.truncf %35 : vector<1x512xf32> to vector<1x512xbf16>
    %37 = vector.broadcast %36 : vector<1x512xbf16> to vector<4x512xbf16>
    %38 = arith.mulf %34, %37 : vector<4x512xbf16>
    %39 = vector.extract_strided_slice %1 {offsets = [0, 449], sizes = [4, 63], strides = [1, 1]} : vector<4x512xbf16> to vector<4x63xbf16>
    %40 = vector.extract_strided_slice %1 {offsets = [0, 0], sizes = [4, 449], strides = [1, 1]} : vector<4x512xbf16> to vector<4x449xbf16>
    %41 = tpu.concatenate %39, %40 in 1 : vector<4x63xbf16>, vector<4x449xbf16> -> vector<4x512xbf16>
    %c5 = arith.constant 5 : index
    %c0_10 = arith.constant 0 : index
    %42 = vector.load %arg1[%c5, %c0_10] : memref<27x512xf32, #tpu.memory_space<vmem>>, vector<1x512xf32>
    %43 = arith.truncf %42 : vector<1x512xf32> to vector<1x512xbf16>
    %44 = vector.broadcast %43 : vector<1x512xbf16> to vector<4x512xbf16>
    %45 = arith.mulf %41, %44 : vector<4x512xbf16>
    %46 = vector.extract_strided_slice %1 {offsets = [0, 455], sizes = [4, 57], strides = [1, 1]} : vector<4x512xbf16> to vector<4x57xbf16>
    %47 = vector.extract_strided_slice %1 {offsets = [0, 0], sizes = [4, 455], strides = [1, 1]} : vector<4x512xbf16> to vector<4x455xbf16>
    %48 = tpu.concatenate %46, %47 in 1 : vector<4x57xbf16>, vector<4x455xbf16> -> vector<4x512xbf16>
    %c6 = arith.constant 6 : index
    %c0_11 = arith.constant 0 : index
    %49 = vector.load %arg1[%c6, %c0_11] : memref<27x512xf32, #tpu.memory_space<vmem>>, vector<1x512xf32>
    %50 = arith.truncf %49 : vector<1x512xf32> to vector<1x512xbf16>
    %51 = vector.broadcast %50 : vector<1x512xbf16> to vector<4x512xbf16>
    %52 = arith.mulf %48, %51 : vector<4x512xbf16>
    %53 = vector.extract_strided_slice %1 {offsets = [0, 456], sizes = [4, 56], strides = [1, 1]} : vector<4x512xbf16> to vector<4x56xbf16>
    %54 = vector.extract_strided_slice %1 {offsets = [0, 0], sizes = [4, 456], strides = [1, 1]} : vector<4x512xbf16> to vector<4x456xbf16>
    %55 = tpu.concatenate %53, %54 in 1 : vector<4x56xbf16>, vector<4x456xbf16> -> vector<4x512xbf16>
    %c7 = arith.constant 7 : index
    %c0_12 = arith.constant 0 : index
    %56 = vector.load %arg1[%c7, %c0_12] : memref<27x512xf32, #tpu.memory_space<vmem>>, vector<1x512xf32>
    %57 = arith.truncf %56 : vector<1x512xf32> to vector<1x512xbf16>
    %58 = vector.broadcast %57 : vector<1x512xbf16> to vector<4x512xbf16>
    %59 = arith.mulf %55, %58 : vector<4x512xbf16>
    %60 = tpu.concatenate %38, %45, %52, %59 in 0 : vector<4x512xbf16>, vector<4x512xbf16>, vector<4x512xbf16>, vector<4x512xbf16> -> vector<16x512xbf16>
    %c16 = arith.constant 16 : index
    %c0_13 = arith.constant 0 : index
    %61 = vector.load %arg9[%c16, %c0_13] : memref<224x512xbf16, #tpu.memory_space<vmem>>, vector<16x512xbf16>
    tpu.vector_store %arg9[%c16, %c0_13], %60 {strides = array<i32>} : memref<224x512xbf16, #tpu.memory_space<vmem>>, vector<16x512xbf16>,
    %62 = vector.extract_strided_slice %1 {offsets = [0, 457], sizes = [4, 55], strides = [1, 1]} : vector<4x512xbf16> to vector<4x55xbf16>
    %63 = vector.extract_strided_slice %1 {offsets = [0, 0], sizes = [4, 457], strides = [1, 1]} : vector<4x512xbf16> to vector<4x457xbf16>
    %64 = tpu.concatenate %62, %63 in 1 : vector<4x55xbf16>, vector<4x457xbf16> -> vector<4x512xbf16>
    %c8 = arith.constant 8 : index
    %c0_14 = arith.constant 0 : index
    %65 = vector.load %arg1[%c8, %c0_14] : memref<27x512xf32, #tpu.memory_space<vmem>>, vector<1x512xf32>
    %66 = arith.truncf %65 : vector<1x512xf32> to vector<1x512xbf16>
    %67 = vector.broadcast %66 : vector<1x512xbf16> to vector<4x512xbf16>
    %68 = arith.mulf %64, %67 : vector<4x512xbf16>
    %69 = vector.extract_strided_slice %1 {offsets = [0, 503], sizes = [4, 9], strides = [1, 1]} : vector<4x512xbf16> to vector<4x9xbf16>
    %70 = vector.extract_strided_slice %1 {offsets = [0, 0], sizes = [4, 503], strides = [1, 1]} : vector<4x512xbf16> to vector<4x503xbf16>
    %71 = tpu.concatenate %69, %70 in 1 : vector<4x9xbf16>, vector<4x503xbf16> -> vector<4x512xbf16>
    %c9 = arith.constant 9 : index
    %c0_15 = arith.constant 0 : index
    %72 = vector.load %arg1[%c9, %c0_15] : memref<27x512xf32, #tpu.memory_space<vmem>>, vector<1x512xf32>
    %73 = arith.truncf %72 : vector<1x512xf32> to vector<1x512xbf16>
    %74 = vector.broadcast %73 : vector<1x512xbf16> to vector<4x512xbf16>
    %75 = arith.mulf %71, %74 : vector<4x512xbf16>
    %76 = vector.extract_strided_slice %1 {offsets = [0, 504], sizes = [4, 8], strides = [1, 1]} : vector<4x512xbf16> to vector<4x8xbf16>
    %77 = vector.extract_strided_slice %1 {offsets = [0, 0], sizes = [4, 504], strides = [1, 1]} : vector<4x512xbf16> to vector<4x504xbf16>
    %78 = tpu.concatenate %76, %77 in 1 : vector<4x8xbf16>, vector<4x504xbf16> -> vector<4x512xbf16>
    %c10 = arith.constant 10 : index
    %c0_16 = arith.constant 0 : index
    %79 = vector.load %arg1[%c10, %c0_16] : memref<27x512xf32, #tpu.memory_space<vmem>>, vector<1x512xf32>
    %80 = arith.truncf %79 : vector<1x512xf32> to vector<1x512xbf16>
    %81 = vector.broadcast %80 : vector<1x512xbf16> to vector<4x512xbf16>
    %82 = arith.mulf %78, %81 : vector<4x512xbf16>
    %83 = vector.extract_strided_slice %1 {offsets = [0, 505], sizes = [4, 7], strides = [1, 1]} : vector<4x512xbf16> to vector<4x7xbf16>
    %84 = vector.extract_strided_slice %1 {offsets = [0, 0], sizes = [4, 505], strides = [1, 1]} : vector<4x512xbf16> to vector<4x505xbf16>
    %85 = tpu.concatenate %83, %84 in 1 : vector<4x7xbf16>, vector<4x505xbf16> -> vector<4x512xbf16>
    %c11 = arith.constant 11 : index
    %c0_17 = arith.constant 0 : index
    %86 = vector.load %arg1[%c11, %c0_17] : memref<27x512xf32, #tpu.memory_space<vmem>>, vector<1x512xf32>
    %87 = arith.truncf %86 : vector<1x512xf32> to vector<1x512xbf16>
    %88 = vector.broadcast %87 : vector<1x512xbf16> to vector<4x512xbf16>
    %89 = arith.mulf %85, %88 : vector<4x512xbf16>
    %90 = tpu.concatenate %68, %75, %82, %89 in 0 : vector<4x512xbf16>, vector<4x512xbf16>, vector<4x512xbf16>, vector<4x512xbf16> -> vector<16x512xbf16>
    %c32 = arith.constant 32 : index
    %c0_18 = arith.constant 0 : index
    %91 = vector.load %arg9[%c32, %c0_18] : memref<224x512xbf16, #tpu.memory_space<vmem>>, vector<16x512xbf16>
    tpu.vector_store %arg9[%c32, %c0_18], %90 {strides = array<i32>} : memref<224x512xbf16, #tpu.memory_space<vmem>>, vector<16x512xbf16>,
    %92 = vector.extract_strided_slice %1 {offsets = [0, 511], sizes = [4, 1], strides = [1, 1]} : vector<4x512xbf16> to vector<4x1xbf16>
    %93 = vector.extract_strided_slice %1 {offsets = [0, 0], sizes = [4, 511], strides = [1, 1]} : vector<4x512xbf16> to vector<4x511xbf16>
    %94 = tpu.concatenate %92, %93 in 1 : vector<4x1xbf16>, vector<4x511xbf16> -> vector<4x512xbf16>
    %c12 = arith.constant 12 : index
    %c0_19 = arith.constant 0 : index
    %95 = vector.load %arg1[%c12, %c0_19] : memref<27x512xf32, #tpu.memory_space<vmem>>, vector<1x512xf32>
    %96 = arith.truncf %95 : vector<1x512xf32> to vector<1x512xbf16>
    %97 = vector.broadcast %96 : vector<1x512xbf16> to vector<4x512xbf16>
    %98 = arith.mulf %94, %97 : vector<4x512xbf16>
    %99 = vector.extract_strided_slice %1 {offsets = [0, 1], sizes = [4, 511], strides = [1, 1]} : vector<4x512xbf16> to vector<4x511xbf16>
    %100 = vector.extract_strided_slice %1 {offsets = [0, 0], sizes = [4, 1], strides = [1, 1]} : vector<4x512xbf16> to vector<4x1xbf16>
    %101 = tpu.concatenate %99, %100 in 1 : vector<4x511xbf16>, vector<4x1xbf16> -> vector<4x512xbf16>
    %c14 = arith.constant 14 : index
    %c0_20 = arith.constant 0 : index
    %102 = vector.load %arg1[%c14, %c0_20] : memref<27x512xf32, #tpu.memory_space<vmem>>, vector<1x512xf32>
    %103 = arith.truncf %102 : vector<1x512xf32> to vector<1x512xbf16>
    %104 = vector.broadcast %103 : vector<1x512xbf16> to vector<4x512xbf16>
    %105 = arith.mulf %101, %104 : vector<4x512xbf16>
    %106 = vector.extract_strided_slice %1 {offsets = [0, 7], sizes = [4, 505], strides = [1, 1]} : vector<4x512xbf16> to vector<4x505xbf16>
    %107 = vector.extract_strided_slice %1 {offsets = [0, 0], sizes = [4, 7], strides = [1, 1]} : vector<4x512xbf16> to vector<4x7xbf16>
    %108 = tpu.concatenate %106, %107 in 1 : vector<4x505xbf16>, vector<4x7xbf16> -> vector<4x512xbf16>
    %c15 = arith.constant 15 : index
    %c0_21 = arith.constant 0 : index
    %109 = vector.load %arg1[%c15, %c0_21] : memref<27x512xf32, #tpu.memory_space<vmem>>, vector<1x512xf32>
    %110 = arith.truncf %109 : vector<1x512xf32> to vector<1x512xbf16>
    %111 = vector.broadcast %110 : vector<1x512xbf16> to vector<4x512xbf16>
    %112 = arith.mulf %108, %111 : vector<4x512xbf16>
    %113 = tpu.concatenate %98, %1, %105, %112 in 0 : vector<4x512xbf16>, vector<4x512xbf16>, vector<4x512xbf16>, vector<4x512xbf16> -> vector<16x512xbf16>
    %c48 = arith.constant 48 : index
    %c0_22 = arith.constant 0 : index
    %114 = vector.load %arg9[%c48, %c0_22] : memref<224x512xbf16, #tpu.memory_space<vmem>>, vector<16x512xbf16>
    tpu.vector_store %arg9[%c48, %c0_22], %113 {strides = array<i32>} : memref<224x512xbf16, #tpu.memory_space<vmem>>, vector<16x512xbf16>,
    %115 = vector.extract_strided_slice %1 {offsets = [0, 8], sizes = [4, 504], strides = [1, 1]} : vector<4x512xbf16> to vector<4x504xbf16>
    %116 = vector.extract_strided_slice %1 {offsets = [0, 0], sizes = [4, 8], strides = [1, 1]} : vector<4x512xbf16> to vector<4x8xbf16>
    %117 = tpu.concatenate %115, %116 in 1 : vector<4x504xbf16>, vector<4x8xbf16> -> vector<4x512xbf16>
    %c16_23 = arith.constant 16 : index
    %c0_24 = arith.constant 0 : index
    %118 = vector.load %arg1[%c16_23, %c0_24] : memref<27x512xf32, #tpu.memory_space<vmem>>, vector<1x512xf32>
    %119 = arith.truncf %118 : vector<1x512xf32> to vector<1x512xbf16>
    %120 = vector.broadcast %119 : vector<1x512xbf16> to vector<4x512xbf16>
    %121 = arith.mulf %117, %120 : vector<4x512xbf16>
    %122 = vector.extract_strided_slice %1 {offsets = [0, 9], sizes = [4, 503], strides = [1, 1]} : vector<4x512xbf16> to vector<4x503xbf16>
    %123 = vector.extract_strided_slice %1 {offsets = [0, 0], sizes = [4, 9], strides = [1, 1]} : vector<4x512xbf16> to vector<4x9xbf16>
    %124 = tpu.concatenate %122, %123 in 1 : vector<4x503xbf16>, vector<4x9xbf16> -> vector<4x512xbf16>
    %c17 = arith.constant 17 : index
    %c0_25 = arith.constant 0 : index
    %125 = vector.load %arg1[%c17, %c0_25] : memref<27x512xf32, #tpu.memory_space<vmem>>, vector<1x512xf32>
    %126 = arith.truncf %125 : vector<1x512xf32> to vector<1x512xbf16>
    %127 = vector.broadcast %126 : vector<1x512xbf16> to vector<4x512xbf16>
    %128 = arith.mulf %124, %127 : vector<4x512xbf16>
    %129 = vector.extract_strided_slice %1 {offsets = [0, 55], sizes = [4, 457], strides = [1, 1]} : vector<4x512xbf16> to vector<4x457xbf16>
    %130 = vector.extract_strided_slice %1 {offsets = [0, 0], sizes = [4, 55], strides = [1, 1]} : vector<4x512xbf16> to vector<4x55xbf16>
    %131 = tpu.concatenate %129, %130 in 1 : vector<4x457xbf16>, vector<4x55xbf16> -> vector<4x512xbf16>
    %c18 = arith.constant 18 : index
    %c0_26 = arith.constant 0 : index
    %132 = vector.load %arg1[%c18, %c0_26] : memref<27x512xf32, #tpu.memory_space<vmem>>, vector<1x512xf32>
    %133 = arith.truncf %132 : vector<1x512xf32> to vector<1x512xbf16>
    %134 = vector.broadcast %133 : vector<1x512xbf16> to vector<4x512xbf16>
    %135 = arith.mulf %131, %134 : vector<4x512xbf16>
    %136 = vector.extract_strided_slice %1 {offsets = [0, 56], sizes = [4, 456], strides = [1, 1]} : vector<4x512xbf16> to vector<4x456xbf16>
    %137 = vector.extract_strided_slice %1 {offsets = [0, 0], sizes = [4, 56], strides = [1, 1]} : vector<4x512xbf16> to vector<4x56xbf16>
    %138 = tpu.concatenate %136, %137 in 1 : vector<4x456xbf16>, vector<4x56xbf16> -> vector<4x512xbf16>
    %c19 = arith.constant 19 : index
    %c0_27 = arith.constant 0 : index
    %139 = vector.load %arg1[%c19, %c0_27] : memref<27x512xf32, #tpu.memory_space<vmem>>, vector<1x512xf32>
    %140 = arith.truncf %139 : vector<1x512xf32> to vector<1x512xbf16>
    %141 = vector.broadcast %140 : vector<1x512xbf16> to vector<4x512xbf16>
    %142 = arith.mulf %138, %141 : vector<4x512xbf16>
    %143 = tpu.concatenate %121, %128, %135, %142 in 0 : vector<4x512xbf16>, vector<4x512xbf16>, vector<4x512xbf16>, vector<4x512xbf16> -> vector<16x512xbf16>
    %c64 = arith.constant 64 : index
    %c0_28 = arith.constant 0 : index
    %144 = vector.load %arg9[%c64, %c0_28] : memref<224x512xbf16, #tpu.memory_space<vmem>>, vector<16x512xbf16>
    tpu.vector_store %arg9[%c64, %c0_28], %143 {strides = array<i32>} : memref<224x512xbf16, #tpu.memory_space<vmem>>, vector<16x512xbf16>,
    %145 = vector.extract_strided_slice %1 {offsets = [0, 57], sizes = [4, 455], strides = [1, 1]} : vector<4x512xbf16> to vector<4x455xbf16>
    %146 = vector.extract_strided_slice %1 {offsets = [0, 0], sizes = [4, 57], strides = [1, 1]} : vector<4x512xbf16> to vector<4x57xbf16>
    %147 = tpu.concatenate %145, %146 in 1 : vector<4x455xbf16>, vector<4x57xbf16> -> vector<4x512xbf16>
    %c20 = arith.constant 20 : index
    %c0_29 = arith.constant 0 : index
    %148 = vector.load %arg1[%c20, %c0_29] : memref<27x512xf32, #tpu.memory_space<vmem>>, vector<1x512xf32>
    %149 = arith.truncf %148 : vector<1x512xf32> to vector<1x512xbf16>
    %150 = vector.broadcast %149 : vector<1x512xbf16> to vector<4x512xbf16>
    %151 = arith.mulf %147, %150 : vector<4x512xbf16>
    %152 = vector.extract_strided_slice %1 {offsets = [0, 63], sizes = [4, 449], strides = [1, 1]} : vector<4x512xbf16> to vector<4x449xbf16>
    %153 = vector.extract_strided_slice %1 {offsets = [0, 0], sizes = [4, 63], strides = [1, 1]} : vector<4x512xbf16> to vector<4x63xbf16>
    %154 = tpu.concatenate %152, %153 in 1 : vector<4x449xbf16>, vector<4x63xbf16> -> vector<4x512xbf16>
    %c21 = arith.constant 21 : index
    %c0_30 = arith.constant 0 : index
    %155 = vector.load %arg1[%c21, %c0_30] : memref<27x512xf32, #tpu.memory_space<vmem>>, vector<1x512xf32>
    %156 = arith.truncf %155 : vector<1x512xf32> to vector<1x512xbf16>
    %157 = vector.broadcast %156 : vector<1x512xbf16> to vector<4x512xbf16>
    %158 = arith.mulf %154, %157 : vector<4x512xbf16>
    %159 = vector.extract_strided_slice %1 {offsets = [0, 64], sizes = [4, 448], strides = [1, 1]} : vector<4x512xbf16> to vector<4x448xbf16>
    %160 = vector.extract_strided_slice %1 {offsets = [0, 0], sizes = [4, 64], strides = [1, 1]} : vector<4x512xbf16> to vector<4x64xbf16>
    %161 = tpu.concatenate %159, %160 in 1 : vector<4x448xbf16>, vector<4x64xbf16> -> vector<4x512xbf16>
    %c22 = arith.constant 22 : index
    %c0_31 = arith.constant 0 : index
    %162 = vector.load %arg1[%c22, %c0_31] : memref<27x512xf32, #tpu.memory_space<vmem>>, vector<1x512xf32>
    %163 = arith.truncf %162 : vector<1x512xf32> to vector<1x512xbf16>
    %164 = vector.broadcast %163 : vector<1x512xbf16> to vector<4x512xbf16>
    %165 = arith.mulf %161, %164 : vector<4x512xbf16>
    %166 = vector.extract_strided_slice %1 {offsets = [0, 65], sizes = [4, 447], strides = [1, 1]} : vector<4x512xbf16> to vector<4x447xbf16>
    %167 = vector.extract_strided_slice %1 {offsets = [0, 0], sizes = [4, 65], strides = [1, 1]} : vector<4x512xbf16> to vector<4x65xbf16>
    %168 = tpu.concatenate %166, %167 in 1 : vector<4x447xbf16>, vector<4x65xbf16> -> vector<4x512xbf16>
    %c23 = arith.constant 23 : index
    %c0_32 = arith.constant 0 : index
    %169 = vector.load %arg1[%c23, %c0_32] : memref<27x512xf32, #tpu.memory_space<vmem>>, vector<1x512xf32>
    %170 = arith.truncf %169 : vector<1x512xf32> to vector<1x512xbf16>
    %171 = vector.broadcast %170 : vector<1x512xbf16> to vector<4x512xbf16>
    %172 = arith.mulf %168, %171 : vector<4x512xbf16>
    %173 = tpu.concatenate %151, %158, %165, %172 in 0 : vector<4x512xbf16>, vector<4x512xbf16>, vector<4x512xbf16>, vector<4x512xbf16> -> vector<16x512xbf16>
    %c80 = arith.constant 80 : index
    %c0_33 = arith.constant 0 : index
    %174 = vector.load %arg9[%c80, %c0_33] : memref<224x512xbf16, #tpu.memory_space<vmem>>, vector<16x512xbf16>
    tpu.vector_store %arg9[%c80, %c0_33], %173 {strides = array<i32>} : memref<224x512xbf16, #tpu.memory_space<vmem>>, vector<16x512xbf16>,
    %175 = vector.extract_strided_slice %1 {offsets = [0, 71], sizes = [4, 441], strides = [1, 1]} : vector<4x512xbf16> to vector<4x441xbf16>
    %176 = vector.extract_strided_slice %1 {offsets = [0, 0], sizes = [4, 71], strides = [1, 1]} : vector<4x512xbf16> to vector<4x71xbf16>
    %177 = tpu.concatenate %175, %176 in 1 : vector<4x441xbf16>, vector<4x71xbf16> -> vector<4x512xbf16>
    %c24 = arith.constant 24 : index
    %c0_34 = arith.constant 0 : index
    %178 = vector.load %arg1[%c24, %c0_34] : memref<27x512xf32, #tpu.memory_space<vmem>>, vector<1x512xf32>
    %179 = arith.truncf %178 : vector<1x512xf32> to vector<1x512xbf16>
    %180 = vector.broadcast %179 : vector<1x512xbf16> to vector<4x512xbf16>
    %181 = arith.mulf %177, %180 : vector<4x512xbf16>
    %182 = vector.extract_strided_slice %1 {offsets = [0, 72], sizes = [4, 440], strides = [1, 1]} : vector<4x512xbf16> to vector<4x440xbf16>
    %183 = vector.extract_strided_slice %1 {offsets = [0, 0], sizes = [4, 72], strides = [1, 1]} : vector<4x512xbf16> to vector<4x72xbf16>
    %184 = tpu.concatenate %182, %183 in 1 : vector<4x440xbf16>, vector<4x72xbf16> -> vector<4x512xbf16>
    %c25 = arith.constant 25 : index
    %c0_35 = arith.constant 0 : index
    %185 = vector.load %arg1[%c25, %c0_35] : memref<27x512xf32, #tpu.memory_space<vmem>>, vector<1x512xf32>
    %186 = arith.truncf %185 : vector<1x512xf32> to vector<1x512xbf16>
    %187 = vector.broadcast %186 : vector<1x512xbf16> to vector<4x512xbf16>
    %188 = arith.mulf %184, %187 : vector<4x512xbf16>
    %189 = vector.extract_strided_slice %1 {offsets = [0, 73], sizes = [4, 439], strides = [1, 1]} : vector<4x512xbf16> to vector<4x439xbf16>
    %190 = vector.extract_strided_slice %1 {offsets = [0, 0], sizes = [4, 73], strides = [1, 1]} : vector<4x512xbf16> to vector<4x73xbf16>
    %191 = tpu.concatenate %189, %190 in 1 : vector<4x439xbf16>, vector<4x73xbf16> -> vector<4x512xbf16>
    %c26 = arith.constant 26 : index
    %c0_36 = arith.constant 0 : index
    %192 = vector.load %arg1[%c26, %c0_36] : memref<27x512xf32, #tpu.memory_space<vmem>>, vector<1x512xf32>
    %193 = arith.truncf %192 : vector<1x512xf32> to vector<1x512xbf16>
    %194 = vector.broadcast %193 : vector<1x512xbf16> to vector<4x512xbf16>
    %195 = arith.mulf %191, %194 : vector<4x512xbf16>
    %cst = arith.constant 0.000000e+00 : bf16
    %196 = vector.broadcast %cst : bf16 to vector<4x512xbf16>
    %197 = tpu.concatenate %181, %188, %195, %196 in 0 : vector<4x512xbf16>, vector<4x512xbf16>, vector<4x512xbf16>, vector<4x512xbf16> -> vector<16x512xbf16>
    %c96 = arith.constant 96 : index
    %c0_37 = arith.constant 0 : index
    %198 = vector.load %arg9[%c96, %c0_37] : memref<224x512xbf16, #tpu.memory_space<vmem>>, vector<16x512xbf16>
    tpu.vector_store %arg9[%c96, %c0_37], %197 {strides = array<i32>} : memref<224x512xbf16, #tpu.memory_space<vmem>>, vector<16x512xbf16>,
    %c0_38 = arith.constant 0 : index
    %c0_39 = arith.constant 0 : index
    %199 = vector.load %arg3[%c0_38, %c0_39] : memref<8x112xbf16, #tpu.memory_space<vmem>>, vector<8x112xbf16>
    %c0_40 = arith.constant 0 : index
    %c0_41 = arith.constant 0 : index
    %200 = vector.load %arg9[%c0_40, %c0_41] : memref<224x512xbf16, #tpu.memory_space<vmem>>, vector<112x512xbf16>
    %cst_42 = arith.constant dense<0.000000e+00> : vector<8x512xf32>
    %201 = tpu.matmul %199, %200, %cst_42 {dimension_numbers = #tpu.dot_dimension_numbers<[1], [0], [0], [1], [0, 0, 1, 1], [], []>} : vector<8x112xbf16>, vector<112x512xbf16>, vector<8x512xf32> -> vector<8x512xf32>
    %c0_43 = arith.constant 0 : index
    %c0_44 = arith.constant 0 : index
    %202 = vector.load %arg4[%c0_43, %c0_44] : memref<8x1xf32, #tpu.memory_space<vmem>>, vector<8x1xf32>
    %203 = vector.broadcast %202 : vector<8x1xf32> to vector<8x512xf32>
    %204 = arith.addf %201, %203 : vector<8x512xf32>
    %cst_45 = arith.constant dense<0.000000e+00> : vector<8xf32>
    %205 = vector.multi_reduction <add>, %204, %cst_45 [1] : vector<8x512xf32> to vector<8xf32>
    %206 = vector.shape_cast %205 : vector<8xf32> to vector<8x1xf32>
    %cst_46 = arith.constant 0.001953125 : f32
    %207 = vector.broadcast %cst_46 : f32 to vector<8x1xf32>
    %208 = arith.mulf %206, %207 : vector<8x1xf32>
    %209 = arith.mulf %204, %204 : vector<8x512xf32>
    %cst_47 = arith.constant dense<0.000000e+00> : vector<8xf32>
    %210 = vector.multi_reduction <add>, %209, %cst_47 [1] : vector<8x512xf32> to vector<8xf32>
    %211 = vector.shape_cast %210 : vector<8xf32> to vector<8x1xf32>
    %cst_48 = arith.constant 0.001953125 : f32
    %212 = vector.broadcast %cst_48 : f32 to vector<8x1xf32>
    %213 = arith.mulf %211, %212 : vector<8x1xf32>
    %214 = arith.mulf %208, %208 : vector<8x1xf32>
    %215 = arith.subf %213, %214 : vector<8x1xf32>
    %cst_49 = arith.constant 0.000000e+00 : f32
    %216 = vector.broadcast %cst_49 : f32 to vector<8x1xf32>
    %217 = arith.maximumf %215, %216 : vector<8x1xf32>
    %218 = vector.broadcast %208 : vector<8x1xf32> to vector<8x512xf32>
    %219 = arith.subf %204, %218 : vector<8x512xf32>
    %cst_50 = arith.constant 9.99999974E-6 : f32
    %220 = vector.broadcast %cst_50 : f32 to vector<8x1xf32>
    %221 = arith.addf %217, %220 : vector<8x1xf32>
    %222 = math.rsqrt %221 : vector<8x1xf32>
    %223 = vector.broadcast %222 : vector<8x1xf32> to vector<8x512xf32>
    %224 = arith.mulf %219, %223 : vector<8x512xf32>
    %cst_51 = arith.constant 0.000000e+00 : f32
    %225 = vector.broadcast %cst_51 : f32 to vector<8x512xf32>
    %226 = arith.cmpf oge, %224, %225 : vector<8x512xf32>
    %cst_52 = arith.constant 0.00999999977 : f32
    %227 = vector.broadcast %cst_52 : f32 to vector<8x512xf32>
    %228 = arith.mulf %227, %224 : vector<8x512xf32>
    %229 = arith.select %226, %224, %228 : vector<8x512xi1>, vector<8x512xf32>
    %230 = arith.truncf %229 : vector<8x512xf32> to vector<8x512xbf16>
    %231 = vector.extract_strided_slice %230 {offsets = [0, 439], sizes = [8, 73], strides = [1, 1]} : vector<8x512xbf16> to vector<8x73xbf16>
    %232 = vector.extract_strided_slice %230 {offsets = [0, 0], sizes = [8, 439], strides = [1, 1]} : vector<8x512xbf16> to vector<8x439xbf16>
    %233 = tpu.concatenate %231, %232 in 1 : vector<8x73xbf16>, vector<8x439xbf16> -> vector<8x512xbf16>
    %c0_53 = arith.constant 0 : index
    %c0_54 = arith.constant 0 : index
    %234 = vector.load %arg1[%c0_53, %c0_54] : memref<27x512xf32, #tpu.memory_space<vmem>>, vector<1x512xf32>
    %235 = arith.truncf %234 : vector<1x512xf32> to vector<1x512xbf16>
    %236 = vector.broadcast %235 : vector<1x512xbf16> to vector<8x512xbf16>
    %237 = arith.mulf %233, %236 : vector<8x512xbf16>
    %238 = vector.extract_strided_slice %230 {offsets = [0, 440], sizes = [8, 72], strides = [1, 1]} : vector<8x512xbf16> to vector<8x72xbf16>
    %239 = vector.extract_strided_slice %230 {offsets = [0, 0], sizes = [8, 440], strides = [1, 1]} : vector<8x512xbf16> to vector<8x440xbf16>
    %240 = tpu.concatenate %238, %239 in 1 : vector<8x72xbf16>, vector<8x440xbf16> -> vector<8x512xbf16>
    %c1_55 = arith.constant 1 : index
    %c0_56 = arith.constant 0 : index
    %241 = vector.load %arg1[%c1_55, %c0_56] : memref<27x512xf32, #tpu.memory_space<vmem>>, vector<1x512xf32>
    %242 = arith.truncf %241 : vector<1x512xf32> to vector<1x512xbf16>
    %243 = vector.broadcast %242 : vector<1x512xbf16> to vector<8x512xbf16>
    %244 = arith.mulf %240, %243 : vector<8x512xbf16>
    %245 = tpu.concatenate %237, %244 in 0 : vector<8x512xbf16>, vector<8x512xbf16> -> vector<16x512xbf16>
    %c0_57 = arith.constant 0 : index
    %c0_58 = arith.constant 0 : index
    %246 = vector.load %arg9[%c0_57, %c0_58] : memref<224x512xbf16, #tpu.memory_space<vmem>>, vector<16x512xbf16>
    tpu.vector_store %arg9[%c0_57, %c0_58], %245 {strides = array<i32>} : memref<224x512xbf16, #tpu.memory_space<vmem>>, vector<16x512xbf16>,
    %247 = vector.extract_strided_slice %230 {offsets = [0, 441], sizes = [8, 71], strides = [1, 1]} : vector<8x512xbf16> to vector<8x71xbf16>
    %248 = vector.extract_strided_slice %230 {offsets = [0, 0], sizes = [8, 441], strides = [1, 1]} : vector<8x512xbf16> to vector<8x441xbf16>
    %249 = tpu.concatenate %247, %248 in 1 : vector<8x71xbf16>, vector<8x441xbf16> -> vector<8x512xbf16>
    %c2_59 = arith.constant 2 : index
    %c0_60 = arith.constant 0 : index
    %250 = vector.load %arg1[%c2_59, %c0_60] : memref<27x512xf32, #tpu.memory_space<vmem>>, vector<1x512xf32>
    %251 = arith.truncf %250 : vector<1x512xf32> to vector<1x512xbf16>
    %252 = vector.broadcast %251 : vector<1x512xbf16> to vector<8x512xbf16>
    %253 = arith.mulf %249, %252 : vector<8x512xbf16>
    %254 = vector.extract_strided_slice %230 {offsets = [0, 447], sizes = [8, 65], strides = [1, 1]} : vector<8x512xbf16> to vector<8x65xbf16>
    %255 = vector.extract_strided_slice %230 {offsets = [0, 0], sizes = [8, 447], strides = [1, 1]} : vector<8x512xbf16> to vector<8x447xbf16>
    %256 = tpu.concatenate %254, %255 in 1 : vector<8x65xbf16>, vector<8x447xbf16> -> vector<8x512xbf16>
    %c3_61 = arith.constant 3 : index
    %c0_62 = arith.constant 0 : index
    %257 = vector.load %arg1[%c3_61, %c0_62] : memref<27x512xf32, #tpu.memory_space<vmem>>, vector<1x512xf32>
    %258 = arith.truncf %257 : vector<1x512xf32> to vector<1x512xbf16>
    %259 = vector.broadcast %258 : vector<1x512xbf16> to vector<8x512xbf16>
    %260 = arith.mulf %256, %259 : vector<8x512xbf16>
    %261 = tpu.concatenate %253, %260 in 0 : vector<8x512xbf16>, vector<8x512xbf16> -> vector<16x512xbf16>
    %c16_63 = arith.constant 16 : index
    %c0_64 = arith.constant 0 : index
    %262 = vector.load %arg9[%c16_63, %c0_64] : memref<224x512xbf16, #tpu.memory_space<vmem>>, vector<16x512xbf16>
    tpu.vector_store %arg9[%c16_63, %c0_64], %261 {strides = array<i32>} : memref<224x512xbf16, #tpu.memory_space<vmem>>, vector<16x512xbf16>,
    %263 = vector.extract_strided_slice %230 {offsets = [0, 448], sizes = [8, 64], strides = [1, 1]} : vector<8x512xbf16> to vector<8x64xbf16>
    %264 = vector.extract_strided_slice %230 {offsets = [0, 0], sizes = [8, 448], strides = [1, 1]} : vector<8x512xbf16> to vector<8x448xbf16>
    %265 = tpu.concatenate %263, %264 in 1 : vector<8x64xbf16>, vector<8x448xbf16> -> vector<8x512xbf16>
    %c4_65 = arith.constant 4 : index
    %c0_66 = arith.constant 0 : index
    %266 = vector.load %arg1[%c4_65, %c0_66] : memref<27x512xf32, #tpu.memory_space<vmem>>, vector<1x512xf32>
    %267 = arith.truncf %266 : vector<1x512xf32> to vector<1x512xbf16>
    %268 = vector.broadcast %267 : vector<1x512xbf16> to vector<8x512xbf16>
    %269 = arith.mulf %265, %268 : vector<8x512xbf16>
    %270 = vector.extract_strided_slice %230 {offsets = [0, 449], sizes = [8, 63], strides = [1, 1]} : vector<8x512xbf16> to vector<8x63xbf16>
    %271 = vector.extract_strided_slice %230 {offsets = [0, 0], sizes = [8, 449], strides = [1, 1]} : vector<8x512xbf16> to vector<8x449xbf16>
    %272 = tpu.concatenate %270, %271 in 1 : vector<8x63xbf16>, vector<8x449xbf16> -> vector<8x512xbf16>
    %c5_67 = arith.constant 5 : index
    %c0_68 = arith.constant 0 : index
    %273 = vector.load %arg1[%c5_67, %c0_68] : memref<27x512xf32, #tpu.memory_space<vmem>>, vector<1x512xf32>
    %274 = arith.truncf %273 : vector<1x512xf32> to vector<1x512xbf16>
    %275 = vector.broadcast %274 : vector<1x512xbf16> to vector<8x512xbf16>
    %276 = arith.mulf %272, %275 : vector<8x512xbf16>
    %277 = tpu.concatenate %269, %276 in 0 : vector<8x512xbf16>, vector<8x512xbf16> -> vector<16x512xbf16>
    %c32_69 = arith.constant 32 : index
    %c0_70 = arith.constant 0 : index
    %278 = vector.load %arg9[%c32_69, %c0_70] : memref<224x512xbf16, #tpu.memory_space<vmem>>, vector<16x512xbf16>
    tpu.vector_store %arg9[%c32_69, %c0_70], %277 {strides = array<i32>} : memref<224x512xbf16, #tpu.memory_space<vmem>>, vector<16x512xbf16>,
    %279 = vector.extract_strided_slice %230 {offsets = [0, 455], sizes = [8, 57], strides = [1, 1]} : vector<8x512xbf16> to vector<8x57xbf16>
    %280 = vector.extract_strided_slice %230 {offsets = [0, 0], sizes = [8, 455], strides = [1, 1]} : vector<8x512xbf16> to vector<8x455xbf16>
    %281 = tpu.concatenate %279, %280 in 1 : vector<8x57xbf16>, vector<8x455xbf16> -> vector<8x512xbf16>
    %c6_71 = arith.constant 6 : index
    %c0_72 = arith.constant 0 : index
    %282 = vector.load %arg1[%c6_71, %c0_72] : memref<27x512xf32, #tpu.memory_space<vmem>>, vector<1x512xf32>
    %283 = arith.truncf %282 : vector<1x512xf32> to vector<1x512xbf16>
    %284 = vector.broadcast %283 : vector<1x512xbf16> to vector<8x512xbf16>
    %285 = arith.mulf %281, %284 : vector<8x512xbf16>
    %286 = vector.extract_strided_slice %230 {offsets = [0, 456], sizes = [8, 56], strides = [1, 1]} : vector<8x512xbf16> to vector<8x56xbf16>
    %287 = vector.extract_strided_slice %230 {offsets = [0, 0], sizes = [8, 456], strides = [1, 1]} : vector<8x512xbf16> to vector<8x456xbf16>
    %288 = tpu.concatenate %286, %287 in 1 : vector<8x56xbf16>, vector<8x456xbf16> -> vector<8x512xbf16>
    %c7_73 = arith.constant 7 : index
    %c0_74 = arith.constant 0 : index
    %289 = vector.load %arg1[%c7_73, %c0_74] : memref<27x512xf32, #tpu.memory_space<vmem>>, vector<1x512xf32>
    %290 = arith.truncf %289 : vector<1x512xf32> to vector<1x512xbf16>
    %291 = vector.broadcast %290 : vector<1x512xbf16> to vector<8x512xbf16>
    %292 = arith.mulf %288, %291 : vector<8x512xbf16>
    %293 = tpu.concatenate %285, %292 in 0 : vector<8x512xbf16>, vector<8x512xbf16> -> vector<16x512xbf16>
    %c48_75 = arith.constant 48 : index
    %c0_76 = arith.constant 0 : index
    %294 = vector.load %arg9[%c48_75, %c0_76] : memref<224x512xbf16, #tpu.memory_space<vmem>>, vector<16x512xbf16>
    tpu.vector_store %arg9[%c48_75, %c0_76], %293 {strides = array<i32>} : memref<224x512xbf16, #tpu.memory_space<vmem>>, vector<16x512xbf16>,
    %295 = vector.extract_strided_slice %230 {offsets = [0, 457], sizes = [8, 55], strides = [1, 1]} : vector<8x512xbf16> to vector<8x55xbf16>
    %296 = vector.extract_strided_slice %230 {offsets = [0, 0], sizes = [8, 457], strides = [1, 1]} : vector<8x512xbf16> to vector<8x457xbf16>
    %297 = tpu.concatenate %295, %296 in 1 : vector<8x55xbf16>, vector<8x457xbf16> -> vector<8x512xbf16>
    %c8_77 = arith.constant 8 : index
    %c0_78 = arith.constant 0 : index
    %298 = vector.load %arg1[%c8_77, %c0_78] : memref<27x512xf32, #tpu.memory_space<vmem>>, vector<1x512xf32>
    %299 = arith.truncf %298 : vector<1x512xf32> to vector<1x512xbf16>
    %300 = vector.broadcast %299 : vector<1x512xbf16> to vector<8x512xbf16>
    %301 = arith.mulf %297, %300 : vector<8x512xbf16>
    %302 = vector.extract_strided_slice %230 {offsets = [0, 503], sizes = [8, 9], strides = [1, 1]} : vector<8x512xbf16> to vector<8x9xbf16>
    %303 = vector.extract_strided_slice %230 {offsets = [0, 0], sizes = [8, 503], strides = [1, 1]} : vector<8x512xbf16> to vector<8x503xbf16>
    %304 = tpu.concatenate %302, %303 in 1 : vector<8x9xbf16>, vector<8x503xbf16> -> vector<8x512xbf16>
    %c9_79 = arith.constant 9 : index
    %c0_80 = arith.constant 0 : index
    %305 = vector.load %arg1[%c9_79, %c0_80] : memref<27x512xf32, #tpu.memory_space<vmem>>, vector<1x512xf32>
    %306 = arith.truncf %305 : vector<1x512xf32> to vector<1x512xbf16>
    %307 = vector.broadcast %306 : vector<1x512xbf16> to vector<8x512xbf16>
    %308 = arith.mulf %304, %307 : vector<8x512xbf16>
    %309 = tpu.concatenate %301, %308 in 0 : vector<8x512xbf16>, vector<8x512xbf16> -> vector<16x512xbf16>
    %c64_81 = arith.constant 64 : index
    %c0_82 = arith.constant 0 : index
    %310 = vector.load %arg9[%c64_81, %c0_82] : memref<224x512xbf16, #tpu.memory_space<vmem>>, vector<16x512xbf16>
    tpu.vector_store %arg9[%c64_81, %c0_82], %309 {strides = array<i32>} : memref<224x512xbf16, #tpu.memory_space<vmem>>, vector<16x512xbf16>,
    %311 = vector.extract_strided_slice %230 {offsets = [0, 504], sizes = [8, 8], strides = [1, 1]} : vector<8x512xbf16> to vector<8x8xbf16>
    %312 = vector.extract_strided_slice %230 {offsets = [0, 0], sizes = [8, 504], strides = [1, 1]} : vector<8x512xbf16> to vector<8x504xbf16>
    %313 = tpu.concatenate %311, %312 in 1 : vector<8x8xbf16>, vector<8x504xbf16> -> vector<8x512xbf16>
    %c10_83 = arith.constant 10 : index
    %c0_84 = arith.constant 0 : index
    %314 = vector.load %arg1[%c10_83, %c0_84] : memref<27x512xf32, #tpu.memory_space<vmem>>, vector<1x512xf32>
    %315 = arith.truncf %314 : vector<1x512xf32> to vector<1x512xbf16>
    %316 = vector.broadcast %315 : vector<1x512xbf16> to vector<8x512xbf16>
    %317 = arith.mulf %313, %316 : vector<8x512xbf16>
    %318 = vector.extract_strided_slice %230 {offsets = [0, 505], sizes = [8, 7], strides = [1, 1]} : vector<8x512xbf16> to vector<8x7xbf16>
    %319 = vector.extract_strided_slice %230 {offsets = [0, 0], sizes = [8, 505], strides = [1, 1]} : vector<8x512xbf16> to vector<8x505xbf16>
    %320 = tpu.concatenate %318, %319 in 1 : vector<8x7xbf16>, vector<8x505xbf16> -> vector<8x512xbf16>
    %c11_85 = arith.constant 11 : index
    %c0_86 = arith.constant 0 : index
    %321 = vector.load %arg1[%c11_85, %c0_86] : memref<27x512xf32, #tpu.memory_space<vmem>>, vector<1x512xf32>
    %322 = arith.truncf %321 : vector<1x512xf32> to vector<1x512xbf16>
    %323 = vector.broadcast %322 : vector<1x512xbf16> to vector<8x512xbf16>
    %324 = arith.mulf %320, %323 : vector<8x512xbf16>
    %325 = tpu.concatenate %317, %324 in 0 : vector<8x512xbf16>, vector<8x512xbf16> -> vector<16x512xbf16>
    %c80_87 = arith.constant 80 : index
    %c0_88 = arith.constant 0 : index
    %326 = vector.load %arg9[%c80_87, %c0_88] : memref<224x512xbf16, #tpu.memory_space<vmem>>, vector<16x512xbf16>
    tpu.vector_store %arg9[%c80_87, %c0_88], %325 {strides = array<i32>} : memref<224x512xbf16, #tpu.memory_space<vmem>>, vector<16x512xbf16>,
    %327 = vector.extract_strided_slice %230 {offsets = [0, 511], sizes = [8, 1], strides = [1, 1]} : vector<8x512xbf16> to vector<8x1xbf16>
    %328 = vector.extract_strided_slice %230 {offsets = [0, 0], sizes = [8, 511], strides = [1, 1]} : vector<8x512xbf16> to vector<8x511xbf16>
    %329 = tpu.concatenate %327, %328 in 1 : vector<8x1xbf16>, vector<8x511xbf16> -> vector<8x512xbf16>
    %c12_89 = arith.constant 12 : index
    %c0_90 = arith.constant 0 : index
    %330 = vector.load %arg1[%c12_89, %c0_90] : memref<27x512xf32, #tpu.memory_space<vmem>>, vector<1x512xf32>
    %331 = arith.truncf %330 : vector<1x512xf32> to vector<1x512xbf16>
    %332 = vector.broadcast %331 : vector<1x512xbf16> to vector<8x512xbf16>
    %333 = arith.mulf %329, %332 : vector<8x512xbf16>
    %334 = tpu.concatenate %333, %230 in 0 : vector<8x512xbf16>, vector<8x512xbf16> -> vector<16x512xbf16>
    %c96_91 = arith.constant 96 : index
    %c0_92 = arith.constant 0 : index
    %335 = vector.load %arg9[%c96_91, %c0_92] : memref<224x512xbf16, #tpu.memory_space<vmem>>, vector<16x512xbf16>
    tpu.vector_store %arg9[%c96_91, %c0_92], %334 {strides = array<i32>} : memref<224x512xbf16, #tpu.memory_space<vmem>>, vector<16x512xbf16>,
    %336 = vector.extract_strided_slice %230 {offsets = [0, 1], sizes = [8, 511], strides = [1, 1]} : vector<8x512xbf16> to vector<8x511xbf16>
    %337 = vector.extract_strided_slice %230 {offsets = [0, 0], sizes = [8, 1], strides = [1, 1]} : vector<8x512xbf16> to vector<8x1xbf16>
    %338 = tpu.concatenate %336, %337 in 1 : vector<8x511xbf16>, vector<8x1xbf16> -> vector<8x512xbf16>
    %c14_93 = arith.constant 14 : index
    %c0_94 = arith.constant 0 : index
    %339 = vector.load %arg1[%c14_93, %c0_94] : memref<27x512xf32, #tpu.memory_space<vmem>>, vector<1x512xf32>
    %340 = arith.truncf %339 : vector<1x512xf32> to vector<1x512xbf16>
    %341 = vector.broadcast %340 : vector<1x512xbf16> to vector<8x512xbf16>
    %342 = arith.mulf %338, %341 : vector<8x512xbf16>
    %343 = vector.extract_strided_slice %230 {offsets = [0, 7], sizes = [8, 505], strides = [1, 1]} : vector<8x512xbf16> to vector<8x505xbf16>
    %344 = vector.extract_strided_slice %230 {offsets = [0, 0], sizes = [8, 7], strides = [1, 1]} : vector<8x512xbf16> to vector<8x7xbf16>
    %345 = tpu.concatenate %343, %344 in 1 : vector<8x505xbf16>, vector<8x7xbf16> -> vector<8x512xbf16>
    %c15_95 = arith.constant 15 : index
    %c0_96 = arith.constant 0 : index
    %346 = vector.load %arg1[%c15_95, %c0_96] : memref<27x512xf32, #tpu.memory_space<vmem>>, vector<1x512xf32>
    %347 = arith.truncf %346 : vector<1x512xf32> to vector<1x512xbf16>
    %348 = vector.broadcast %347 : vector<1x512xbf16> to vector<8x512xbf16>
    %349 = arith.mulf %345, %348 : vector<8x512xbf16>
    %350 = tpu.concatenate %342, %349 in 0 : vector<8x512xbf16>, vector<8x512xbf16> -> vector<16x512xbf16>
    %c112 = arith.constant 112 : index
    %c0_97 = arith.constant 0 : index
    %351 = vector.load %arg9[%c112, %c0_97] : memref<224x512xbf16, #tpu.memory_space<vmem>>, vector<16x512xbf16>
    tpu.vector_store %arg9[%c112, %c0_97], %350 {strides = array<i32>} : memref<224x512xbf16, #tpu.memory_space<vmem>>, vector<16x512xbf16>,
    %352 = vector.extract_strided_slice %230 {offsets = [0, 8], sizes = [8, 504], strides = [1, 1]} : vector<8x512xbf16> to vector<8x504xbf16>
    %353 = vector.extract_strided_slice %230 {offsets = [0, 0], sizes = [8, 8], strides = [1, 1]} : vector<8x512xbf16> to vector<8x8xbf16>
    %354 = tpu.concatenate %352, %353 in 1 : vector<8x504xbf16>, vector<8x8xbf16> -> vector<8x512xbf16>
    %c16_98 = arith.constant 16 : index
    %c0_99 = arith.constant 0 : index
    %355 = vector.load %arg1[%c16_98, %c0_99] : memref<27x512xf32, #tpu.memory_space<vmem>>, vector<1x512xf32>
    %356 = arith.truncf %355 : vector<1x512xf32> to vector<1x512xbf16>
    %357 = vector.broadcast %356 : vector<1x512xbf16> to vector<8x512xbf16>
    %358 = arith.mulf %354, %357 : vector<8x512xbf16>
    %359 = vector.extract_strided_slice %230 {offsets = [0, 9], sizes = [8, 503], strides = [1, 1]} : vector<8x512xbf16> to vector<8x503xbf16>
    %360 = vector.extract_strided_slice %230 {offsets = [0, 0], sizes = [8, 9], strides = [1, 1]} : vector<8x512xbf16> to vector<8x9xbf16>
    %361 = tpu.concatenate %359, %360 in 1 : vector<8x503xbf16>, vector<8x9xbf16> -> vector<8x512xbf16>
    %c17_100 = arith.constant 17 : index
    %c0_101 = arith.constant 0 : index
    %362 = vector.load %arg1[%c17_100, %c0_101] : memref<27x512xf32, #tpu.memory_space<vmem>>, vector<1x512xf32>
    %363 = arith.truncf %362 : vector<1x512xf32> to vector<1x512xbf16>
    %364 = vector.broadcast %363 : vector<1x512xbf16> to vector<8x512xbf16>
    %365 = arith.mulf %361, %364 : vector<8x512xbf16>
    %366 = tpu.concatenate %358, %365 in 0 : vector<8x512xbf16>, vector<8x512xbf16> -> vector<16x512xbf16>
    %c128 = arith.constant 128 : index
    %c0_102 = arith.constant 0 : index
    %367 = vector.load %arg9[%c128, %c0_102] : memref<224x512xbf16, #tpu.memory_space<vmem>>, vector<16x512xbf16>
    tpu.vector_store %arg9[%c128, %c0_102], %366 {strides = array<i32>} : memref<224x512xbf16, #tpu.memory_space<vmem>>, vector<16x512xbf16>,
    %368 = vector.extract_strided_slice %230 {offsets = [0, 55], sizes = [8, 457], strides = [1, 1]} : vector<8x512xbf16> to vector<8x457xbf16>
    %369 = vector.extract_strided_slice %230 {offsets = [0, 0], sizes = [8, 55], strides = [1, 1]} : vector<8x512xbf16> to vector<8x55xbf16>
    %370 = tpu.concatenate %368, %369 in 1 : vector<8x457xbf16>, vector<8x55xbf16> -> vector<8x512xbf16>
    %c18_103 = arith.constant 18 : index
    %c0_104 = arith.constant 0 : index
    %371 = vector.load %arg1[%c18_103, %c0_104] : memref<27x512xf32, #tpu.memory_space<vmem>>, vector<1x512xf32>
    %372 = arith.truncf %371 : vector<1x512xf32> to vector<1x512xbf16>
    %373 = vector.broadcast %372 : vector<1x512xbf16> to vector<8x512xbf16>
    %374 = arith.mulf %370, %373 : vector<8x512xbf16>
    %375 = vector.extract_strided_slice %230 {offsets = [0, 56], sizes = [8, 456], strides = [1, 1]} : vector<8x512xbf16> to vector<8x456xbf16>
    %376 = vector.extract_strided_slice %230 {offsets = [0, 0], sizes = [8, 56], strides = [1, 1]} : vector<8x512xbf16> to vector<8x56xbf16>
    %377 = tpu.concatenate %375, %376 in 1 : vector<8x456xbf16>, vector<8x56xbf16> -> vector<8x512xbf16>
    %c19_105 = arith.constant 19 : index
    %c0_106 = arith.constant 0 : index
    %378 = vector.load %arg1[%c19_105, %c0_106] : memref<27x512xf32, #tpu.memory_space<vmem>>, vector<1x512xf32>
    %379 = arith.truncf %378 : vector<1x512xf32> to vector<1x512xbf16>
    %380 = vector.broadcast %379 : vector<1x512xbf16> to vector<8x512xbf16>
    %381 = arith.mulf %377, %380 : vector<8x512xbf16>
    %382 = tpu.concatenate %374, %381 in 0 : vector<8x512xbf16>, vector<8x512xbf16> -> vector<16x512xbf16>
    %c144 = arith.constant 144 : index
    %c0_107 = arith.constant 0 : index
    %383 = vector.load %arg9[%c144, %c0_107] : memref<224x512xbf16, #tpu.memory_space<vmem>>, vector<16x512xbf16>
    tpu.vector_store %arg9[%c144, %c0_107], %382 {strides = array<i32>} : memref<224x512xbf16, #tpu.memory_space<vmem>>, vector<16x512xbf16>,
    %384 = vector.extract_strided_slice %230 {offsets = [0, 57], sizes = [8, 455], strides = [1, 1]} : vector<8x512xbf16> to vector<8x455xbf16>
    %385 = vector.extract_strided_slice %230 {offsets = [0, 0], sizes = [8, 57], strides = [1, 1]} : vector<8x512xbf16> to vector<8x57xbf16>
    %386 = tpu.concatenate %384, %385 in 1 : vector<8x455xbf16>, vector<8x57xbf16> -> vector<8x512xbf16>
    %c20_108 = arith.constant 20 : index
    %c0_109 = arith.constant 0 : index
    %387 = vector.load %arg1[%c20_108, %c0_109] : memref<27x512xf32, #tpu.memory_space<vmem>>, vector<1x512xf32>
    %388 = arith.truncf %387 : vector<1x512xf32> to vector<1x512xbf16>
    %389 = vector.broadcast %388 : vector<1x512xbf16> to vector<8x512xbf16>
    %390 = arith.mulf %386, %389 : vector<8x512xbf16>
    %391 = vector.extract_strided_slice %230 {offsets = [0, 63], sizes = [8, 449], strides = [1, 1]} : vector<8x512xbf16> to vector<8x449xbf16>
    %392 = vector.extract_strided_slice %230 {offsets = [0, 0], sizes = [8, 63], strides = [1, 1]} : vector<8x512xbf16> to vector<8x63xbf16>
    %393 = tpu.concatenate %391, %392 in 1 : vector<8x449xbf16>, vector<8x63xbf16> -> vector<8x512xbf16>
    %c21_110 = arith.constant 21 : index
    %c0_111 = arith.constant 0 : index
    %394 = vector.load %arg1[%c21_110, %c0_111] : memref<27x512xf32, #tpu.memory_space<vmem>>, vector<1x512xf32>
    %395 = arith.truncf %394 : vector<1x512xf32> to vector<1x512xbf16>
    %396 = vector.broadcast %395 : vector<1x512xbf16> to vector<8x512xbf16>
    %397 = arith.mulf %393, %396 : vector<8x512xbf16>
    %398 = tpu.concatenate %390, %397 in 0 : vector<8x512xbf16>, vector<8x512xbf16> -> vector<16x512xbf16>
    %c160 = arith.constant 160 : index
    %c0_112 = arith.constant 0 : index
    %399 = vector.load %arg9[%c160, %c0_112] : memref<224x512xbf16, #tpu.memory_space<vmem>>, vector<16x512xbf16>
    tpu.vector_store %arg9[%c160, %c0_112], %398 {strides = array<i32>} : memref<224x512xbf16, #tpu.memory_space<vmem>>, vector<16x512xbf16>,
    %400 = vector.extract_strided_slice %230 {offsets = [0, 64], sizes = [8, 448], strides = [1, 1]} : vector<8x512xbf16> to vector<8x448xbf16>
    %401 = vector.extract_strided_slice %230 {offsets = [0, 0], sizes = [8, 64], strides = [1, 1]} : vector<8x512xbf16> to vector<8x64xbf16>
    %402 = tpu.concatenate %400, %401 in 1 : vector<8x448xbf16>, vector<8x64xbf16> -> vector<8x512xbf16>
    %c22_113 = arith.constant 22 : index
    %c0_114 = arith.constant 0 : index
    %403 = vector.load %arg1[%c22_113, %c0_114] : memref<27x512xf32, #tpu.memory_space<vmem>>, vector<1x512xf32>
    %404 = arith.truncf %403 : vector<1x512xf32> to vector<1x512xbf16>
    %405 = vector.broadcast %404 : vector<1x512xbf16> to vector<8x512xbf16>
    %406 = arith.mulf %402, %405 : vector<8x512xbf16>
    %407 = vector.extract_strided_slice %230 {offsets = [0, 65], sizes = [8, 447], strides = [1, 1]} : vector<8x512xbf16> to vector<8x447xbf16>
    %408 = vector.extract_strided_slice %230 {offsets = [0, 0], sizes = [8, 65], strides = [1, 1]} : vector<8x512xbf16> to vector<8x65xbf16>
    %409 = tpu.concatenate %407, %408 in 1 : vector<8x447xbf16>, vector<8x65xbf16> -> vector<8x512xbf16>
    %c23_115 = arith.constant 23 : index
    %c0_116 = arith.constant 0 : index
    %410 = vector.load %arg1[%c23_115, %c0_116] : memref<27x512xf32, #tpu.memory_space<vmem>>, vector<1x512xf32>
    %411 = arith.truncf %410 : vector<1x512xf32> to vector<1x512xbf16>
    %412 = vector.broadcast %411 : vector<1x512xbf16> to vector<8x512xbf16>
    %413 = arith.mulf %409, %412 : vector<8x512xbf16>
    %414 = tpu.concatenate %406, %413 in 0 : vector<8x512xbf16>, vector<8x512xbf16> -> vector<16x512xbf16>
    %c176 = arith.constant 176 : index
    %c0_117 = arith.constant 0 : index
    %415 = vector.load %arg9[%c176, %c0_117] : memref<224x512xbf16, #tpu.memory_space<vmem>>, vector<16x512xbf16>
    tpu.vector_store %arg9[%c176, %c0_117], %414 {strides = array<i32>} : memref<224x512xbf16, #tpu.memory_space<vmem>>, vector<16x512xbf16>,
    %416 = vector.extract_strided_slice %230 {offsets = [0, 71], sizes = [8, 441], strides = [1, 1]} : vector<8x512xbf16> to vector<8x441xbf16>
    %417 = vector.extract_strided_slice %230 {offsets = [0, 0], sizes = [8, 71], strides = [1, 1]} : vector<8x512xbf16> to vector<8x71xbf16>
    %418 = tpu.concatenate %416, %417 in 1 : vector<8x441xbf16>, vector<8x71xbf16> -> vector<8x512xbf16>
    %c24_118 = arith.constant 24 : index
    %c0_119 = arith.constant 0 : index
    %419 = vector.load %arg1[%c24_118, %c0_119] : memref<27x512xf32, #tpu.memory_space<vmem>>, vector<1x512xf32>
    %420 = arith.truncf %419 : vector<1x512xf32> to vector<1x512xbf16>
    %421 = vector.broadcast %420 : vector<1x512xbf16> to vector<8x512xbf16>
    %422 = arith.mulf %418, %421 : vector<8x512xbf16>
    %423 = vector.extract_strided_slice %230 {offsets = [0, 72], sizes = [8, 440], strides = [1, 1]} : vector<8x512xbf16> to vector<8x440xbf16>
    %424 = vector.extract_strided_slice %230 {offsets = [0, 0], sizes = [8, 72], strides = [1, 1]} : vector<8x512xbf16> to vector<8x72xbf16>
    %425 = tpu.concatenate %423, %424 in 1 : vector<8x440xbf16>, vector<8x72xbf16> -> vector<8x512xbf16>
    %c25_120 = arith.constant 25 : index
    %c0_121 = arith.constant 0 : index
    %426 = vector.load %arg1[%c25_120, %c0_121] : memref<27x512xf32, #tpu.memory_space<vmem>>, vector<1x512xf32>
    %427 = arith.truncf %426 : vector<1x512xf32> to vector<1x512xbf16>
    %428 = vector.broadcast %427 : vector<1x512xbf16> to vector<8x512xbf16>
    %429 = arith.mulf %425, %428 : vector<8x512xbf16>
    %430 = tpu.concatenate %422, %429 in 0 : vector<8x512xbf16>, vector<8x512xbf16> -> vector<16x512xbf16>
    %c192 = arith.constant 192 : index
    %c0_122 = arith.constant 0 : index
    %431 = vector.load %arg9[%c192, %c0_122] : memref<224x512xbf16, #tpu.memory_space<vmem>>, vector<16x512xbf16>
    tpu.vector_store %arg9[%c192, %c0_122], %430 {strides = array<i32>} : memref<224x512xbf16, #tpu.memory_space<vmem>>, vector<16x512xbf16>,
    %432 = vector.extract_strided_slice %230 {offsets = [0, 73], sizes = [8, 439], strides = [1, 1]} : vector<8x512xbf16> to vector<8x439xbf16>
    %433 = vector.extract_strided_slice %230 {offsets = [0, 0], sizes = [8, 73], strides = [1, 1]} : vector<8x512xbf16> to vector<8x73xbf16>
    %434 = tpu.concatenate %432, %433 in 1 : vector<8x439xbf16>, vector<8x73xbf16> -> vector<8x512xbf16>
    %c26_123 = arith.constant 26 : index
    %c0_124 = arith.constant 0 : index
    %435 = vector.load %arg1[%c26_123, %c0_124] : memref<27x512xf32, #tpu.memory_space<vmem>>, vector<1x512xf32>
    %436 = arith.truncf %435 : vector<1x512xf32> to vector<1x512xbf16>
    %437 = vector.broadcast %436 : vector<1x512xbf16> to vector<8x512xbf16>
    %438 = arith.mulf %434, %437 : vector<8x512xbf16>
    %cst_125 = arith.constant 0.000000e+00 : bf16
    %439 = vector.broadcast %cst_125 : bf16 to vector<8x512xbf16>
    %440 = tpu.concatenate %438, %439 in 0 : vector<8x512xbf16>, vector<8x512xbf16> -> vector<16x512xbf16>
    %c208 = arith.constant 208 : index
    %c0_126 = arith.constant 0 : index
    %441 = vector.load %arg9[%c208, %c0_126] : memref<224x512xbf16, #tpu.memory_space<vmem>>, vector<16x512xbf16>
    tpu.vector_store %arg9[%c208, %c0_126], %440 {strides = array<i32>} : memref<224x512xbf16, #tpu.memory_space<vmem>>, vector<16x512xbf16>,
    %c0_127 = arith.constant 0 : index
    %c0_128 = arith.constant 0 : index
    %442 = vector.load %arg5[%c0_127, %c0_128] : memref<8x224xbf16, #tpu.memory_space<vmem>>, vector<8x224xbf16>
    %c0_129 = arith.constant 0 : index
    %c0_130 = arith.constant 0 : index
    %443 = vector.load %arg9[%c0_129, %c0_130] : memref<224x512xbf16, #tpu.memory_space<vmem>>, vector<224x512xbf16>
    %cst_131 = arith.constant dense<0.000000e+00> : vector<8x512xf32>
    %444 = tpu.matmul %442, %443, %cst_131 {dimension_numbers = #tpu.dot_dimension_numbers<[1], [0], [0], [1], [0, 0, 1, 1], [], []>} : vector<8x224xbf16>, vector<224x512xbf16>, vector<8x512xf32> -> vector<8x512xf32>
    %c0_132 = arith.constant 0 : index
    %c0_133 = arith.constant 0 : index
    %445 = vector.load %arg6[%c0_132, %c0_133] : memref<8x1xf32, #tpu.memory_space<vmem>>, vector<8x1xf32>
    %446 = vector.broadcast %445 : vector<8x1xf32> to vector<8x512xf32>
    %447 = arith.addf %444, %446 : vector<8x512xf32>
    %cst_134 = arith.constant dense<0.000000e+00> : vector<8xf32>
    %448 = vector.multi_reduction <add>, %447, %cst_134 [1] : vector<8x512xf32> to vector<8xf32>
    %449 = vector.shape_cast %448 : vector<8xf32> to vector<8x1xf32>
    %cst_135 = arith.constant 0.001953125 : f32
    %450 = vector.broadcast %cst_135 : f32 to vector<8x1xf32>
    %451 = arith.mulf %449, %450 : vector<8x1xf32>
    %452 = arith.mulf %447, %447 : vector<8x512xf32>
    %cst_136 = arith.constant dense<0.000000e+00> : vector<8xf32>
    %453 = vector.multi_reduction <add>, %452, %cst_136 [1] : vector<8x512xf32> to vector<8xf32>
    %454 = vector.shape_cast %453 : vector<8xf32> to vector<8x1xf32>
    %cst_137 = arith.constant 0.001953125 : f32
    %455 = vector.broadcast %cst_137 : f32 to vector<8x1xf32>
    %456 = arith.mulf %454, %455 : vector<8x1xf32>
    %457 = arith.mulf %451, %451 : vector<8x1xf32>
    %458 = arith.subf %456, %457 : vector<8x1xf32>
    %cst_138 = arith.constant 0.000000e+00 : f32
    %459 = vector.broadcast %cst_138 : f32 to vector<8x1xf32>
    %460 = arith.maximumf %458, %459 : vector<8x1xf32>
    %461 = vector.broadcast %451 : vector<8x1xf32> to vector<8x512xf32>
    %462 = arith.subf %447, %461 : vector<8x512xf32>
    %cst_139 = arith.constant 9.99999974E-6 : f32
    %463 = vector.broadcast %cst_139 : f32 to vector<8x1xf32>
    %464 = arith.addf %460, %463 : vector<8x1xf32>
    %465 = math.rsqrt %464 : vector<8x1xf32>
    %466 = vector.broadcast %465 : vector<8x1xf32> to vector<8x512xf32>
    %467 = arith.mulf %462, %466 : vector<8x512xf32>
    %cst_140 = arith.constant 0.000000e+00 : f32
    %468 = vector.broadcast %cst_140 : f32 to vector<8x512xf32>
    %469 = arith.cmpf oge, %467, %468 : vector<8x512xf32>
    %cst_141 = arith.constant 0.00999999977 : f32
    %470 = vector.broadcast %cst_141 : f32 to vector<8x512xf32>
    %471 = arith.mulf %470, %467 : vector<8x512xf32>
    %472 = arith.select %469, %467, %471 : vector<8x512xi1>, vector<8x512xf32>
    %473 = tpu.iota {dimensions = array<i32: 1>} : vector<1x512xi32>
    %474 = vector.extract_strided_slice %472 {offsets = [0, 1], sizes = [8, 511], strides = [1, 1]} : vector<8x512xf32> to vector<8x511xf32>
    %475 = vector.extract_strided_slice %472 {offsets = [0, 0], sizes = [8, 1], strides = [1, 1]} : vector<8x512xf32> to vector<8x1xf32>
    %476 = tpu.concatenate %474, %475 in 1 : vector<8x511xf32>, vector<8x1xf32> -> vector<8x512xf32>
    %477 = arith.cmpf ogt, %476, %472 : vector<8x512xf32>
    %478 = arith.select %477, %476, %472 : vector<8x512xi1>, vector<8x512xf32>
    %c1_i32 = arith.constant 1 : i32
    %479 = vector.broadcast %c1_i32 : i32 to vector<1x512xi32>
    %480 = arith.addi %473, %479 : vector<1x512xi32>
    %481 = vector.shape_cast %480 : vector<1x512xi32> to vector<1x512xi32>
    %482 = vector.broadcast %481 : vector<1x512xi32> to vector<8x512xi32>
    %483 = vector.shape_cast %473 : vector<1x512xi32> to vector<1x512xi32>
    %484 = vector.broadcast %483 : vector<1x512xi32> to vector<8x512xi32>
    %485 = arith.select %477, %482, %484 : vector<8x512xi1>, vector<8x512xi32>
    %486 = vector.extract_strided_slice %478 {offsets = [0, 8], sizes = [8, 504], strides = [1, 1]} : vector<8x512xf32> to vector<8x504xf32>
    %487 = vector.extract_strided_slice %478 {offsets = [0, 0], sizes = [8, 8], strides = [1, 1]} : vector<8x512xf32> to vector<8x8xf32>
    %488 = tpu.concatenate %486, %487 in 1 : vector<8x504xf32>, vector<8x8xf32> -> vector<8x512xf32>
    %489 = vector.extract_strided_slice %485 {offsets = [0, 8], sizes = [8, 504], strides = [1, 1]} : vector<8x512xi32> to vector<8x504xi32>
    %490 = vector.extract_strided_slice %485 {offsets = [0, 0], sizes = [8, 8], strides = [1, 1]} : vector<8x512xi32> to vector<8x8xi32>
    %491 = tpu.concatenate %489, %490 in 1 : vector<8x504xi32>, vector<8x8xi32> -> vector<8x512xi32>
    %492 = arith.cmpf ogt, %488, %478 : vector<8x512xf32>
    %493 = arith.select %492, %488, %478 : vector<8x512xi1>, vector<8x512xf32>
    %494 = arith.select %492, %491, %485 : vector<8x512xi1>, vector<8x512xi32>
    %495 = vector.extract_strided_slice %493 {offsets = [0, 64], sizes = [8, 448], strides = [1, 1]} : vector<8x512xf32> to vector<8x448xf32>
    %496 = vector.extract_strided_slice %493 {offsets = [0, 0], sizes = [8, 64], strides = [1, 1]} : vector<8x512xf32> to vector<8x64xf32>
    %497 = tpu.concatenate %495, %496 in 1 : vector<8x448xf32>, vector<8x64xf32> -> vector<8x512xf32>
    %498 = vector.extract_strided_slice %494 {offsets = [0, 64], sizes = [8, 448], strides = [1, 1]} : vector<8x512xi32> to vector<8x448xi32>
    %499 = vector.extract_strided_slice %494 {offsets = [0, 0], sizes = [8, 64], strides = [1, 1]} : vector<8x512xi32> to vector<8x64xi32>
    %500 = tpu.concatenate %498, %499 in 1 : vector<8x448xi32>, vector<8x64xi32> -> vector<8x512xi32>
    %501 = arith.cmpf ogt, %497, %493 : vector<8x512xf32>
    %502 = arith.select %501, %497, %493 : vector<8x512xi1>, vector<8x512xf32>
    %503 = arith.select %501, %500, %494 : vector<8x512xi1>, vector<8x512xi32>
    %c0_142 = arith.constant 0 : index
    %c0_143 = arith.constant 0 : index
    %c0_144 = arith.constant 0 : index
    %504 = vector.load %arg7[%c0_142, %c0_143, %c0_144] : memref<1x8x512xf32, #tpu.memory_space<vmem>>, vector<1x8x512xf32>
    %505 = vector.shape_cast %504 : vector<1x8x512xf32> to vector<8x512xf32>
    %506 = vector.shape_cast %502 : vector<8x512xf32> to vector<1x8x512xf32>
    tpu.vector_store %arg7[%c0_142, %c0_143, %c0_144], %506 {strides = array<i32>} : memref<1x8x512xf32, #tpu.memory_space<vmem>>, vector<1x8x512xf32>,
    %c0_145 = arith.constant 0 : index
    %c0_146 = arith.constant 0 : index
    %c0_147 = arith.constant 0 : index
    %507 = vector.load %arg8[%c0_145, %c0_146, %c0_147] : memref<1x8x512xi32, #tpu.memory_space<vmem>>, vector<1x8x512xi32>
    %508 = vector.shape_cast %507 : vector<1x8x512xi32> to vector<8x512xi32>
    %509 = vector.shape_cast %503 : vector<8x512xi32> to vector<1x8x512xi32>
    tpu.vector_store %arg8[%c0_145, %c0_146, %c0_147], %509 {strides = array<i32>} : memref<1x8x512xi32, #tpu.memory_space<vmem>>, vector<1x8x512xi32>,
    return
  }
  func.func @transform_0(%arg0: i32) -> (i32, i32) {
    %c0_i32 = arith.constant 0 : i32
    %c0_i32_0 = arith.constant 0 : i32
    %c0_i32_1 = arith.constant 0 : i32
    return %c0_i32, %c0_i32_0 : i32, i32
  }
  func.func @transform_1(%arg0: i32) -> (i32, i32, i32) {
    %c0_i32 = arith.constant 0 : i32
    %c0_i32_0 = arith.constant 0 : i32
    %c0_i32_1 = arith.constant 0 : i32
    return %arg0, %c0_i32, %c0_i32_0 : i32, i32, i32
  }
  func.func @transform_2(%arg0: i32) -> (i32, i32) {
    %c0_i32 = arith.constant 0 : i32
    %c0_i32_0 = arith.constant 0 : i32
    %c0_i32_1 = arith.constant 0 : i32
    return %c0_i32, %c0_i32_0 : i32, i32
  }
  func.func @transform_3(%arg0: i32) -> (i32, i32) {
    %c0_i32 = arith.constant 0 : i32
    %c0_i32_0 = arith.constant 0 : i32
    %c0_i32_1 = arith.constant 0 : i32
    return %c0_i32, %c0_i32_0 : i32, i32
  }
  func.func @transform_4(%arg0: i32) -> (i32, i32) {
    %c0_i32 = arith.constant 0 : i32
    %c0_i32_0 = arith.constant 0 : i32
    %c0_i32_1 = arith.constant 0 : i32
    return %c0_i32, %c0_i32_0 : i32, i32
  }
  func.func @transform_5(%arg0: i32) -> (i32, i32) {
    %c0_i32 = arith.constant 0 : i32
    %c0_i32_0 = arith.constant 0 : i32
    %c0_i32_1 = arith.constant 0 : i32
    return %c0_i32, %c0_i32_0 : i32, i32
  }
  func.func @transform_6(%arg0: i32) -> (i32, i32, i32) {
    %c0_i32 = arith.constant 0 : i32
    %c0_i32_0 = arith.constant 0 : i32
    %c0_i32_1 = arith.constant 0 : i32
    return %arg0, %c0_i32, %c0_i32_0 : i32, i32, i32
  }
  func.func @transform_7(%arg0: i32) -> (i32, i32, i32) {
    %c0_i32 = arith.constant 0 : i32
    %c0_i32_0 = arith.constant 0 : i32
    %c0_i32_1 = arith.constant 0 : i32
    return %arg0, %c0_i32, %c0_i32_0 : i32, i32, i32
  }
}

</mosaic_0001>

<llo_original>
// kernel: down_forward.1
$region0: #{down_forward.1}
  #allocation0 [shape = 'u32[]', space=smem, size = 0x4, offset = 0x4, fixed_abs, tag = 'smem constant byte address 0x4 - core index']
  #allocation1 [shape = 'u32[144,128]{1,0:T(1,128)}', space=vmem, size = 0x12000, scoped, tag = 'internal scratch']
  #allocation2 [shape = 'bf16[224,512]{1,0:T(16,128)(2,1)}', space=vmem, size = 0x38000, scoped, tag = 'scratch operand']
  %s0 = inlined_call_operand.vmem [shape: f32[27,512], index: 0, kind: input, shape index: {}]
  %s1 = inlined_call_operand.vmem [shape: bf16[2,4,512], index: 1, kind: input, shape index: {}]
  %s2 = inlined_call_operand.vmem [shape: bf16[8,112], index: 2, kind: input, shape index: {}]
  %s3 = inlined_call_operand.vmem [shape: f32[8,1], index: 3, kind: input, shape index: {}]
  %s4 = inlined_call_operand.vmem [shape: bf16[8,224], index: 4, kind: input, shape index: {}]
  %s5 = inlined_call_operand.vmem [shape: f32[8,1], index: 5, kind: input, shape index: {}]
  %s6 = inlined_call_operand.vmem [shape: f32[2,8,512], index: 6, kind: output, shape index: {0}]
  %s7 = inlined_call_operand.vmem [shape: s32[2,8,512], index: 7, kind: output, shape index: {1}]
  %8 = xla_tuple %s6, %s7
  %s9 = sld [smem:[#allocation0]]
  $region65: #{down_forward.1} parent=0
    _
  %s11 = ssub.s32 1, %s9
  %s12 = scalar_select 0, %s11, %s9
  loop: start=0, step=1, limit=4
  $region2: #{down_forward.1} parent=0 // loop_pre_header
    _
  $region3: #{down_forward.1} parent=0 // loop_header
    %s14 = sphi 0, %s18
    %p15 = scmp.ge.s32.totalorder %s14, 4
    %s22 = sphi 0, %s22
    %s24 = sphi 0, %s22
    %s25 = sphi 0, %s24
    %s39 = sphi 0, %s25
    %s45 = sphi 0, %s47
    %s48 = sphi 0, %s45
    %s49 = sphi 0, %s48
    %s65 = sphi 0, %s49
    %s69 = sphi 0, %s69
    %s71 = sphi 0, %s69
    %s72 = sphi 0, %s71
    %s86 = sphi 0, %s72
    %s90 = sphi 0, %s90
    %s92 = sphi 0, %s90
    %s93 = sphi 0, %s92
    %s107 = sphi 0, %s93
    %s111 = sphi 0, %s111
    %s113 = sphi 0, %s111
    %s114 = sphi 0, %s113
    %s128 = sphi 0, %s114
    %s132 = sphi 0, %s132
    %s134 = sphi 0, %s132
    %s135 = sphi 0, %s134
    %s149 = sphi 0, %s135
    %s155 = sphi 0, %s157
    %s158 = sphi 0, %s155
    %s159 = sphi 0, %s158
    %s175 = sphi 0, %s159
    %s181 = sphi 0, %s183
    %s184 = sphi 0, %s181
    %s185 = sphi 0, %s184
    %s201 = sphi 0, %s185
  $region4: #{down_forward.1} parent=0 // loop_header_branch
    %17 = sbr.rel (%p15) target = $region8
  $region5: #{down_forward.1} parent=0 // loop_body
    %s19 = ssub.s32 %s14, 1
    %s20 = ssub.s32 %s14, 2
    %s21 = sadd.s32 %s14, 1
    %s23 = sadd.s32 %s22, 1
    %p26 = scmp.eq.s32.totalorder %s14, 1
    %p27 = scmp.ne.s32.totalorder %s22, %s24
    %p28 = scmp.eq.s32.totalorder %s14, 0
    %p29 = por %p27, %p28
    %p30 = scmp.ne.s32.totalorder %s22, %s24
    %p31 = scmp.eq.s32.totalorder %s19, 1
    %p32 = por %p30, %p31
    %p33 = scmp.ne.s32.totalorder %s24, %s25
    %p34 = scmp.eq.s32.totalorder %s19, 0
    %p35 = por %p33, %p34
    %p36 = scmp.ne.s32.totalorder %s24, %s25
    %p37 = scmp.eq.s32.totalorder %s20, 1
    %p38 = por %p36, %p37
    %p40 = scmp.ne.s32.totalorder %s25, %s39
    %p41 = scmp.eq.s32.totalorder %s20, 0
    %p42 = por %p40, %p41
    %s43 = ssub.s32 %s14, %s21
    %p44 = scmp.eq.s32.totalorder %s43, 0
    %s46 = sadd.s32 %s45, 1
    %s47 = scalar_select %p44, %s45, %s46
    %p50 = pneg %p44
    %p51 = scmp.eq.s32.totalorder %s14, 1
    %p52 = por %p50, %p51
    %p53 = scmp.ne.s32.totalorder %s45, %s48
    %p54 = scmp.eq.s32.totalorder %s14, 0
    %p55 = por %p53, %p54
    %p56 = scmp.ne.s32.totalorder %s45, %s48
    %p57 = scmp.eq.s32.totalorder %s19, 1
    %p58 = por %p56, %p57
    %p59 = scmp.ne.s32.totalorder %s48, %s49
    %p60 = scmp.eq.s32.totalorder %s19, 0
    %p61 = por %p59, %p60
    %p62 = scmp.ne.s32.totalorder %s48, %s49
    %p63 = scmp.eq.s32.totalorder %s20, 1
    %p64 = por %p62, %p63
    %p66 = scmp.ne.s32.totalorder %s49, %s65
    %p67 = scmp.eq.s32.totalorder %s20, 0
    %p68 = por %p66, %p67
    %s70 = sadd.s32 %s69, 1
    %p73 = scmp.eq.s32.totalorder %s14, 1
    %p74 = scmp.ne.s32.totalorder %s69, %s71
    %p75 = scmp.eq.s32.totalorder %s14, 0
    %p76 = por %p74, %p75
    %p77 = scmp.ne.s32.totalorder %s69, %s71
    %p78 = scmp.eq.s32.totalorder %s19, 1
    %p79 = por %p77, %p78
    %p80 = scmp.ne.s32.totalorder %s71, %s72
    %p81 = scmp.eq.s32.totalorder %s19, 0
    %p82 = por %p80, %p81
    %p83 = scmp.ne.s32.totalorder %s71, %s72
    %p84 = scmp.eq.s32.totalorder %s20, 1
    %p85 = por %p83, %p84
    %p87 = scmp.ne.s32.totalorder %s72, %s86
    %p88 = scmp.eq.s32.totalorder %s20, 0
    %p89 = por %p87, %p88
    %s91 = sadd.s32 %s90, 1
    %p94 = scmp.eq.s32.totalorder %s14, 1
    %p95 = scmp.ne.s32.totalorder %s90, %s92
    %p96 = scmp.eq.s32.totalorder %s14, 0
    %p97 = por %p95, %p96
    %p98 = scmp.ne.s32.totalorder %s90, %s92
    %p99 = scmp.eq.s32.totalorder %s19, 1
    %p100 = por %p98, %p99
    %p101 = scmp.ne.s32.totalorder %s92, %s93
    %p102 = scmp.eq.s32.totalorder %s19, 0
    %p103 = por %p101, %p102
    %p104 = scmp.ne.s32.totalorder %s92, %s93
    %p105 = scmp.eq.s32.totalorder %s20, 1
    %p106 = por %p104, %p105
    %p108 = scmp.ne.s32.totalorder %s93, %s107
    %p109 = scmp.eq.s32.totalorder %s20, 0
    %p110 = por %p108, %p109
    %s112 = sadd.s32 %s111, 1
    %p115 = scmp.eq.s32.totalorder %s14, 1
    %p116 = scmp.ne.s32.totalorder %s111, %s113
    %p117 = scmp.eq.s32.totalorder %s14, 0
    %p118 = por %p116, %p117
    %p119 = scmp.ne.s32.totalorder %s111, %s113
    %p120 = scmp.eq.s32.totalorder %s19, 1
    %p121 = por %p119, %p120
    %p122 = scmp.ne.s32.totalorder %s113, %s114
    %p123 = scmp.eq.s32.totalorder %s19, 0
    %p124 = por %p122, %p123
    %p125 = scmp.ne.s32.totalorder %s113, %s114
    %p126 = scmp.eq.s32.totalorder %s20, 1
    %p127 = por %p125, %p126
    %p129 = scmp.ne.s32.totalorder %s114, %s128
    %p130 = scmp.eq.s32.totalorder %s20, 0
    %p131 = por %p129, %p130
    %s133 = sadd.s32 %s132, 1
    %p136 = scmp.eq.s32.totalorder %s14, 1
    %p137 = scmp.ne.s32.totalorder %s132, %s134
    %p138 = scmp.eq.s32.totalorder %s14, 0
    %p139 = por %p137, %p138
    %p140 = scmp.ne.s32.totalorder %s132, %s134
    %p141 = scmp.eq.s32.totalorder %s19, 1
    %p142 = por %p140, %p141
    %p143 = scmp.ne.s32.totalorder %s134, %s135
    %p144 = scmp.eq.s32.totalorder %s19, 0
    %p145 = por %p143, %p144
    %p146 = scmp.ne.s32.totalorder %s134, %s135
    %p147 = scmp.eq.s32.totalorder %s20, 1
    %p148 = por %p146, %p147
    %p150 = scmp.ne.s32.totalorder %s135, %s149
    %p151 = scmp.eq.s32.totalorder %s20, 0
    %p152 = por %p150, %p151
    %s153 = ssub.s32 %s14, %s21
    %p154 = scmp.eq.s32.totalorder %s153, 0
    %s156 = sadd.s32 %s155, 1
    %s157 = scalar_select %p154, %s155, %s156
    %p160 = pneg %p154
    %p161 = scmp.eq.s32.totalorder %s14, 1
    %p162 = por %p160, %p161
    %p163 = scmp.ne.s32.totalorder %s155, %s158
    %p164 = scmp.eq.s32.totalorder %s14, 0
    %p165 = por %p163, %p164
    %p166 = scmp.ne.s32.totalorder %s155, %s158
    %p167 = scmp.eq.s32.totalorder %s19, 1
    %p168 = por %p166, %p167
    %p169 = scmp.ne.s32.totalorder %s158, %s159
    %p170 = scmp.eq.s32.totalorder %s19, 0
    %p171 = por %p169, %p170
    %p172 = scmp.ne.s32.totalorder %s158, %s159
    %p173 = scmp.eq.s32.totalorder %s20, 1
    %p174 = por %p172, %p173
    %p176 = scmp.ne.s32.totalorder %s159, %s175
    %p177 = scmp.eq.s32.totalorder %s20, 0
    %p178 = por %p176, %p177
    %s179 = ssub.s32 %s14, %s21
    %p180 = scmp.eq.s32.totalorder %s179, 0
    %s182 = sadd.s32 %s181, 1
    %s183 = scalar_select %p180, %s181, %s182
    %p186 = pneg %p180
    %p187 = scmp.eq.s32.totalorder %s14, 1
    %p188 = por %p186, %p187
    %p189 = scmp.ne.s32.totalorder %s181, %s184
    %p190 = scmp.eq.s32.totalorder %s14, 0
    %p191 = por %p189, %p190
    %p192 = scmp.ne.s32.totalorder %s181, %s184
    %p193 = scmp.eq.s32.totalorder %s19, 1
    %p194 = por %p192, %p193
    %p195 = scmp.ne.s32.totalorder %s184, %s185
    %p196 = scmp.eq.s32.totalorder %s19, 0
    %p197 = por %p195, %p196
    %p198 = scmp.ne.s32.totalorder %s184, %s185
    %p199 = scmp.eq.s32.totalorder %s20, 1
    %p200 = por %p198, %p199
    %p202 = scmp.ne.s32.totalorder %s185, %s201
    %p203 = scmp.eq.s32.totalorder %s20, 0
    %p204 = por %p202, %p203
    %p205 = scmp.le.s32.totalorder 1, %s14
    %p206 = scmp.lt.s32.totalorder %s14, 3
    %p207 = pnand %p205, %p206
    %p208 = pneg %p207
    // Predicated region
    $region9: #{down_forward.1} parent=5 // pred_check
      _
    $region10: #{down_forward.1} parent=5 // pred_check_branch
      %210 = sbr.rel (%p207) target = $region12
    $region11: #{down_forward.1} parent=5 // pred_region
      %s211 = ssub.s32 %s14, 1
      // Predicated region
      $region13: #{down_forward.1} parent=11 // pred_check
        %p212 = pneg %p35
      $region14: #{down_forward.1} parent=11 // pred_check_branch
        %214 = sbr.rel (%p212) target = $region16
      $region15: #{down_forward.1} parent=11 // pred_region
        _
      $region16: #{down_forward.1} parent=11 // pred_fallthru
        _
      // Predicated region
      $region17: #{down_forward.1} parent=11 // pred_check
        %p215 = pneg %p82
      $region18: #{down_forward.1} parent=11 // pred_check_branch
        %217 = sbr.rel (%p215) target = $region20
      $region19: #{down_forward.1} parent=11 // pred_region
        _
      $region20: #{down_forward.1} parent=11 // pred_fallthru
        _
      // Predicated region
      $region21: #{down_forward.1} parent=11 // pred_check
        %p218 = pneg %p103
      $region22: #{down_forward.1} parent=11 // pred_check_branch
        %220 = sbr.rel (%p218) target = $region24
      $region23: #{down_forward.1} parent=11 // pred_region
        _
      $region24: #{down_forward.1} parent=11 // pred_fallthru
        _
      // Predicated region
      $region25: #{down_forward.1} parent=11 // pred_check
        %p221 = pneg %p124
      $region26: #{down_forward.1} parent=11 // pred_check_branch
        %223 = sbr.rel (%p221) target = $region28
      $region27: #{down_forward.1} parent=11 // pred_region
        _
      $region28: #{down_forward.1} parent=11 // pred_fallthru
        _
      // Predicated region
      $region29: #{down_forward.1} parent=11 // pred_check
        %p224 = pneg %p145
      $region30: #{down_forward.1} parent=11 // pred_check_branch
        %226 = sbr.rel (%p224) target = $region32
      $region31: #{down_forward.1} parent=11 // pred_region
        _
      $region32: #{down_forward.1} parent=11 // pred_fallthru
        _
    $region12: #{down_forward.1} parent=5 // pred_fallthru
      _
    %p227 = scmp.lt.s32.totalorder %s14, 2
    // Predicated region
    $region33: #{down_forward.1} parent=5 // pred_check
      %p228 = pneg %p227
    $region34: #{down_forward.1} parent=5 // pred_check_branch
      %230 = sbr.rel (%p228) target = $region36
    $region35: #{down_forward.1} parent=5 // pred_region
      // Predicated region
      $region37: #{down_forward.1} parent=35 // pred_check
        %p231 = pneg %p55
      $region38: #{down_forward.1} parent=35 // pred_check_branch
        %233 = sbr.rel (%p231) target = $region40
      $region39: #{down_forward.1} parent=35 // pred_region
        %p234 = scmp.lt.s32.totalorder %s14, 1
        %s235 = scalar_select %p234, %s14, 1
        %s236 = smul.addr %s235, 4
        %s237 = smul.addr %s236, 2
        %s238 = scalar_lea.vmem %s1, %s237
      $region40: #{down_forward.1} parent=35 // pred_fallthru
        _
    $region36: #{down_forward.1} parent=5 // pred_fallthru
      _
    %p239 = scmp.le.s32.totalorder 1, %s14
    %p240 = scmp.lt.s32.totalorder %s14, 3
    %p241 = pnand %p239, %p240
    %p242 = pneg %p241
    // Predicated region
    $region41: #{down_forward.1} parent=5 // pred_check
      _
    $region42: #{down_forward.1} parent=5 // pred_check_branch
      %244 = sbr.rel (%p241) target = $region44
    $region43: #{down_forward.1} parent=5 // pred_region
      %s245 = ssub.s32 %s14, 1
      %p246 = pneg %p35
      %p247 = pneg %p32
      %p248 = scmp.lt.s32.totalorder %s19, 1
      %s249 = scalar_select %p248, %s19, 1
      %s250 = smul.addr %s249, 4
      %s251 = smul.addr %s250, 2
      %s252 = scalar_lea.vmem %s1, %s251
      %p253 = pneg %p61
      %p254 = pneg %p58
      %p255 = pneg %p82
      %p256 = pneg %p79
      %p257 = pneg %p103
      %p258 = pneg %p100
      %p259 = pneg %p124
      %p260 = pneg %p121
      %p261 = pneg %p145
      %p262 = pneg %p142
      %p263 = pneg %p171
      %p264 = pneg %p168
      %p265 = scmp.lt.s32.totalorder %s19, 1
      %s266 = scalar_select %p265, %s19, 1
      %s267 = smul.addr %s266, 4
      %s268 = smul.addr %s267, 8
      %s269 = scalar_lea.vmem %s6, %s268
      %p270 = pneg %p197
      %p271 = pneg %p194
      %p272 = scmp.lt.s32.totalorder %s19, 1
      %s273 = scalar_select %p272, %s19, 1
      %s274 = smul.addr %s273, 4
      %s275 = smul.addr %s274, 8
      %s276 = scalar_lea.vmem %s7, %s275
      %p277 = scmp.lt.s32.totalorder %s19, 1
      %s278 = scalar_select %p277, %s19, 1
      %s279 = smul.addr %s278, 4
      %s280 = smul.addr %s279, 2
      %s281 = scalar_lea.vmem %s1, %s280
      %p282 = scmp.lt.s32.totalorder %s19, 1
      %s283 = scalar_select %p282, %s19, 1
      %s284 = smul.addr %s283, 4
      %s285 = smul.addr %s284, 8
      %s286 = scalar_lea.vmem %s6, %s285
      %p287 = scmp.lt.s32.totalorder %s19, 1
      %s288 = scalar_select %p287, %s19, 1
      %s289 = smul.addr %s288, 4
      %s290 = smul.addr %s289, 8
      %s291 = scalar_lea.vmem %s7, %s290
      %v293 = vld [vmem:[%s281] sm:$0xff]
      %v295 = vcombine.high %v293, %v293
      %v297 = vunpack.c.l.s4 1983009808
      %v298 = vunpack.c.0.s8 %v297
      %v299 = vlaneseq
      %v300 = vshrl.u32 %v299, 7
      %v301 = vsub.s32 %v298, %v300
      %v302 = vrot.slane %v293, %v301
      %v304 = vunpack.c.l.s4 1983009808
      %v305 = vunpack.c.0.s8 %v304
      %v306 = vlaneseq
      %v307 = vshrl.u32 %v306, 7
      %v308 = vsub.s32 %v305, %v307
      %v309 = vrot.slane %v295, %v308
      %v310 = vcombine.high %v309, %v309
      %311 = vrot.lane.b32.xlu0 %v310, 73
      %v312 = vpop.permute.xlu0 %311
      %v313 = vcombine.high %v302, %v302
      %314 = vrot.lane.b32.xlu0 %v302, 73
      %v315 = vpop.permute.xlu0 %314
      %316 = vrot.lane.b32.xlu0 %v313, 73
      %v317 = vpop.permute.xlu0 %316
      %318 = vrot.lane.b32.xlu0 %v309, 73
      %v319 = vpop.permute.xlu0 %318
      %vm320 = vcmask 596992
      %v321 = vsel %vm320, %v315, %v317
      %v322 = vsel %vm320, %v317, %v319
      %v323 = vsel %vm320, %v319, %v312
      %vm327 = vcmask 596992
      %v330 = vsel %vm327, %v312, %v315
      %v332 = vld [vmem:[%s0] ss:$8 sm:$0xf]
      %v334 = vlaneseq
      %v335 = vshrl.u32 %v334, 7
      %v336 = vsub.s32 0, %v335
      %v337 = vrot.slane %v332, %v336
      %v338 = vlaneseq
      %v339 = vshrl.u32 %v338, 7
      %v340 = vsub.s32 1, %v339
      %v341 = vrot.slane %v332, %v340
      %v342 = vlaneseq
      %v343 = vshrl.u32 %v342, 7
      %v344 = vsub.s32 2, %v343
      %v345 = vrot.slane %v332, %v344
      %v346 = vlaneseq
      %v347 = vshrl.u32 %v346, 7
      %v348 = vsub.s32 3, %v347
      %v349 = vrot.slane %v332, %v348
      %v354 = vpack.c.bf16 %v337, %v337
      %v355 = vpack.c.bf16 %v341, %v341
      %v356 = vpack.c.bf16 %v345, %v345
      %v357 = vpack.c.bf16 %v349, %v349
      %v359 = vpack.i.b16 %v354, %v354
      %v361 = vlaneseq
      %v362 = vshrl.u32 %v361, 7
      %v363 = vsub.s32 0, %v362
      %v364 = vrot.slane %v359, %v363
      %v366 = vpack.i.b16 %v355, %v355
      %v368 = vlaneseq
      %v369 = vshrl.u32 %v368, 7
      %v370 = vsub.s32 0, %v369
      %v371 = vrot.slane %v366, %v370
      %v373 = vpack.i.b16 %v356, %v356
      %v375 = vlaneseq
      %v376 = vshrl.u32 %v375, 7
      %v377 = vsub.s32 0, %v376
      %v378 = vrot.slane %v373, %v377
      %v380 = vpack.i.b16 %v357, %v357
      %v382 = vlaneseq
      %v383 = vshrl.u32 %v382, 7
      %v384 = vsub.s32 0, %v383
      %v385 = vrot.slane %v380, %v384
      %v386 = vmul.bf16 %v330, %v364
      %v387 = vmul.bf16 %v321, %v371
      %v388 = vmul.bf16 %v322, %v378
      %v389 = vmul.bf16 %v323, %v385
      %390 = vrot.lane.b32.xlu0 %v310, 72
      %v391 = vpop.permute.xlu0 %390
      %392 = vrot.lane.b32.xlu0 %v302, 72
      %v393 = vpop.permute.xlu0 %392
      %394 = vrot.lane.b32.xlu0 %v313, 72
      %v395 = vpop.permute.xlu0 %394
      %396 = vrot.lane.b32.xlu0 %v309, 72
      %v397 = vpop.permute.xlu0 %396
      %vm398 = vcmask 588800
      %v399 = vsel %vm398, %v393, %v395
      %v400 = vsel %vm398, %v395, %v397
      %v401 = vsel %vm398, %v397, %v391
      %vm405 = vcmask 588800
      %v408 = vsel %vm405, %v391, %v393
      %s410 = scalar_lea.vmem %s0, 1
      %v411 = vld [vmem:[%s410] ss:$8 sm:$0xf]
      %v413 = vlaneseq
      %v414 = vshrl.u32 %v413, 7
      %v415 = vsub.s32 0, %v414
      %v416 = vrot.slane %v411, %v415
      %v417 = vlaneseq
      %v418 = vshrl.u32 %v417, 7
      %v419 = vsub.s32 1, %v418
      %v420 = vrot.slane %v411, %v419
      %v421 = vlaneseq
      %v422 = vshrl.u32 %v421, 7
      %v423 = vsub.s32 2, %v422
      %v424 = vrot.slane %v411, %v423
      %v425 = vlaneseq
      %v426 = vshrl.u32 %v425, 7
      %v427 = vsub.s32 3, %v426
      %v428 = vrot.slane %v411, %v427
      %v433 = vpack.c.bf16 %v416, %v416
      %v434 = vpack.c.bf16 %v420, %v420
      %v435 = vpack.c.bf16 %v424, %v424
      %v436 = vpack.c.bf16 %v428, %v428
      %v438 = vpack.i.b16 %v433, %v433
      %v440 = vlaneseq
      %v441 = vshrl.u32 %v440, 7
      %v442 = vsub.s32 0, %v441
      %v443 = vrot.slane %v438, %v442
      %v445 = vpack.i.b16 %v434, %v434
      %v447 = vlaneseq
      %v448 = vshrl.u32 %v447, 7
      %v449 = vsub.s32 0, %v448
      %v450 = vrot.slane %v445, %v449
      %v452 = vpack.i.b16 %v435, %v435
      %v454 = vlaneseq
      %v455 = vshrl.u32 %v454, 7
      %v456 = vsub.s32 0, %v455
      %v457 = vrot.slane %v452, %v456
      %v459 = vpack.i.b16 %v436, %v436
      %v461 = vlaneseq
      %v462 = vshrl.u32 %v461, 7
      %v463 = vsub.s32 0, %v462
      %v464 = vrot.slane %v459, %v463
      %v465 = vmul.bf16 %v408, %v443
      %v466 = vmul.bf16 %v399, %v450
      %v467 = vmul.bf16 %v400, %v457
      %v468 = vmul.bf16 %v401, %v464
      %469 = vrot.lane.b32.xlu0 %v310, 71
      %v470 = vpop.permute.xlu0 %469
      %471 = vrot.lane.b32.xlu0 %v302, 71
      %v472 = vpop.permute.xlu0 %471
      %473 = vrot.lane.b32.xlu0 %v313, 71
      %v474 = vpop.permute.xlu0 %473
      %475 = vrot.lane.b32.xlu0 %v309, 71
      %v476 = vpop.permute.xlu0 %475
      %vm477 = vcmask 580608
      %v478 = vsel %vm477, %v472, %v474
      %v479 = vsel %vm477, %v474, %v476
      %v480 = vsel %vm477, %v476, %v470
      %vm484 = vcmask 580608
      %v487 = vsel %vm484, %v470, %v472
      %s489 = scalar_lea.vmem %s0, 2
      %v490 = vld [vmem:[%s489] ss:$8 sm:$0xf]
      %v492 = vlaneseq
      %v493 = vshrl.u32 %v492, 7
      %v494 = vsub.s32 0, %v493
      %v495 = vrot.slane %v490, %v494
      %v496 = vlaneseq
      %v497 = vshrl.u32 %v496, 7
      %v498 = vsub.s32 1, %v497
      %v499 = vrot.slane %v490, %v498
      %v500 = vlaneseq
      %v501 = vshrl.u32 %v500, 7
      %v502 = vsub.s32 2, %v501
      %v503 = vrot.slane %v490, %v502
      %v504 = vlaneseq
      %v505 = vshrl.u32 %v504, 7
      %v506 = vsub.s32 3, %v505
      %v507 = vrot.slane %v490, %v506
      %v512 = vpack.c.bf16 %v495, %v495
      %v513 = vpack.c.bf16 %v499, %v499
      %v514 = vpack.c.bf16 %v503, %v503
      %v515 = vpack.c.bf16 %v507, %v507
      %v517 = vpack.i.b16 %v512, %v512
      %v519 = vlaneseq
      %v520 = vshrl.u32 %v519, 7
      %v521 = vsub.s32 0, %v520
      %v522 = vrot.slane %v517, %v521
      %v524 = vpack.i.b16 %v513, %v513
      %v526 = vlaneseq
      %v527 = vshrl.u32 %v526, 7
      %v528 = vsub.s32 0, %v527
      %v529 = vrot.slane %v524, %v528
      %v531 = vpack.i.b16 %v514, %v514
      %v533 = vlaneseq
      %v534 = vshrl.u32 %v533, 7
      %v535 = vsub.s32 0, %v534
      %v536 = vrot.slane %v531, %v535
      %v538 = vpack.i.b16 %v515, %v515
      %v540 = vlaneseq
      %v541 = vshrl.u32 %v540, 7
      %v542 = vsub.s32 0, %v541
      %v543 = vrot.slane %v538, %v542
      %v544 = vmul.bf16 %v487, %v522
      %v545 = vmul.bf16 %v478, %v529
      %v546 = vmul.bf16 %v479, %v536
      %v547 = vmul.bf16 %v480, %v543
      %548 = vrot.lane.b32.xlu0 %v310, 65
      %v549 = vpop.permute.xlu0 %548
      %550 = vrot.lane.b32.xlu0 %v302, 65
      %v551 = vpop.permute.xlu0 %550
      %552 = vrot.lane.b32.xlu0 %v313, 65
      %v553 = vpop.permute.xlu0 %552
      %554 = vrot.lane.b32.xlu0 %v309, 65
      %v555 = vpop.permute.xlu0 %554
      %vm556 = vcmask 531456
      %v557 = vsel %vm556, %v551, %v553
      %v558 = vsel %vm556, %v553, %v555
      %v559 = vsel %vm556, %v555, %v549
      %vm563 = vcmask 531456
      %v566 = vsel %vm563, %v549, %v551
      %s568 = scalar_lea.vmem %s0, 3
      %v569 = vld [vmem:[%s568] ss:$8 sm:$0xf]
      %v571 = vlaneseq
      %v572 = vshrl.u32 %v571, 7
      %v573 = vsub.s32 0, %v572
      %v574 = vrot.slane %v569, %v573
      %v575 = vlaneseq
      %v576 = vshrl.u32 %v575, 7
      %v577 = vsub.s32 1, %v576
      %v578 = vrot.slane %v569, %v577
      %v579 = vlaneseq
      %v580 = vshrl.u32 %v579, 7
      %v581 = vsub.s32 2, %v580
      %v582 = vrot.slane %v569, %v581
      %v583 = vlaneseq
      %v584 = vshrl.u32 %v583, 7
      %v585 = vsub.s32 3, %v584
      %v586 = vrot.slane %v569, %v585
      %v591 = vpack.c.bf16 %v574, %v574
      %v592 = vpack.c.bf16 %v578, %v578
      %v593 = vpack.c.bf16 %v582, %v582
      %v594 = vpack.c.bf16 %v586, %v586
      %v596 = vpack.i.b16 %v591, %v591
      %v598 = vlaneseq
      %v599 = vshrl.u32 %v598, 7
      %v600 = vsub.s32 0, %v599
      %v601 = vrot.slane %v596, %v600
      %v603 = vpack.i.b16 %v592, %v592
      %v605 = vlaneseq
      %v606 = vshrl.u32 %v605, 7
      %v607 = vsub.s32 0, %v606
      %v608 = vrot.slane %v603, %v607
      %v610 = vpack.i.b16 %v593, %v593
      %v612 = vlaneseq
      %v613 = vshrl.u32 %v612, 7
      %v614 = vsub.s32 0, %v613
      %v615 = vrot.slane %v610, %v614
      %v617 = vpack.i.b16 %v594, %v594
      %v619 = vlaneseq
      %v620 = vshrl.u32 %v619, 7
      %v621 = vsub.s32 0, %v620
      %v622 = vrot.slane %v617, %v621
      %v623 = vmul.bf16 %v566, %v601
      %v624 = vmul.bf16 %v557, %v608
      %v625 = vmul.bf16 %v558, %v615
      %v626 = vmul.bf16 %v559, %v622
      %v631 = vrot.slane %v465, 6
      %v632 = vrot.slane %v466, 6
      %v633 = vrot.slane %v467, 6
      %v634 = vrot.slane %v468, 6
      %v639 = vrot.slane %v544, 4
      %v640 = vrot.slane %v545, 4
      %v641 = vrot.slane %v546, 4
      %v642 = vrot.slane %v547, 4
      %v647 = vrot.slane %v623, 2
      %v648 = vrot.slane %v624, 2
      %v649 = vrot.slane %v625, 2
      %v650 = vrot.slane %v626, 2
      %vm651 = vcmask 1041408
      %v654 = vsel %vm651, %v386, %v631
      %v657 = vsel %vm651, %v387, %v632
      %v660 = vsel %vm651, %v388, %v633
      %v663 = vsel %vm651, %v389, %v634
      %vm664 = vcmask 1043456
      %v666 = vsel %vm664, %v654, %v639
      %v668 = vsel %vm664, %v657, %v640
      %v670 = vsel %vm664, %v660, %v641
      %v672 = vsel %vm664, %v663, %v642
      %vm673 = vcmask 1045504
      %v675 = vsel %vm673, %v666, %v647
      %v678 = vsel %vm673, %v668, %v648
      %v681 = vsel %vm673, %v670, %v649
      %v684 = vsel %vm673, %v672, %v650
      %686 = vst [vmem:[#allocation2] sm:$0xff] %v675
      %687 = vst [vmem:[#allocation2 + $0x8] sm:$0xff] %v678
      %688 = vst [vmem:[#allocation2 + $0x10] sm:$0xff] %v681
      %689 = vst [vmem:[#allocation2 + $0x18] sm:$0xff] %v684
      %690 = vrot.lane.b32.xlu0 %v310, 64
      %v691 = vpop.permute.xlu0 %690
      %692 = vrot.lane.b32.xlu0 %v302, 64
      %v693 = vpop.permute.xlu0 %692
      %694 = vrot.lane.b32.xlu0 %v313, 64
      %v695 = vpop.permute.xlu0 %694
      %696 = vrot.lane.b32.xlu0 %v309, 64
      %v697 = vpop.permute.xlu0 %696
      %vm698 = vcmask 523264
      %v699 = vsel %vm698, %v693, %v695
      %v700 = vsel %vm698, %v695, %v697
      %v701 = vsel %vm698, %v697, %v691
      %vm705 = vcmask 523264
      %v708 = vsel %vm705, %v691, %v693
      %s710 = scalar_lea.vmem %s0, 4
      %v711 = vld [vmem:[%s710] ss:$8 sm:$0xf]
      %v713 = vlaneseq
      %v714 = vshrl.u32 %v713, 7
      %v715 = vsub.s32 0, %v714
      %v716 = vrot.slane %v711, %v715
      %v717 = vlaneseq
      %v718 = vshrl.u32 %v717, 7
      %v719 = vsub.s32 1, %v718
      %v720 = vrot.slane %v711, %v719
      %v721 = vlaneseq
      %v722 = vshrl.u32 %v721, 7
      %v723 = vsub.s32 2, %v722
      %v724 = vrot.slane %v711, %v723
      %v725 = vlaneseq
      %v726 = vshrl.u32 %v725, 7
      %v727 = vsub.s32 3, %v726
      %v728 = vrot.slane %v711, %v727
      %v733 = vpack.c.bf16 %v716, %v716
      %v734 = vpack.c.bf16 %v720, %v720
      %v735 = vpack.c.bf16 %v724, %v724
      %v736 = vpack.c.bf16 %v728, %v728
      %v738 = vpack.i.b16 %v733, %v733
      %v740 = vlaneseq
      %v741 = vshrl.u32 %v740, 7
      %v742 = vsub.s32 0, %v741
      %v743 = vrot.slane %v738, %v742
      %v745 = vpack.i.b16 %v734, %v734
      %v747 = vlaneseq
      %v748 = vshrl.u32 %v747, 7
      %v749 = vsub.s32 0, %v748
      %v750 = vrot.slane %v745, %v749
      %v752 = vpack.i.b16 %v735, %v735
      %v754 = vlaneseq
      %v755 = vshrl.u32 %v754, 7
      %v756 = vsub.s32 0, %v755
      %v757 = vrot.slane %v752, %v756
      %v759 = vpack.i.b16 %v736, %v736
      %v761 = vlaneseq
      %v762 = vshrl.u32 %v761, 7
      %v763 = vsub.s32 0, %v762
      %v764 = vrot.slane %v759, %v763
      %v765 = vmul.bf16 %v708, %v743
      %v766 = vmul.bf16 %v699, %v750
      %v767 = vmul.bf16 %v700, %v757
      %v768 = vmul.bf16 %v701, %v764
      %769 = vrot.lane.b32.xlu0 %v310, 63
      %v770 = vpop.permute.xlu0 %769
      %771 = vrot.lane.b32.xlu0 %v302, 63
      %v772 = vpop.permute.xlu0 %771
      %773 = vrot.lane.b32.xlu0 %v313, 63
      %v774 = vpop.permute.xlu0 %773
      %775 = vrot.lane.b32.xlu0 %v309, 63
      %v776 = vpop.permute.xlu0 %775
      %vm777 = vcmask 515072
      %v778 = vsel %vm777, %v772, %v774
      %v779 = vsel %vm777, %v774, %v776
      %v780 = vsel %vm777, %v776, %v770
      %vm784 = vcmask 515072
      %v787 = vsel %vm784, %v770, %v772
      %s789 = scalar_lea.vmem %s0, 5
      %v790 = vld [vmem:[%s789] ss:$8 sm:$0xf]
      %v792 = vlaneseq
      %v793 = vshrl.u32 %v792, 7
      %v794 = vsub.s32 0, %v793
      %v795 = vrot.slane %v790, %v794
      %v796 = vlaneseq
      %v797 = vshrl.u32 %v796, 7
      %v798 = vsub.s32 1, %v797
      %v799 = vrot.slane %v790, %v798
      %v800 = vlaneseq
      %v801 = vshrl.u32 %v800, 7
      %v802 = vsub.s32 2, %v801
      %v803 = vrot.slane %v790, %v802
      %v804 = vlaneseq
      %v805 = vshrl.u32 %v804, 7
      %v806 = vsub.s32 3, %v805
      %v807 = vrot.slane %v790, %v806
      %v812 = vpack.c.bf16 %v795, %v795
      %v813 = vpack.c.bf16 %v799, %v799
      %v814 = vpack.c.bf16 %v803, %v803
      %v815 = vpack.c.bf16 %v807, %v807
      %v817 = vpack.i.b16 %v812, %v812
      %v819 = vlaneseq
      %v820 = vshrl.u32 %v819, 7
      %v821 = vsub.s32 0, %v820
      %v822 = vrot.slane %v817, %v821
      %v824 = vpack.i.b16 %v813, %v813
      %v826 = vlaneseq
      %v827 = vshrl.u32 %v826, 7
      %v828 = vsub.s32 0, %v827
      %v829 = vrot.slane %v824, %v828
      %v831 = vpack.i.b16 %v814, %v814
      %v833 = vlaneseq
      %v834 = vshrl.u32 %v833, 7
      %v835 = vsub.s32 0, %v834
      %v836 = vrot.slane %v831, %v835
      %v838 = vpack.i.b16 %v815, %v815
      %v840 = vlaneseq
      %v841 = vshrl.u32 %v840, 7
      %v842 = vsub.s32 0, %v841
      %v843 = vrot.slane %v838, %v842
      %v844 = vmul.bf16 %v787, %v822
      %v845 = vmul.bf16 %v778, %v829
      %v846 = vmul.bf16 %v779, %v836
      %v847 = vmul.bf16 %v780, %v843
      %848 = vrot.lane.b32.xlu0 %v310, 57
      %v849 = vpop.permute.xlu0 %848
      %850 = vrot.lane.b32.xlu0 %v302, 57
      %v851 = vpop.permute.xlu0 %850
      %852 = vrot.lane.b32.xlu0 %v313, 57
      %v853 = vpop.permute.xlu0 %852
      %854 = vrot.lane.b32.xlu0 %v309, 57
      %v855 = vpop.permute.xlu0 %854
      %vm856 = vcmask 465920
      %v857 = vsel %vm856, %v851, %v853
      %v858 = vsel %vm856, %v853, %v855
      %v859 = vsel %vm856, %v855, %v849
      %vm863 = vcmask 465920
      %v866 = vsel %vm863, %v849, %v851
      %s868 = scalar_lea.vmem %s0, 6
      %v869 = vld [vmem:[%s868] ss:$8 sm:$0xf]
      %v871 = vlaneseq
      %v872 = vshrl.u32 %v871, 7
      %v873 = vsub.s32 0, %v872
      %v874 = vrot.slane %v869, %v873
      %v875 = vlaneseq
      %v876 = vshrl.u32 %v875, 7
      %v877 = vsub.s32 1, %v876
      %v878 = vrot.slane %v869, %v877
      %v879 = vlaneseq
      %v880 = vshrl.u32 %v879, 7
      %v881 = vsub.s32 2, %v880
      %v882 = vrot.slane %v869, %v881
      %v883 = vlaneseq
      %v884 = vshrl.u32 %v883, 7
      %v885 = vsub.s32 3, %v884
      %v886 = vrot.slane %v869, %v885
      %v891 = vpack.c.bf16 %v874, %v874
      %v892 = vpack.c.bf16 %v878, %v878
      %v893 = vpack.c.bf16 %v882, %v882
      %v894 = vpack.c.bf16 %v886, %v886
      %v896 = vpack.i.b16 %v891, %v891
      %v898 = vlaneseq
      %v899 = vshrl.u32 %v898, 7
      %v900 = vsub.s32 0, %v899
      %v901 = vrot.slane %v896, %v900
      %v903 = vpack.i.b16 %v892, %v892
      %v905 = vlaneseq
      %v906 = vshrl.u32 %v905, 7
      %v907 = vsub.s32 0, %v906
      %v908 = vrot.slane %v903, %v907
      %v910 = vpack.i.b16 %v893, %v893
      %v912 = vlaneseq
      %v913 = vshrl.u32 %v912, 7
      %v914 = vsub.s32 0, %v913
      %v915 = vrot.slane %v910, %v914
      %v917 = vpack.i.b16 %v894, %v894
      %v919 = vlaneseq
      %v920 = vshrl.u32 %v919, 7
      %v921 = vsub.s32 0, %v920
      %v922 = vrot.slane %v917, %v921
      %v923 = vmul.bf16 %v866, %v901
      %v924 = vmul.bf16 %v857, %v908
      %v925 = vmul.bf16 %v858, %v915
      %v926 = vmul.bf16 %v859, %v922
      %927 = vrot.lane.b32.xlu0 %v310, 56
      %v928 = vpop.permute.xlu0 %927
      %929 = vrot.lane.b32.xlu0 %v302, 56
      %v930 = vpop.permute.xlu0 %929
      %931 = vrot.lane.b32.xlu0 %v313, 56
      %v932 = vpop.permute.xlu0 %931
      %933 = vrot.lane.b32.xlu0 %v309, 56
      %v934 = vpop.permute.xlu0 %933
      %vm935 = vcmask 457728
      %v936 = vsel %vm935, %v930, %v932
      %v937 = vsel %vm935, %v932, %v934
      %v938 = vsel %vm935, %v934, %v928
      %vm942 = vcmask 457728
      %v945 = vsel %vm942, %v928, %v930
      %s947 = scalar_lea.vmem %s0, 7
      %v948 = vld [vmem:[%s947] ss:$8 sm:$0xf]
      %v950 = vlaneseq
      %v951 = vshrl.u32 %v950, 7
      %v952 = vsub.s32 0, %v951
      %v953 = vrot.slane %v948, %v952
      %v954 = vlaneseq
      %v955 = vshrl.u32 %v954, 7
      %v956 = vsub.s32 1, %v955
      %v957 = vrot.slane %v948, %v956
      %v958 = vlaneseq
      %v959 = vshrl.u32 %v958, 7
      %v960 = vsub.s32 2, %v959
      %v961 = vrot.slane %v948, %v960
      %v962 = vlaneseq
      %v963 = vshrl.u32 %v962, 7
      %v964 = vsub.s32 3, %v963
      %v965 = vrot.slane %v948, %v964
      %v970 = vpack.c.bf16 %v953, %v953
      %v971 = vpack.c.bf16 %v957, %v957
      %v972 = vpack.c.bf16 %v961, %v961
      %v973 = vpack.c.bf16 %v965, %v965
      %v975 = vpack.i.b16 %v970, %v970
      %v977 = vlaneseq
      %v978 = vshrl.u32 %v977, 7
      %v979 = vsub.s32 0, %v978
      %v980 = vrot.slane %v975, %v979
      %v982 = vpack.i.b16 %v971, %v971
      %v984 = vlaneseq
      %v985 = vshrl.u32 %v984, 7
      %v986 = vsub.s32 0, %v985
      %v987 = vrot.slane %v982, %v986
      %v989 = vpack.i.b16 %v972, %v972
      %v991 = vlaneseq
      %v992 = vshrl.u32 %v991, 7
      %v993 = vsub.s32 0, %v992
      %v994 = vrot.slane %v989, %v993
      %v996 = vpack.i.b16 %v973, %v973
      %v998 = vlaneseq
      %v999 = vshrl.u32 %v998, 7
      %v1000 = vsub.s32 0, %v999
      %v1001 = vrot.slane %v996, %v1000
      %v1002 = vmul.bf16 %v945, %v980
      %v1003 = vmul.bf16 %v936, %v987
      %v1004 = vmul.bf16 %v937, %v994
      %v1005 = vmul.bf16 %v938, %v1001
      %v1010 = vrot.slane %v844, 6
      %v1011 = vrot.slane %v845, 6
      %v1012 = vrot.slane %v846, 6
      %v1013 = vrot.slane %v847, 6
      %v1018 = vrot.slane %v923, 4
      %v1019 = vrot.slane %v924, 4
      %v1020 = vrot.slane %v925, 4
      %v1021 = vrot.slane %v926, 4
      %v1026 = vrot.slane %v1002, 2
      %v1027 = vrot.slane %v1003, 2
      %v1028 = vrot.slane %v1004, 2
      %v1029 = vrot.slane %v1005, 2
      %v1032 = vsel %vm651, %v765, %v1010
      %v1035 = vsel %vm651, %v766, %v1011
      %v1038 = vsel %vm651, %v767, %v1012
      %v1041 = vsel %vm651, %v768, %v1013
      %v1043 = vsel %vm664, %v1032, %v1018
      %v1045 = vsel %vm664, %v1035, %v1019
      %v1047 = vsel %vm664, %v1038, %v1020
      %v1049 = vsel %vm664, %v1041, %v1021
      %v1051 = vsel %vm673, %v1043, %v1026
      %v1054 = vsel %vm673, %v1045, %v1027
      %v1057 = vsel %vm673, %v1047, %v1028
      %v1060 = vsel %vm673, %v1049, %v1029
      %1062 = vst [vmem:[#allocation2 + $0x20] sm:$0xff] %v1051
      %1063 = vst [vmem:[#allocation2 + $0x28] sm:$0xff] %v1054
      %1064 = vst [vmem:[#allocation2 + $0x30] sm:$0xff] %v1057
      %1065 = vst [vmem:[#allocation2 + $0x38] sm:$0xff] %v1060
      %1066 = vrot.lane.b32.xlu0 %v310, 55
      %v1067 = vpop.permute.xlu0 %1066
      %1068 = vrot.lane.b32.xlu0 %v302, 55
      %v1069 = vpop.permute.xlu0 %1068
      %1070 = vrot.lane.b32.xlu0 %v313, 55
      %v1071 = vpop.permute.xlu0 %1070
      %1072 = vrot.lane.b32.xlu0 %v309, 55
      %v1073 = vpop.permute.xlu0 %1072
      %vm1074 = vcmask 449536
      %v1075 = vsel %vm1074, %v1069, %v1071
      %v1076 = vsel %vm1074, %v1071, %v1073
      %v1077 = vsel %vm1074, %v1073, %v1067
      %vm1081 = vcmask 449536
      %v1084 = vsel %vm1081, %v1067, %v1069
      %s1086 = scalar_lea.vmem %s0, 32
      %v1087 = vld [vmem:[%s1086] ss:$8 sm:$0xf]
      %v1089 = vlaneseq
      %v1090 = vshrl.u32 %v1089, 7
      %v1091 = vsub.s32 0, %v1090
      %v1092 = vrot.slane %v1087, %v1091
      %v1093 = vlaneseq
      %v1094 = vshrl.u32 %v1093, 7
      %v1095 = vsub.s32 1, %v1094
      %v1096 = vrot.slane %v1087, %v1095
      %v1097 = vlaneseq
      %v1098 = vshrl.u32 %v1097, 7
      %v1099 = vsub.s32 2, %v1098
      %v1100 = vrot.slane %v1087, %v1099
      %v1101 = vlaneseq
      %v1102 = vshrl.u32 %v1101, 7
      %v1103 = vsub.s32 3, %v1102
      %v1104 = vrot.slane %v1087, %v1103
      %v1109 = vpack.c.bf16 %v1092, %v1092
      %v1110 = vpack.c.bf16 %v1096, %v1096
      %v1111 = vpack.c.bf16 %v1100, %v1100
      %v1112 = vpack.c.bf16 %v1104, %v1104
      %v1114 = vpack.i.b16 %v1109, %v1109
      %v1116 = vlaneseq
      %v1117 = vshrl.u32 %v1116, 7
      %v1118 = vsub.s32 0, %v1117
      %v1119 = vrot.slane %v1114, %v1118
      %v1121 = vpack.i.b16 %v1110, %v1110
      %v1123 = vlaneseq
      %v1124 = vshrl.u32 %v1123, 7
      %v1125 = vsub.s32 0, %v1124
      %v1126 = vrot.slane %v1121, %v1125
      %v1128 = vpack.i.b16 %v1111, %v1111
      %v1130 = vlaneseq
      %v1131 = vshrl.u32 %v1130, 7
      %v1132 = vsub.s32 0, %v1131
      %v1133 = vrot.slane %v1128, %v1132
      %v1135 = vpack.i.b16 %v1112, %v1112
      %v1137 = vlaneseq
      %v1138 = vshrl.u32 %v1137, 7
      %v1139 = vsub.s32 0, %v1138
      %v1140 = vrot.slane %v1135, %v1139
      %v1141 = vmul.bf16 %v1084, %v1119
      %v1142 = vmul.bf16 %v1075, %v1126
      %v1143 = vmul.bf16 %v1076, %v1133
      %v1144 = vmul.bf16 %v1077, %v1140
      %1145 = vrot.lane.b32.xlu0 %v310, 9
      %v1146 = vpop.permute.xlu0 %1145
      %1147 = vrot.lane.b32.xlu0 %v302, 9
      %v1148 = vpop.permute.xlu0 %1147
      %1149 = vrot.lane.b32.xlu0 %v313, 9
      %v1150 = vpop.permute.xlu0 %1149
      %1151 = vrot.lane.b32.xlu0 %v309, 9
      %v1152 = vpop.permute.xlu0 %1151
      %vm1153 = vcmask 72704
      %v1154 = vsel %vm1153, %v1148, %v1150
      %v1155 = vsel %vm1153, %v1150, %v1152
      %v1156 = vsel %vm1153, %v1152, %v1146
      %vm1160 = vcmask 72704
      %v1163 = vsel %vm1160, %v1146, %v1148
      %s1165 = scalar_lea.vmem %s0, 33
      %v1166 = vld [vmem:[%s1165] ss:$8 sm:$0xf]
      %v1168 = vlaneseq
      %v1169 = vshrl.u32 %v1168, 7
      %v1170 = vsub.s32 0, %v1169
      %v1171 = vrot.slane %v1166, %v1170
      %v1172 = vlaneseq
      %v1173 = vshrl.u32 %v1172, 7
      %v1174 = vsub.s32 1, %v1173
      %v1175 = vrot.slane %v1166, %v1174
      %v1176 = vlaneseq
      %v1177 = vshrl.u32 %v1176, 7
      %v1178 = vsub.s32 2, %v1177
      %v1179 = vrot.slane %v1166, %v1178
      %v1180 = vlaneseq
      %v1181 = vshrl.u32 %v1180, 7
      %v1182 = vsub.s32 3, %v1181
      %v1183 = vrot.slane %v1166, %v1182
      %v1188 = vpack.c.bf16 %v1171, %v1171
      %v1189 = vpack.c.bf16 %v1175, %v1175
      %v1190 = vpack.c.bf16 %v1179, %v1179
      %v1191 = vpack.c.bf16 %v1183, %v1183
      %v1193 = vpack.i.b16 %v1188, %v1188
      %v1195 = vlaneseq
      %v1196 = vshrl.u32 %v1195, 7
      %v1197 = vsub.s32 0, %v1196
      %v1198 = vrot.slane %v1193, %v1197
      %v1200 = vpack.i.b16 %v1189, %v1189
      %v1202 = vlaneseq
      %v1203 = vshrl.u32 %v1202, 7
      %v1204 = vsub.s32 0, %v1203
      %v1205 = vrot.slane %v1200, %v1204
      %v1207 = vpack.i.b16 %v1190, %v1190
      %v1209 = vlaneseq
      %v1210 = vshrl.u32 %v1209, 7
      %v1211 = vsub.s32 0, %v1210
      %v1212 = vrot.slane %v1207, %v1211
      %v1214 = vpack.i.b16 %v1191, %v1191
      %v1216 = vlaneseq
      %v1217 = vshrl.u32 %v1216, 7
      %v1218 = vsub.s32 0, %v1217
      %v1219 = vrot.slane %v1214, %v1218
      %v1220 = vmul.bf16 %v1163, %v1198
      %v1221 = vmul.bf16 %v1154, %v1205
      %v1222 = vmul.bf16 %v1155, %v1212
      %v1223 = vmul.bf16 %v1156, %v1219
      %1224 = vrot.lane.b32.xlu0 %v310, 8
      %v1225 = vpop.permute.xlu0 %1224
      %1226 = vrot.lane.b32.xlu0 %v302, 8
      %v1227 = vpop.permute.xlu0 %1226
      %1228 = vrot.lane.b32.xlu0 %v313, 8
      %v1229 = vpop.permute.xlu0 %1228
      %1230 = vrot.lane.b32.xlu0 %v309, 8
      %v1231 = vpop.permute.xlu0 %1230
      %vm1232 = vcmask 64512
      %v1233 = vsel %vm1232, %v1227, %v1229
      %v1234 = vsel %vm1232, %v1229, %v1231
      %v1235 = vsel %vm1232, %v1231, %v1225
      %vm1239 = vcmask 64512
      %v1242 = vsel %vm1239, %v1225, %v1227
      %s1244 = scalar_lea.vmem %s0, 34
      %v1245 = vld [vmem:[%s1244] ss:$8 sm:$0xf]
      %v1247 = vlaneseq
      %v1248 = vshrl.u32 %v1247, 7
      %v1249 = vsub.s32 0, %v1248
      %v1250 = vrot.slane %v1245, %v1249
      %v1251 = vlaneseq
      %v1252 = vshrl.u32 %v1251, 7
      %v1253 = vsub.s32 1, %v1252
      %v1254 = vrot.slane %v1245, %v1253
      %v1255 = vlaneseq
      %v1256 = vshrl.u32 %v1255, 7
      %v1257 = vsub.s32 2, %v1256
      %v1258 = vrot.slane %v1245, %v1257
      %v1259 = vlaneseq
      %v1260 = vshrl.u32 %v1259, 7
      %v1261 = vsub.s32 3, %v1260
      %v1262 = vrot.slane %v1245, %v1261
      %v1267 = vpack.c.bf16 %v1250, %v1250
      %v1268 = vpack.c.bf16 %v1254, %v1254
      %v1269 = vpack.c.bf16 %v1258, %v1258
      %v1270 = vpack.c.bf16 %v1262, %v1262
      %v1272 = vpack.i.b16 %v1267, %v1267
      %v1274 = vlaneseq
      %v1275 = vshrl.u32 %v1274, 7
      %v1276 = vsub.s32 0, %v1275
      %v1277 = vrot.slane %v1272, %v1276
      %v1279 = vpack.i.b16 %v1268, %v1268
      %v1281 = vlaneseq
      %v1282 = vshrl.u32 %v1281, 7
      %v1283 = vsub.s32 0, %v1282
      %v1284 = vrot.slane %v1279, %v1283
      %v1286 = vpack.i.b16 %v1269, %v1269
      %v1288 = vlaneseq
      %v1289 = vshrl.u32 %v1288, 7
      %v1290 = vsub.s32 0, %v1289
      %v1291 = vrot.slane %v1286, %v1290
      %v1293 = vpack.i.b16 %v1270, %v1270
      %v1295 = vlaneseq
      %v1296 = vshrl.u32 %v1295, 7
      %v1297 = vsub.s32 0, %v1296
      %v1298 = vrot.slane %v1293, %v1297
      %v1299 = vmul.bf16 %v1242, %v1277
      %v1300 = vmul.bf16 %v1233, %v1284
      %v1301 = vmul.bf16 %v1234, %v1291
      %v1302 = vmul.bf16 %v1235, %v1298
      %1303 = vrot.lane.b32.xlu0 %v310, 7
      %v1304 = vpop.permute.xlu0 %1303
      %1305 = vrot.lane.b32.xlu0 %v302, 7
      %v1306 = vpop.permute.xlu0 %1305
      %1307 = vrot.lane.b32.xlu0 %v313, 7
      %v1308 = vpop.permute.xlu0 %1307
      %1309 = vrot.lane.b32.xlu0 %v309, 7
      %v1310 = vpop.permute.xlu0 %1309
      %vm1311 = vcmask 56320
      %v1312 = vsel %vm1311, %v1306, %v1308
      %v1313 = vsel %vm1311, %v1308, %v1310
      %v1314 = vsel %vm1311, %v1310, %v1304
      %vm1318 = vcmask 56320
      %v1321 = vsel %vm1318, %v1304, %v1306
      %s1323 = scalar_lea.vmem %s0, 35
      %v1324 = vld [vmem:[%s1323] ss:$8 sm:$0xf]
      %v1326 = vlaneseq
      %v1327 = vshrl.u32 %v1326, 7
      %v1328 = vsub.s32 0, %v1327
      %v1329 = vrot.slane %v1324, %v1328
      %v1330 = vlaneseq
      %v1331 = vshrl.u32 %v1330, 7
      %v1332 = vsub.s32 1, %v1331
      %v1333 = vrot.slane %v1324, %v1332
      %v1334 = vlaneseq
      %v1335 = vshrl.u32 %v1334, 7
      %v1336 = vsub.s32 2, %v1335
      %v1337 = vrot.slane %v1324, %v1336
      %v1338 = vlaneseq
      %v1339 = vshrl.u32 %v1338, 7
      %v1340 = vsub.s32 3, %v1339
      %v1341 = vrot.slane %v1324, %v1340
      %v1346 = vpack.c.bf16 %v1329, %v1329
      %v1347 = vpack.c.bf16 %v1333, %v1333
      %v1348 = vpack.c.bf16 %v1337, %v1337
      %v1349 = vpack.c.bf16 %v1341, %v1341
      %v1351 = vpack.i.b16 %v1346, %v1346
      %v1353 = vlaneseq
      %v1354 = vshrl.u32 %v1353, 7
      %v1355 = vsub.s32 0, %v1354
      %v1356 = vrot.slane %v1351, %v1355
      %v1358 = vpack.i.b16 %v1347, %v1347
      %v1360 = vlaneseq
      %v1361 = vshrl.u32 %v1360, 7
      %v1362 = vsub.s32 0, %v1361
      %v1363 = vrot.slane %v1358, %v1362
      %v1365 = vpack.i.b16 %v1348, %v1348
      %v1367 = vlaneseq
      %v1368 = vshrl.u32 %v1367, 7
      %v1369 = vsub.s32 0, %v1368
      %v1370 = vrot.slane %v1365, %v1369
      %v1372 = vpack.i.b16 %v1349, %v1349
      %v1374 = vlaneseq
      %v1375 = vshrl.u32 %v1374, 7
      %v1376 = vsub.s32 0, %v1375
      %v1377 = vrot.slane %v1372, %v1376
      %v1378 = vmul.bf16 %v1321, %v1356
      %v1379 = vmul.bf16 %v1312, %v1363
      %v1380 = vmul.bf16 %v1313, %v1370
      %v1381 = vmul.bf16 %v1314, %v1377
      %v1386 = vrot.slane %v1220, 6
      %v1387 = vrot.slane %v1221, 6
      %v1388 = vrot.slane %v1222, 6
      %v1389 = vrot.slane %v1223, 6
      %v1394 = vrot.slane %v1299, 4
      %v1395 = vrot.slane %v1300, 4
      %v1396 = vrot.slane %v1301, 4
      %v1397 = vrot.slane %v1302, 4
      %v1402 = vrot.slane %v1378, 2
      %v1403 = vrot.slane %v1379, 2
      %v1404 = vrot.slane %v1380, 2
      %v1405 = vrot.slane %v1381, 2
      %v1408 = vsel %vm651, %v1141, %v1386
      %v1411 = vsel %vm651, %v1142, %v1387
      %v1414 = vsel %vm651, %v1143, %v1388
      %v1417 = vsel %vm651, %v1144, %v1389
      %v1419 = vsel %vm664, %v1408, %v1394
      %v1421 = vsel %vm664, %v1411, %v1395
      %v1423 = vsel %vm664, %v1414, %v1396
      %v1425 = vsel %vm664, %v1417, %v1397
      %v1427 = vsel %vm673, %v1419, %v1402
      %v1430 = vsel %vm673, %v1421, %v1403
      %v1433 = vsel %vm673, %v1423, %v1404
      %v1436 = vsel %vm673, %v1425, %v1405
      %1438 = vst [vmem:[#allocation2 + $0x40] sm:$0xff] %v1427
      %1439 = vst [vmem:[#allocation2 + $0x48] sm:$0xff] %v1430
      %1440 = vst [vmem:[#allocation2 + $0x50] sm:$0xff] %v1433
      %1441 = vst [vmem:[#allocation2 + $0x58] sm:$0xff] %v1436
      %1442 = vrot.lane.b32.xlu0 %v310, 1
      %v1443 = vpop.permute.xlu0 %1442
      %1444 = vrot.lane.b32.xlu0 %v302, 1
      %v1445 = vpop.permute.xlu0 %1444
      %1446 = vrot.lane.b32.xlu0 %v313, 1
      %v1447 = vpop.permute.xlu0 %1446
      %1448 = vrot.lane.b32.xlu0 %v309, 1
      %v1449 = vpop.permute.xlu0 %1448
      %vm1450 = vcmask 7168
      %v1451 = vsel %vm1450, %v1445, %v1447
      %v1452 = vsel %vm1450, %v1447, %v1449
      %v1453 = vsel %vm1450, %v1449, %v1443
      %vm1457 = vcmask 7168
      %v1460 = vsel %vm1457, %v1443, %v1445
      %s1462 = scalar_lea.vmem %s0, 36
      %v1463 = vld [vmem:[%s1462] ss:$8 sm:$0xf]
      %v1465 = vlaneseq
      %v1466 = vshrl.u32 %v1465, 7
      %v1467 = vsub.s32 0, %v1466
      %v1468 = vrot.slane %v1463, %v1467
      %v1469 = vlaneseq
      %v1470 = vshrl.u32 %v1469, 7
      %v1471 = vsub.s32 1, %v1470
      %v1472 = vrot.slane %v1463, %v1471
      %v1473 = vlaneseq
      %v1474 = vshrl.u32 %v1473, 7
      %v1475 = vsub.s32 2, %v1474
      %v1476 = vrot.slane %v1463, %v1475
      %v1477 = vlaneseq
      %v1478 = vshrl.u32 %v1477, 7
      %v1479 = vsub.s32 3, %v1478
      %v1480 = vrot.slane %v1463, %v1479
      %v1485 = vpack.c.bf16 %v1468, %v1468
      %v1486 = vpack.c.bf16 %v1472, %v1472
      %v1487 = vpack.c.bf16 %v1476, %v1476
      %v1488 = vpack.c.bf16 %v1480, %v1480
      %v1490 = vpack.i.b16 %v1485, %v1485
      %v1492 = vlaneseq
      %v1493 = vshrl.u32 %v1492, 7
      %v1494 = vsub.s32 0, %v1493
      %v1495 = vrot.slane %v1490, %v1494
      %v1497 = vpack.i.b16 %v1486, %v1486
      %v1499 = vlaneseq
      %v1500 = vshrl.u32 %v1499, 7
      %v1501 = vsub.s32 0, %v1500
      %v1502 = vrot.slane %v1497, %v1501
      %v1504 = vpack.i.b16 %v1487, %v1487
      %v1506 = vlaneseq
      %v1507 = vshrl.u32 %v1506, 7
      %v1508 = vsub.s32 0, %v1507
      %v1509 = vrot.slane %v1504, %v1508
      %v1511 = vpack.i.b16 %v1488, %v1488
      %v1513 = vlaneseq
      %v1514 = vshrl.u32 %v1513, 7
      %v1515 = vsub.s32 0, %v1514
      %v1516 = vrot.slane %v1511, %v1515
      %v1517 = vmul.bf16 %v1460, %v1495
      %v1518 = vmul.bf16 %v1451, %v1502
      %v1519 = vmul.bf16 %v1452, %v1509
      %v1520 = vmul.bf16 %v1453, %v1516
      %1521 = vrot.lane.b32.xlu0 %v302, 127
      %v1522 = vpop.permute.xlu0 %1521
      %1523 = vrot.lane.b32.xlu0 %v313, 127
      %v1524 = vpop.permute.xlu0 %1523
      %1525 = vrot.lane.b32.xlu0 %v309, 127
      %v1526 = vpop.permute.xlu0 %1525
      %1527 = vrot.lane.b32.xlu0 %v310, 127
      %v1528 = vpop.permute.xlu0 %1527
      %vm1529 = vcmask 1039360
      %v1530 = vsel %vm1529, %v1522, %v1524
      %v1531 = vsel %vm1529, %v1524, %v1526
      %v1532 = vsel %vm1529, %v1526, %v1528
      %vm1536 = vcmask 1039360
      %v1539 = vsel %vm1536, %v1528, %v1522
      %s1541 = scalar_lea.vmem %s0, 38
      %v1542 = vld [vmem:[%s1541] ss:$8 sm:$0xf]
      %v1544 = vlaneseq
      %v1545 = vshrl.u32 %v1544, 7
      %v1546 = vsub.s32 0, %v1545
      %v1547 = vrot.slane %v1542, %v1546
      %v1548 = vlaneseq
      %v1549 = vshrl.u32 %v1548, 7
      %v1550 = vsub.s32 1, %v1549
      %v1551 = vrot.slane %v1542, %v1550
      %v1552 = vlaneseq
      %v1553 = vshrl.u32 %v1552, 7
      %v1554 = vsub.s32 2, %v1553
      %v1555 = vrot.slane %v1542, %v1554
      %v1556 = vlaneseq
      %v1557 = vshrl.u32 %v1556, 7
      %v1558 = vsub.s32 3, %v1557
      %v1559 = vrot.slane %v1542, %v1558
      %v1564 = vpack.c.bf16 %v1547, %v1547
      %v1565 = vpack.c.bf16 %v1551, %v1551
      %v1566 = vpack.c.bf16 %v1555, %v1555
      %v1567 = vpack.c.bf16 %v1559, %v1559
      %v1569 = vpack.i.b16 %v1564, %v1564
      %v1571 = vlaneseq
      %v1572 = vshrl.u32 %v1571, 7
      %v1573 = vsub.s32 0, %v1572
      %v1574 = vrot.slane %v1569, %v1573
      %v1576 = vpack.i.b16 %v1565, %v1565
      %v1578 = vlaneseq
      %v1579 = vshrl.u32 %v1578, 7
      %v1580 = vsub.s32 0, %v1579
      %v1581 = vrot.slane %v1576, %v1580
      %v1583 = vpack.i.b16 %v1566, %v1566
      %v1585 = vlaneseq
      %v1586 = vshrl.u32 %v1585, 7
      %v1587 = vsub.s32 0, %v1586
      %v1588 = vrot.slane %v1583, %v1587
      %v1590 = vpack.i.b16 %v1567, %v1567
      %v1592 = vlaneseq
      %v1593 = vshrl.u32 %v1592, 7
      %v1594 = vsub.s32 0, %v1593
      %v1595 = vrot.slane %v1590, %v1594
      %v1596 = vmul.bf16 %v1530, %v1574
      %v1597 = vmul.bf16 %v1531, %v1581
      %v1598 = vmul.bf16 %v1532, %v1588
      %v1599 = vmul.bf16 %v1539, %v1595
      %1600 = vrot.lane.b32.xlu0 %v302, 121
      %v1601 = vpop.permute.xlu0 %1600
      %1602 = vrot.lane.b32.xlu0 %v313, 121
      %v1603 = vpop.permute.xlu0 %1602
      %1604 = vrot.lane.b32.xlu0 %v309, 121
      %v1605 = vpop.permute.xlu0 %1604
      %1606 = vrot.lane.b32.xlu0 %v310, 121
      %v1607 = vpop.permute.xlu0 %1606
      %vm1608 = vcmask 990208
      %v1609 = vsel %vm1608, %v1601, %v1603
      %v1610 = vsel %vm1608, %v1603, %v1605
      %v1611 = vsel %vm1608, %v1605, %v1607
      %vm1615 = vcmask 990208
      %v1618 = vsel %vm1615, %v1607, %v1601
      %s1620 = scalar_lea.vmem %s0, 39
      %v1621 = vld [vmem:[%s1620] ss:$8 sm:$0xf]
      %v1623 = vlaneseq
      %v1624 = vshrl.u32 %v1623, 7
      %v1625 = vsub.s32 0, %v1624
      %v1626 = vrot.slane %v1621, %v1625
      %v1627 = vlaneseq
      %v1628 = vshrl.u32 %v1627, 7
      %v1629 = vsub.s32 1, %v1628
      %v1630 = vrot.slane %v1621, %v1629
      %v1631 = vlaneseq
      %v1632 = vshrl.u32 %v1631, 7
      %v1633 = vsub.s32 2, %v1632
      %v1634 = vrot.slane %v1621, %v1633
      %v1635 = vlaneseq
      %v1636 = vshrl.u32 %v1635, 7
      %v1637 = vsub.s32 3, %v1636
      %v1638 = vrot.slane %v1621, %v1637
      %v1643 = vpack.c.bf16 %v1626, %v1626
      %v1644 = vpack.c.bf16 %v1630, %v1630
      %v1645 = vpack.c.bf16 %v1634, %v1634
      %v1646 = vpack.c.bf16 %v1638, %v1638
      %v1648 = vpack.i.b16 %v1643, %v1643
      %v1650 = vlaneseq
      %v1651 = vshrl.u32 %v1650, 7
      %v1652 = vsub.s32 0, %v1651
      %v1653 = vrot.slane %v1648, %v1652
      %v1655 = vpack.i.b16 %v1644, %v1644
      %v1657 = vlaneseq
      %v1658 = vshrl.u32 %v1657, 7
      %v1659 = vsub.s32 0, %v1658
      %v1660 = vrot.slane %v1655, %v1659
      %v1662 = vpack.i.b16 %v1645, %v1645
      %v1664 = vlaneseq
      %v1665 = vshrl.u32 %v1664, 7
      %v1666 = vsub.s32 0, %v1665
      %v1667 = vrot.slane %v1662, %v1666
      %v1669 = vpack.i.b16 %v1646, %v1646
      %v1671 = vlaneseq
      %v1672 = vshrl.u32 %v1671, 7
      %v1673 = vsub.s32 0, %v1672
      %v1674 = vrot.slane %v1669, %v1673
      %v1675 = vmul.bf16 %v1609, %v1653
      %v1676 = vmul.bf16 %v1610, %v1660
      %v1677 = vmul.bf16 %v1611, %v1667
      %v1678 = vmul.bf16 %v1618, %v1674
      %v1679 = vcombine.low %v293, %v293
      %v1681 = vunpack.c.l.s4 1983009808
      %v1682 = vunpack.c.0.s8 %v1681
      %v1683 = vlaneseq
      %v1684 = vshrl.u32 %v1683, 7
      %v1685 = vsub.s32 %v1682, %v1684
      %v1686 = vrot.slane %v1679, %v1685
      %v1687 = vcombine.high %v1686, %v1686
      %v1692 = vrot.slane %v1596, 4
      %v1693 = vrot.slane %v1597, 4
      %v1694 = vrot.slane %v1598, 4
      %v1695 = vrot.slane %v1599, 4
      %v1700 = vrot.slane %v1675, 2
      %v1701 = vrot.slane %v1676, 2
      %v1702 = vrot.slane %v1677, 2
      %v1703 = vrot.slane %v1678, 2
      %v1706 = vsel %vm651, %v1517, %v1686
      %v1709 = vsel %vm651, %v1518, %v1687
      %v1712 = vsel %vm651, %v1519, %v302
      %v1715 = vsel %vm651, %v1520, %v313
      %v1717 = vsel %vm664, %v1706, %v1692
      %v1719 = vsel %vm664, %v1709, %v1693
      %v1721 = vsel %vm664, %v1712, %v1694
      %v1723 = vsel %vm664, %v1715, %v1695
      %v1725 = vsel %vm673, %v1717, %v1700
      %v1728 = vsel %vm673, %v1719, %v1701
      %v1731 = vsel %vm673, %v1721, %v1702
      %v1734 = vsel %vm673, %v1723, %v1703
      %1736 = vst [vmem:[#allocation2 + $0x60] sm:$0xff] %v1725
      %1737 = vst [vmem:[#allocation2 + $0x68] sm:$0xff] %v1728
      %1738 = vst [vmem:[#allocation2 + $0x70] sm:$0xff] %v1731
      %1739 = vst [vmem:[#allocation2 + $0x78] sm:$0xff] %v1734
      %1740 = vrot.lane.b32.xlu0 %v302, 120
      %v1741 = vpop.permute.xlu0 %1740
      %1742 = vrot.lane.b32.xlu0 %v313, 120
      %v1743 = vpop.permute.xlu0 %1742
      %1744 = vrot.lane.b32.xlu0 %v309, 120
      %v1745 = vpop.permute.xlu0 %1744
      %1746 = vrot.lane.b32.xlu0 %v310, 120
      %v1747 = vpop.permute.xlu0 %1746
      %vm1748 = vcmask 982016
      %v1749 = vsel %vm1748, %v1741, %v1743
      %v1750 = vsel %vm1748, %v1743, %v1745
      %v1751 = vsel %vm1748, %v1745, %v1747
      %vm1755 = vcmask 982016
      %v1758 = vsel %vm1755, %v1747, %v1741
      %s1760 = scalar_lea.vmem %s0, 64
      %v1761 = vld [vmem:[%s1760] ss:$8 sm:$0xf]
      %v1763 = vlaneseq
      %v1764 = vshrl.u32 %v1763, 7
      %v1765 = vsub.s32 0, %v1764
      %v1766 = vrot.slane %v1761, %v1765
      %v1767 = vlaneseq
      %v1768 = vshrl.u32 %v1767, 7
      %v1769 = vsub.s32 1, %v1768
      %v1770 = vrot.slane %v1761, %v1769
      %v1771 = vlaneseq
      %v1772 = vshrl.u32 %v1771, 7
      %v1773 = vsub.s32 2, %v1772
      %v1774 = vrot.slane %v1761, %v1773
      %v1775 = vlaneseq
      %v1776 = vshrl.u32 %v1775, 7
      %v1777 = vsub.s32 3, %v1776
      %v1778 = vrot.slane %v1761, %v1777
      %v1783 = vpack.c.bf16 %v1766, %v1766
      %v1784 = vpack.c.bf16 %v1770, %v1770
      %v1785 = vpack.c.bf16 %v1774, %v1774
      %v1786 = vpack.c.bf16 %v1778, %v1778
      %v1788 = vpack.i.b16 %v1783, %v1783
      %v1790 = vlaneseq
      %v1791 = vshrl.u32 %v1790, 7
      %v1792 = vsub.s32 0, %v1791
      %v1793 = vrot.slane %v1788, %v1792
      %v1795 = vpack.i.b16 %v1784, %v1784
      %v1797 = vlaneseq
      %v1798 = vshrl.u32 %v1797, 7
      %v1799 = vsub.s32 0, %v1798
      %v1800 = vrot.slane %v1795, %v1799
      %v1802 = vpack.i.b16 %v1785, %v1785
      %v1804 = vlaneseq
      %v1805 = vshrl.u32 %v1804, 7
      %v1806 = vsub.s32 0, %v1805
      %v1807 = vrot.slane %v1802, %v1806
      %v1809 = vpack.i.b16 %v1786, %v1786
      %v1811 = vlaneseq
      %v1812 = vshrl.u32 %v1811, 7
      %v1813 = vsub.s32 0, %v1812
      %v1814 = vrot.slane %v1809, %v1813
      %v1815 = vmul.bf16 %v1749, %v1793
      %v1816 = vmul.bf16 %v1750, %v1800
      %v1817 = vmul.bf16 %v1751, %v1807
      %v1818 = vmul.bf16 %v1758, %v1814
      %1819 = vrot.lane.b32.xlu0 %v302, 119
      %v1820 = vpop.permute.xlu0 %1819
      %1821 = vrot.lane.b32.xlu0 %v313, 119
      %v1822 = vpop.permute.xlu0 %1821
      %1823 = vrot.lane.b32.xlu0 %v309, 119
      %v1824 = vpop.permute.xlu0 %1823
      %1825 = vrot.lane.b32.xlu0 %v310, 119
      %v1826 = vpop.permute.xlu0 %1825
      %vm1827 = vcmask 973824
      %v1828 = vsel %vm1827, %v1820, %v1822
      %v1829 = vsel %vm1827, %v1822, %v1824
      %v1830 = vsel %vm1827, %v1824, %v1826
      %vm1834 = vcmask 973824
      %v1837 = vsel %vm1834, %v1826, %v1820
      %s1839 = scalar_lea.vmem %s0, 65
      %v1840 = vld [vmem:[%s1839] ss:$8 sm:$0xf]
      %v1842 = vlaneseq
      %v1843 = vshrl.u32 %v1842, 7
      %v1844 = vsub.s32 0, %v1843
      %v1845 = vrot.slane %v1840, %v1844
      %v1846 = vlaneseq
      %v1847 = vshrl.u32 %v1846, 7
      %v1848 = vsub.s32 1, %v1847
      %v1849 = vrot.slane %v1840, %v1848
      %v1850 = vlaneseq
      %v1851 = vshrl.u32 %v1850, 7
      %v1852 = vsub.s32 2, %v1851
      %v1853 = vrot.slane %v1840, %v1852
      %v1854 = vlaneseq
      %v1855 = vshrl.u32 %v1854, 7
      %v1856 = vsub.s32 3, %v1855
      %v1857 = vrot.slane %v1840, %v1856
      %v1862 = vpack.c.bf16 %v1845, %v1845
      %v1863 = vpack.c.bf16 %v1849, %v1849
      %v1864 = vpack.c.bf16 %v1853, %v1853
      %v1865 = vpack.c.bf16 %v1857, %v1857
      %v1867 = vpack.i.b16 %v1862, %v1862
      %v1869 = vlaneseq
      %v1870 = vshrl.u32 %v1869, 7
      %v1871 = vsub.s32 0, %v1870
      %v1872 = vrot.slane %v1867, %v1871
      %v1874 = vpack.i.b16 %v1863, %v1863
      %v1876 = vlaneseq
      %v1877 = vshrl.u32 %v1876, 7
      %v1878 = vsub.s32 0, %v1877
      %v1879 = vrot.slane %v1874, %v1878
      %v1881 = vpack.i.b16 %v1864, %v1864
      %v1883 = vlaneseq
      %v1884 = vshrl.u32 %v1883, 7
      %v1885 = vsub.s32 0, %v1884
      %v1886 = vrot.slane %v1881, %v1885
      %v1888 = vpack.i.b16 %v1865, %v1865
      %v1890 = vlaneseq
      %v1891 = vshrl.u32 %v1890, 7
      %v1892 = vsub.s32 0, %v1891
      %v1893 = vrot.slane %v1888, %v1892
      %v1894 = vmul.bf16 %v1828, %v1872
      %v1895 = vmul.bf16 %v1829, %v1879
      %v1896 = vmul.bf16 %v1830, %v1886
      %v1897 = vmul.bf16 %v1837, %v1893
      %s1898 = scalar_lea.vmem %s0, 66
      %v1899 = vld [vmem:[%s1898] ss:$8 sm:$0xf]
      %v1901 = vlaneseq
      %v1902 = vshrl.u32 %v1901, 7
      %v1903 = vsub.s32 0, %v1902
      %v1904 = vrot.slane %v1899, %v1903
      %v1905 = vlaneseq
      %v1906 = vshrl.u32 %v1905, 7
      %v1907 = vsub.s32 1, %v1906
      %v1908 = vrot.slane %v1899, %v1907
      %v1909 = vlaneseq
      %v1910 = vshrl.u32 %v1909, 7
      %v1911 = vsub.s32 2, %v1910
      %v1912 = vrot.slane %v1899, %v1911
      %v1913 = vlaneseq
      %v1914 = vshrl.u32 %v1913, 7
      %v1915 = vsub.s32 3, %v1914
      %v1916 = vrot.slane %v1899, %v1915
      %v1921 = vpack.c.bf16 %v1904, %v1904
      %v1922 = vpack.c.bf16 %v1908, %v1908
      %v1923 = vpack.c.bf16 %v1912, %v1912
      %v1924 = vpack.c.bf16 %v1916, %v1916
      %v1926 = vpack.i.b16 %v1921, %v1921
      %v1928 = vlaneseq
      %v1929 = vshrl.u32 %v1928, 7
      %v1930 = vsub.s32 0, %v1929
      %v1931 = vrot.slane %v1926, %v1930
      %v1933 = vpack.i.b16 %v1922, %v1922
      %v1935 = vlaneseq
      %v1936 = vshrl.u32 %v1935, 7
      %v1937 = vsub.s32 0, %v1936
      %v1938 = vrot.slane %v1933, %v1937
      %v1940 = vpack.i.b16 %v1923, %v1923
      %v1942 = vlaneseq
      %v1943 = vshrl.u32 %v1942, 7
      %v1944 = vsub.s32 0, %v1943
      %v1945 = vrot.slane %v1940, %v1944
      %v1947 = vpack.i.b16 %v1924, %v1924
      %v1949 = vlaneseq
      %v1950 = vshrl.u32 %v1949, 7
      %v1951 = vsub.s32 0, %v1950
      %v1952 = vrot.slane %v1947, %v1951
      %v1953 = vmul.bf16 %v321, %v1931
      %v1954 = vmul.bf16 %v322, %v1938
      %v1955 = vmul.bf16 %v323, %v1945
      %v1956 = vmul.bf16 %v330, %v1952
      %s1957 = scalar_lea.vmem %s0, 67
      %v1958 = vld [vmem:[%s1957] ss:$8 sm:$0xf]
      %v1960 = vlaneseq
      %v1961 = vshrl.u32 %v1960, 7
      %v1962 = vsub.s32 0, %v1961
      %v1963 = vrot.slane %v1958, %v1962
      %v1964 = vlaneseq
      %v1965 = vshrl.u32 %v1964, 7
      %v1966 = vsub.s32 1, %v1965
      %v1967 = vrot.slane %v1958, %v1966
      %v1968 = vlaneseq
      %v1969 = vshrl.u32 %v1968, 7
      %v1970 = vsub.s32 2, %v1969
      %v1971 = vrot.slane %v1958, %v1970
      %v1972 = vlaneseq
      %v1973 = vshrl.u32 %v1972, 7
      %v1974 = vsub.s32 3, %v1973
      %v1975 = vrot.slane %v1958, %v1974
      %v1980 = vpack.c.bf16 %v1963, %v1963
      %v1981 = vpack.c.bf16 %v1967, %v1967
      %v1982 = vpack.c.bf16 %v1971, %v1971
      %v1983 = vpack.c.bf16 %v1975, %v1975
      %v1985 = vpack.i.b16 %v1980, %v1980
      %v1987 = vlaneseq
      %v1988 = vshrl.u32 %v1987, 7
      %v1989 = vsub.s32 0, %v1988
      %v1990 = vrot.slane %v1985, %v1989
      %v1992 = vpack.i.b16 %v1981, %v1981
      %v1994 = vlaneseq
      %v1995 = vshrl.u32 %v1994, 7
      %v1996 = vsub.s32 0, %v1995
      %v1997 = vrot.slane %v1992, %v1996
      %v1999 = vpack.i.b16 %v1982, %v1982
      %v2001 = vlaneseq
      %v2002 = vshrl.u32 %v2001, 7
      %v2003 = vsub.s32 0, %v2002
      %v2004 = vrot.slane %v1999, %v2003
      %v2006 = vpack.i.b16 %v1983, %v1983
      %v2008 = vlaneseq
      %v2009 = vshrl.u32 %v2008, 7
      %v2010 = vsub.s32 0, %v2009
      %v2011 = vrot.slane %v2006, %v2010
      %v2012 = vmul.bf16 %v399, %v1990
      %v2013 = vmul.bf16 %v400, %v1997
      %v2014 = vmul.bf16 %v401, %v2004
      %v2015 = vmul.bf16 %v408, %v2011
      %v2020 = vrot.slane %v1894, 6
      %v2021 = vrot.slane %v1895, 6
      %v2022 = vrot.slane %v1896, 6
      %v2023 = vrot.slane %v1897, 6
      %v2028 = vrot.slane %v1953, 4
      %v2029 = vrot.slane %v1954, 4
      %v2030 = vrot.slane %v1955, 4
      %v2031 = vrot.slane %v1956, 4
      %v2036 = vrot.slane %v2012, 2
      %v2037 = vrot.slane %v2013, 2
      %v2038 = vrot.slane %v2014, 2
      %v2039 = vrot.slane %v2015, 2
      %v2042 = vsel %vm651, %v1815, %v2020
      %v2045 = vsel %vm651, %v1816, %v2021
      %v2048 = vsel %vm651, %v1817, %v2022
      %v2051 = vsel %vm651, %v1818, %v2023
      %v2053 = vsel %vm664, %v2042, %v2028
      %v2055 = vsel %vm664, %v2045, %v2029
      %v2057 = vsel %vm664, %v2048, %v2030
      %v2059 = vsel %vm664, %v2051, %v2031
      %v2061 = vsel %vm673, %v2053, %v2036
      %v2064 = vsel %vm673, %v2055, %v2037
      %v2067 = vsel %vm673, %v2057, %v2038
      %v2070 = vsel %vm673, %v2059, %v2039
      %2072 = vst [vmem:[#allocation2 + $0x80] sm:$0xff] %v2061
      %2073 = vst [vmem:[#allocation2 + $0x88] sm:$0xff] %v2064
      %2074 = vst [vmem:[#allocation2 + $0x90] sm:$0xff] %v2067
      %2075 = vst [vmem:[#allocation2 + $0x98] sm:$0xff] %v2070
      %s2076 = scalar_lea.vmem %s0, 68
      %v2077 = vld [vmem:[%s2076] ss:$8 sm:$0xf]
      %v2079 = vlaneseq
      %v2080 = vshrl.u32 %v2079, 7
      %v2081 = vsub.s32 0, %v2080
      %v2082 = vrot.slane %v2077, %v2081
      %v2083 = vlaneseq
      %v2084 = vshrl.u32 %v2083, 7
      %v2085 = vsub.s32 1, %v2084
      %v2086 = vrot.slane %v2077, %v2085
      %v2087 = vlaneseq
      %v2088 = vshrl.u32 %v2087, 7
      %v2089 = vsub.s32 2, %v2088
      %v2090 = vrot.slane %v2077, %v2089
      %v2091 = vlaneseq
      %v2092 = vshrl.u32 %v2091, 7
      %v2093 = vsub.s32 3, %v2092
      %v2094 = vrot.slane %v2077, %v2093
      %v2099 = vpack.c.bf16 %v2082, %v2082
      %v2100 = vpack.c.bf16 %v2086, %v2086
      %v2101 = vpack.c.bf16 %v2090, %v2090
      %v2102 = vpack.c.bf16 %v2094, %v2094
      %v2104 = vpack.i.b16 %v2099, %v2099
      %v2106 = vlaneseq
      %v2107 = vshrl.u32 %v2106, 7
      %v2108 = vsub.s32 0, %v2107
      %v2109 = vrot.slane %v2104, %v2108
      %v2111 = vpack.i.b16 %v2100, %v2100
      %v2113 = vlaneseq
      %v2114 = vshrl.u32 %v2113, 7
      %v2115 = vsub.s32 0, %v2114
      %v2116 = vrot.slane %v2111, %v2115
      %v2118 = vpack.i.b16 %v2101, %v2101
      %v2120 = vlaneseq
      %v2121 = vshrl.u32 %v2120, 7
      %v2122 = vsub.s32 0, %v2121
      %v2123 = vrot.slane %v2118, %v2122
      %v2125 = vpack.i.b16 %v2102, %v2102
      %v2127 = vlaneseq
      %v2128 = vshrl.u32 %v2127, 7
      %v2129 = vsub.s32 0, %v2128
      %v2130 = vrot.slane %v2125, %v2129
      %v2131 = vmul.bf16 %v478, %v2109
      %v2132 = vmul.bf16 %v479, %v2116
      %v2133 = vmul.bf16 %v480, %v2123
      %v2134 = vmul.bf16 %v487, %v2130
      %s2135 = scalar_lea.vmem %s0, 69
      %v2136 = vld [vmem:[%s2135] ss:$8 sm:$0xf]
      %v2138 = vlaneseq
      %v2139 = vshrl.u32 %v2138, 7
      %v2140 = vsub.s32 0, %v2139
      %v2141 = vrot.slane %v2136, %v2140
      %v2142 = vlaneseq
      %v2143 = vshrl.u32 %v2142, 7
      %v2144 = vsub.s32 1, %v2143
      %v2145 = vrot.slane %v2136, %v2144
      %v2146 = vlaneseq
      %v2147 = vshrl.u32 %v2146, 7
      %v2148 = vsub.s32 2, %v2147
      %v2149 = vrot.slane %v2136, %v2148
      %v2150 = vlaneseq
      %v2151 = vshrl.u32 %v2150, 7
      %v2152 = vsub.s32 3, %v2151
      %v2153 = vrot.slane %v2136, %v2152
      %v2158 = vpack.c.bf16 %v2141, %v2141
      %v2159 = vpack.c.bf16 %v2145, %v2145
      %v2160 = vpack.c.bf16 %v2149, %v2149
      %v2161 = vpack.c.bf16 %v2153, %v2153
      %v2163 = vpack.i.b16 %v2158, %v2158
      %v2165 = vlaneseq
      %v2166 = vshrl.u32 %v2165, 7
      %v2167 = vsub.s32 0, %v2166
      %v2168 = vrot.slane %v2163, %v2167
      %v2170 = vpack.i.b16 %v2159, %v2159
      %v2172 = vlaneseq
      %v2173 = vshrl.u32 %v2172, 7
      %v2174 = vsub.s32 0, %v2173
      %v2175 = vrot.slane %v2170, %v2174
      %v2177 = vpack.i.b16 %v2160, %v2160
      %v2179 = vlaneseq
      %v2180 = vshrl.u32 %v2179, 7
      %v2181 = vsub.s32 0, %v2180
      %v2182 = vrot.slane %v2177, %v2181
      %v2184 = vpack.i.b16 %v2161, %v2161
      %v2186 = vlaneseq
      %v2187 = vshrl.u32 %v2186, 7
      %v2188 = vsub.s32 0, %v2187
      %v2189 = vrot.slane %v2184, %v2188
      %v2190 = vmul.bf16 %v557, %v2168
      %v2191 = vmul.bf16 %v558, %v2175
      %v2192 = vmul.bf16 %v559, %v2182
      %v2193 = vmul.bf16 %v566, %v2189
      %s2194 = scalar_lea.vmem %s0, 70
      %v2195 = vld [vmem:[%s2194] ss:$8 sm:$0xf]
      %v2197 = vlaneseq
      %v2198 = vshrl.u32 %v2197, 7
      %v2199 = vsub.s32 0, %v2198
      %v2200 = vrot.slane %v2195, %v2199
      %v2201 = vlaneseq
      %v2202 = vshrl.u32 %v2201, 7
      %v2203 = vsub.s32 1, %v2202
      %v2204 = vrot.slane %v2195, %v2203
      %v2205 = vlaneseq
      %v2206 = vshrl.u32 %v2205, 7
      %v2207 = vsub.s32 2, %v2206
      %v2208 = vrot.slane %v2195, %v2207
      %v2209 = vlaneseq
      %v2210 = vshrl.u32 %v2209, 7
      %v2211 = vsub.s32 3, %v2210
      %v2212 = vrot.slane %v2195, %v2211
      %v2217 = vpack.c.bf16 %v2200, %v2200
      %v2218 = vpack.c.bf16 %v2204, %v2204
      %v2219 = vpack.c.bf16 %v2208, %v2208
      %v2220 = vpack.c.bf16 %v2212, %v2212
      %v2222 = vpack.i.b16 %v2217, %v2217
      %v2224 = vlaneseq
      %v2225 = vshrl.u32 %v2224, 7
      %v2226 = vsub.s32 0, %v2225
      %v2227 = vrot.slane %v2222, %v2226
      %v2229 = vpack.i.b16 %v2218, %v2218
      %v2231 = vlaneseq
      %v2232 = vshrl.u32 %v2231, 7
      %v2233 = vsub.s32 0, %v2232
      %v2234 = vrot.slane %v2229, %v2233
      %v2236 = vpack.i.b16 %v2219, %v2219
      %v2238 = vlaneseq
      %v2239 = vshrl.u32 %v2238, 7
      %v2240 = vsub.s32 0, %v2239
      %v2241 = vrot.slane %v2236, %v2240
      %v2243 = vpack.i.b16 %v2220, %v2220
      %v2245 = vlaneseq
      %v2246 = vshrl.u32 %v2245, 7
      %v2247 = vsub.s32 0, %v2246
      %v2248 = vrot.slane %v2243, %v2247
      %v2249 = vmul.bf16 %v699, %v2227
      %v2250 = vmul.bf16 %v700, %v2234
      %v2251 = vmul.bf16 %v701, %v2241
      %v2252 = vmul.bf16 %v708, %v2248
      %s2253 = scalar_lea.vmem %s0, 71
      %v2254 = vld [vmem:[%s2253] ss:$8 sm:$0xf]
      %v2256 = vlaneseq
      %v2257 = vshrl.u32 %v2256, 7
      %v2258 = vsub.s32 0, %v2257
      %v2259 = vrot.slane %v2254, %v2258
      %v2260 = vlaneseq
      %v2261 = vshrl.u32 %v2260, 7
      %v2262 = vsub.s32 1, %v2261
      %v2263 = vrot.slane %v2254, %v2262
      %v2264 = vlaneseq
      %v2265 = vshrl.u32 %v2264, 7
      %v2266 = vsub.s32 2, %v2265
      %v2267 = vrot.slane %v2254, %v2266
      %v2268 = vlaneseq
      %v2269 = vshrl.u32 %v2268, 7
      %v2270 = vsub.s32 3, %v2269
      %v2271 = vrot.slane %v2254, %v2270
      %v2276 = vpack.c.bf16 %v2259, %v2259
      %v2277 = vpack.c.bf16 %v2263, %v2263
      %v2278 = vpack.c.bf16 %v2267, %v2267
      %v2279 = vpack.c.bf16 %v2271, %v2271
      %v2281 = vpack.i.b16 %v2276, %v2276
      %v2283 = vlaneseq
      %v2284 = vshrl.u32 %v2283, 7
      %v2285 = vsub.s32 0, %v2284
      %v2286 = vrot.slane %v2281, %v2285
      %v2288 = vpack.i.b16 %v2277, %v2277
      %v2290 = vlaneseq
      %v2291 = vshrl.u32 %v2290, 7
      %v2292 = vsub.s32 0, %v2291
      %v2293 = vrot.slane %v2288, %v2292
      %v2295 = vpack.i.b16 %v2278, %v2278
      %v2297 = vlaneseq
      %v2298 = vshrl.u32 %v2297, 7
      %v2299 = vsub.s32 0, %v2298
      %v2300 = vrot.slane %v2295, %v2299
      %v2302 = vpack.i.b16 %v2279, %v2279
      %v2304 = vlaneseq
      %v2305 = vshrl.u32 %v2304, 7
      %v2306 = vsub.s32 0, %v2305
      %v2307 = vrot.slane %v2302, %v2306
      %v2308 = vmul.bf16 %v778, %v2286
      %v2309 = vmul.bf16 %v779, %v2293
      %v2310 = vmul.bf16 %v780, %v2300
      %v2311 = vmul.bf16 %v787, %v2307
      %v2316 = vrot.slane %v2190, 6
      %v2317 = vrot.slane %v2191, 6
      %v2318 = vrot.slane %v2192, 6
      %v2319 = vrot.slane %v2193, 6
      %v2324 = vrot.slane %v2249, 4
      %v2325 = vrot.slane %v2250, 4
      %v2326 = vrot.slane %v2251, 4
      %v2327 = vrot.slane %v2252, 4
      %v2332 = vrot.slane %v2308, 2
      %v2333 = vrot.slane %v2309, 2
      %v2334 = vrot.slane %v2310, 2
      %v2335 = vrot.slane %v2311, 2
      %v2338 = vsel %vm651, %v2131, %v2316
      %v2341 = vsel %vm651, %v2132, %v2317
      %v2344 = vsel %vm651, %v2133, %v2318
      %v2347 = vsel %vm651, %v2134, %v2319
      %v2349 = vsel %vm664, %v2338, %v2324
      %v2351 = vsel %vm664, %v2341, %v2325
      %v2353 = vsel %vm664, %v2344, %v2326
      %v2355 = vsel %vm664, %v2347, %v2327
      %v2357 = vsel %vm673, %v2349, %v2332
      %v2360 = vsel %vm673, %v2351, %v2333
      %v2363 = vsel %vm673, %v2353, %v2334
      %v2366 = vsel %vm673, %v2355, %v2335
      %2368 = vst [vmem:[#allocation2 + $0xa0] sm:$0xff] %v2357
      %2369 = vst [vmem:[#allocation2 + $0xa8] sm:$0xff] %v2360
      %2370 = vst [vmem:[#allocation2 + $0xb0] sm:$0xff] %v2363
      %2371 = vst [vmem:[#allocation2 + $0xb8] sm:$0xff] %v2366
      %s2372 = scalar_lea.vmem %s0, 96
      %v2373 = vld [vmem:[%s2372] ss:$8 sm:$0xf]
      %v2375 = vlaneseq
      %v2376 = vshrl.u32 %v2375, 7
      %v2377 = vsub.s32 0, %v2376
      %v2378 = vrot.slane %v2373, %v2377
      %v2379 = vlaneseq
      %v2380 = vshrl.u32 %v2379, 7
      %v2381 = vsub.s32 1, %v2380
      %v2382 = vrot.slane %v2373, %v2381
      %v2383 = vlaneseq
      %v2384 = vshrl.u32 %v2383, 7
      %v2385 = vsub.s32 2, %v2384
      %v2386 = vrot.slane %v2373, %v2385
      %v2387 = vlaneseq
      %v2388 = vshrl.u32 %v2387, 7
      %v2389 = vsub.s32 3, %v2388
      %v2390 = vrot.slane %v2373, %v2389
      %v2395 = vpack.c.bf16 %v2378, %v2378
      %v2396 = vpack.c.bf16 %v2382, %v2382
      %v2397 = vpack.c.bf16 %v2386, %v2386
      %v2398 = vpack.c.bf16 %v2390, %v2390
      %v2400 = vpack.i.b16 %v2395, %v2395
      %v2402 = vlaneseq
      %v2403 = vshrl.u32 %v2402, 7
      %v2404 = vsub.s32 0, %v2403
      %v2405 = vrot.slane %v2400, %v2404
      %v2407 = vpack.i.b16 %v2396, %v2396
      %v2409 = vlaneseq
      %v2410 = vshrl.u32 %v2409, 7
      %v2411 = vsub.s32 0, %v2410
      %v2412 = vrot.slane %v2407, %v2411
      %v2414 = vpack.i.b16 %v2397, %v2397
      %v2416 = vlaneseq
      %v2417 = vshrl.u32 %v2416, 7
      %v2418 = vsub.s32 0, %v2417
      %v2419 = vrot.slane %v2414, %v2418
      %v2421 = vpack.i.b16 %v2398, %v2398
      %v2423 = vlaneseq
      %v2424 = vshrl.u32 %v2423, 7
      %v2425 = vsub.s32 0, %v2424
      %v2426 = vrot.slane %v2421, %v2425
      %v2427 = vmul.bf16 %v857, %v2405
      %v2428 = vmul.bf16 %v858, %v2412
      %v2429 = vmul.bf16 %v859, %v2419
      %v2430 = vmul.bf16 %v866, %v2426
      %s2431 = scalar_lea.vmem %s0, 97
      %v2432 = vld [vmem:[%s2431] ss:$8 sm:$0xf]
      %v2434 = vlaneseq
      %v2435 = vshrl.u32 %v2434, 7
      %v2436 = vsub.s32 0, %v2435
      %v2437 = vrot.slane %v2432, %v2436
      %v2438 = vlaneseq
      %v2439 = vshrl.u32 %v2438, 7
      %v2440 = vsub.s32 1, %v2439
      %v2441 = vrot.slane %v2432, %v2440
      %v2442 = vlaneseq
      %v2443 = vshrl.u32 %v2442, 7
      %v2444 = vsub.s32 2, %v2443
      %v2445 = vrot.slane %v2432, %v2444
      %v2446 = vlaneseq
      %v2447 = vshrl.u32 %v2446, 7
      %v2448 = vsub.s32 3, %v2447
      %v2449 = vrot.slane %v2432, %v2448
      %v2454 = vpack.c.bf16 %v2437, %v2437
      %v2455 = vpack.c.bf16 %v2441, %v2441
      %v2456 = vpack.c.bf16 %v2445, %v2445
      %v2457 = vpack.c.bf16 %v2449, %v2449
      %v2459 = vpack.i.b16 %v2454, %v2454
      %v2461 = vlaneseq
      %v2462 = vshrl.u32 %v2461, 7
      %v2463 = vsub.s32 0, %v2462
      %v2464 = vrot.slane %v2459, %v2463
      %v2466 = vpack.i.b16 %v2455, %v2455
      %v2468 = vlaneseq
      %v2469 = vshrl.u32 %v2468, 7
      %v2470 = vsub.s32 0, %v2469
      %v2471 = vrot.slane %v2466, %v2470
      %v2473 = vpack.i.b16 %v2456, %v2456
      %v2475 = vlaneseq
      %v2476 = vshrl.u32 %v2475, 7
      %v2477 = vsub.s32 0, %v2476
      %v2478 = vrot.slane %v2473, %v2477
      %v2480 = vpack.i.b16 %v2457, %v2457
      %v2482 = vlaneseq
      %v2483 = vshrl.u32 %v2482, 7
      %v2484 = vsub.s32 0, %v2483
      %v2485 = vrot.slane %v2480, %v2484
      %v2486 = vmul.bf16 %v936, %v2464
      %v2487 = vmul.bf16 %v937, %v2471
      %v2488 = vmul.bf16 %v938, %v2478
      %v2489 = vmul.bf16 %v945, %v2485
      %s2490 = scalar_lea.vmem %s0, 98
      %v2491 = vld [vmem:[%s2490] ss:$8 sm:$0xf]
      %v2493 = vlaneseq
      %v2494 = vshrl.u32 %v2493, 7
      %v2495 = vsub.s32 0, %v2494
      %v2496 = vrot.slane %v2491, %v2495
      %v2497 = vlaneseq
      %v2498 = vshrl.u32 %v2497, 7
      %v2499 = vsub.s32 1, %v2498
      %v2500 = vrot.slane %v2491, %v2499
      %v2501 = vlaneseq
      %v2502 = vshrl.u32 %v2501, 7
      %v2503 = vsub.s32 2, %v2502
      %v2504 = vrot.slane %v2491, %v2503
      %v2505 = vlaneseq
      %v2506 = vshrl.u32 %v2505, 7
      %v2507 = vsub.s32 3, %v2506
      %v2508 = vrot.slane %v2491, %v2507
      %v2513 = vpack.c.bf16 %v2496, %v2496
      %v2514 = vpack.c.bf16 %v2500, %v2500
      %v2515 = vpack.c.bf16 %v2504, %v2504
      %v2516 = vpack.c.bf16 %v2508, %v2508
      %v2518 = vpack.i.b16 %v2513, %v2513
      %v2520 = vlaneseq
      %v2521 = vshrl.u32 %v2520, 7
      %v2522 = vsub.s32 0, %v2521
      %v2523 = vrot.slane %v2518, %v2522
      %v2525 = vpack.i.b16 %v2514, %v2514
      %v2527 = vlaneseq
      %v2528 = vshrl.u32 %v2527, 7
      %v2529 = vsub.s32 0, %v2528
      %v2530 = vrot.slane %v2525, %v2529
      %v2532 = vpack.i.b16 %v2515, %v2515
      %v2534 = vlaneseq
      %v2535 = vshrl.u32 %v2534, 7
      %v2536 = vsub.s32 0, %v2535
      %v2537 = vrot.slane %v2532, %v2536
      %v2539 = vpack.i.b16 %v2516, %v2516
      %v2541 = vlaneseq
      %v2542 = vshrl.u32 %v2541, 7
      %v2543 = vsub.s32 0, %v2542
      %v2544 = vrot.slane %v2539, %v2543
      %v2545 = vmul.bf16 %v1075, %v2523
      %v2546 = vmul.bf16 %v1076, %v2530
      %v2547 = vmul.bf16 %v1077, %v2537
      %v2548 = vmul.bf16 %v1084, %v2544
      %v2553 = vrot.slane %v2486, 6
      %v2554 = vrot.slane %v2487, 6
      %v2555 = vrot.slane %v2488, 6
      %v2556 = vrot.slane %v2489, 6
      %v2561 = vrot.slane %v2545, 4
      %v2562 = vrot.slane %v2546, 4
      %v2563 = vrot.slane %v2547, 4
      %v2564 = vrot.slane %v2548, 4
      %v2567 = vsel %vm651, %v2427, %v2553
      %v2570 = vsel %vm651, %v2428, %v2554
      %v2573 = vsel %vm651, %v2429, %v2555
      %v2576 = vsel %vm651, %v2430, %v2556
      %v2578 = vsel %vm664, %v2567, %v2561
      %v2580 = vsel %vm664, %v2570, %v2562
      %v2582 = vsel %vm664, %v2573, %v2563
      %v2584 = vsel %vm664, %v2576, %v2564
      %v2586 = vsel %vm673, %v2578, 0
      %v2588 = vsel %vm673, %v2580, 0
      %v2590 = vsel %vm673, %v2582, 0
      %v2592 = vsel %vm673, %v2584, 0
      %2594 = vst [vmem:[#allocation2 + $0xc0] sm:$0xff] %v2586
      %2595 = vst [vmem:[#allocation2 + $0xc8] sm:$0xff] %v2588
      %2596 = vst [vmem:[#allocation2 + $0xd0] sm:$0xff] %v2590
      %2597 = vst [vmem:[#allocation2 + $0xd8] sm:$0xff] %v2592
      %v2598 = vld [vmem:[%s2] sm:$0xf]
      %v2599 = vld [vmem:[#allocation2] sm:$0xff]
      %v2600 = vld [vmem:[#allocation2 + $0x8] sm:$0xff]
      %v2601 = vld [vmem:[#allocation2 + $0x10] sm:$0xff]
      %v2602 = vld [vmem:[#allocation2 + $0x18] sm:$0xff]
      %v2603 = vld [vmem:[#allocation2 + $0x20] sm:$0xff]
      %v2604 = vld [vmem:[#allocation2 + $0x28] sm:$0xff]
      %v2605 = vld [vmem:[#allocation2 + $0x30] sm:$0xff]
      %v2606 = vld [vmem:[#allocation2 + $0x38] sm:$0xff]
      %v2607 = vld [vmem:[#allocation2 + $0x40] sm:$0xff]
      %v2608 = vld [vmem:[#allocation2 + $0x48] sm:$0xff]
      %v2609 = vld [vmem:[#allocation2 + $0x50] sm:$0xff]
      %v2610 = vld [vmem:[#allocation2 + $0x58] sm:$0xff]
      %v2611 = vld [vmem:[#allocation2 + $0x60] sm:$0xff]
      %v2612 = vld [vmem:[#allocation2 + $0x68] sm:$0xff]
      %v2613 = vld [vmem:[#allocation2 + $0x70] sm:$0xff]
      %v2614 = vld [vmem:[#allocation2 + $0x78] sm:$0xff]
      %v2615 = vld [vmem:[#allocation2 + $0x80] sm:$0xff]
      %v2616 = vld [vmem:[#allocation2 + $0x88] sm:$0xff]
      %v2617 = vld [vmem:[#allocation2 + $0x90] sm:$0xff]
      %v2618 = vld [vmem:[#allocation2 + $0x98] sm:$0xff]
      %v2619 = vld [vmem:[#allocation2 + $0xa0] sm:$0xff]
      %v2620 = vld [vmem:[#allocation2 + $0xa8] sm:$0xff]
      %v2621 = vld [vmem:[#allocation2 + $0xb0] sm:$0xff]
      %v2622 = vld [vmem:[#allocation2 + $0xb8] sm:$0xff]
      %v2623 = vld [vmem:[#allocation2 + $0xc0] sm:$0xff]
      %v2624 = vld [vmem:[#allocation2 + $0xc8] sm:$0xff]
      %v2625 = vld [vmem:[#allocation2 + $0xd0] sm:$0xff]
      %v2626 = vld [vmem:[#allocation2 + $0xd8] sm:$0xff]
      %v2627 = vld [vmem:[%s3] sm:$0xff]
      %2629 = vset.pattern.permute.xlu0 0
      %2630 = vperm.xlu0 %2629, %v2627
      %v2631 = vpop.permute.xlu0 %2630
      %vm2633 = vcmask 916480
      %v2635 = vsel %vm2633, %v2598, 0
      %2637 = vmatprep.subr.bf16.mxu0 %v2600
      %2638 = vmatpush1.bf16.msra.mxu0 %v2599
      %2639 = vmatprep.subr.bf16.mxu0 %v2604
      %2640 = vmatpush1.bf16.msra.mxu0 %v2603
      %2641 = vmatprep.subr.bf16.mxu0 %v2608
      %2642 = vmatpush1.bf16.msra.mxu0 %v2607
      %2643 = vmatprep.subr.bf16.mxu0 %v2612
      %2644 = vmatpush1.bf16.msra.mxu0 %v2611
      %2645 = vmatprep.subr.bf16.mxu0 %v2616
      %2646 = vmatpush1.bf16.msra.mxu0 %v2615
      %2647 = vmatprep.subr.bf16.mxu0 %v2620
      %2648 = vmatpush1.bf16.msra.mxu0 %v2619
      %2649 = vmatprep.subr.bf16.mxu0 %v2624
      %2650 = vmatpush1.bf16.msra.mxu0 %v2623
      %2651 = vmatprep.subr.bf16.mxu0 0
      %2652 = vmatpush1.bf16.msra.mxu0 0
      %2653 = vmatprep.subr.bf16.mxu0 0
      %2654 = vmatpush1.bf16.msra.mxu0 0
      %2655 = vmatprep.subr.bf16.mxu0 0
      %2656 = vmatpush1.bf16.msra.mxu0 0
      %2657 = vmatprep.subr.bf16.mxu0 0
      %2658 = vmatpush1.bf16.msra.mxu0 0
      %2659 = vmatprep.subr.bf16.mxu0 0
      %2660 = vmatpush1.bf16.msra.mxu0 0
      %2661 = vmatprep.subr.bf16.mxu0 0
      %2662 = vmatpush1.bf16.msra.mxu0 0
      %2663 = vmatprep.subr.bf16.mxu0 0
      %2664 = vmatpush1.bf16.msra.mxu0 0
      %2665 = vmatprep.subr.bf16.mxu0 0
      %2666 = vmatpush1.bf16.msra.mxu0 0
      %2667 = vmatprep.subr.bf16.mxu0 0
      %2668 = vmatpush1.bf16.msra.mxu0 0
      %2669 = vmatprep.mubr.bf16.mxu0 0
      %2670 = vmatmul.mubr.bf16.gmra.mrb[0].mxu0 %v2635
      %v2671 = vpop.f32.mrb[0].mxu0
      %v2672 = vadd.f32 %v2631, %v2671
      %v2673 = vpop.f32.mrb[0].mxu0
      %v2674 = vadd.f32 %v2631, %v2673
      %v2675 = vpop.f32.mrb[0].mxu0
      %v2676 = vpop.f32.mrb[0].mxu0
      %2677 = vdwg.mxu0
      %2678 = vmatprep.subr.bf16.mxu0 %v2602
      %2679 = vmatpush1.bf16.msra.mxu0 %v2601
      %2680 = vmatprep.subr.bf16.mxu0 %v2606
      %2681 = vmatpush1.bf16.msra.mxu0 %v2605
      %2682 = vmatprep.subr.bf16.mxu0 %v2610
      %2683 = vmatpush1.bf16.msra.mxu0 %v2609
      %2684 = vmatprep.subr.bf16.mxu0 %v2614
      %2685 = vmatpush1.bf16.msra.mxu0 %v2613
      %2686 = vmatprep.subr.bf16.mxu0 %v2618
      %2687 = vmatpush1.bf16.msra.mxu0 %v2617
      %2688 = vmatprep.subr.bf16.mxu0 %v2622
      %2689 = vmatpush1.bf16.msra.mxu0 %v2621
      %2690 = vmatprep.subr.bf16.mxu0 %v2626
      %2691 = vmatpush1.bf16.msra.mxu0 %v2625
      %2692 = vmatprep.subr.bf16.mxu0 0
      %2693 = vmatpush1.bf16.msra.mxu0 0
      %2694 = vmatprep.subr.bf16.mxu0 0
      %2695 = vmatpush1.bf16.msra.mxu0 0
      %2696 = vmatprep.subr.bf16.mxu0 0
      %2697 = vmatpush1.bf16.msra.mxu0 0
      %2698 = vmatprep.subr.bf16.mxu0 0
      %2699 = vmatpush1.bf16.msra.mxu0 0
      %2700 = vmatprep.subr.bf16.mxu0 0
      %2701 = vmatpush1.bf16.msra.mxu0 0
      %2702 = vmatprep.subr.bf16.mxu0 0
      %2703 = vmatpush1.bf16.msra.mxu0 0
      %2704 = vmatprep.subr.bf16.mxu0 0
      %2705 = vmatpush1.bf16.msra.mxu0 0
      %2706 = vmatprep.subr.bf16.mxu0 0
      %2707 = vmatpush1.bf16.msra.mxu0 0
      %2708 = vmatprep.subr.bf16.mxu0 0
      %2709 = vmatpush1.bf16.msra.mxu0 0
      %2710 = vmatprep.mubr.bf16.mxu0 0
      %2711 = vmatmul.mubr.bf16.gmra.mrb[0].mxu0 %v2635
      %v2712 = vpop.f32.mrb[0].mxu0
      %v2713 = vadd.f32 %v2631, %v2712
      %v2714 = vpop.f32.mrb[0].mxu0
      %v2715 = vadd.f32 %v2631, %v2714
      %v2716 = vpop.f32.mrb[0].mxu0
      %v2717 = vpop.f32.mrb[0].mxu0
      %2718 = vdwg.mxu0
      %v2719 = vadd.f32 %v2672, %v2674
      %v2720 = vadd.f32 %v2719, %v2713
      %v2721 = vadd.f32 %v2720, %v2715
      %2722 = vadd.xlane.f32.xlu0 %v2721
      %v2723 = vpop.xlane.xlu0 %2722
      %v2724 = vmul.f32 %v2723, 0.001953125
      %v2725 = vmul.f32 %v2672, %v2672
      %v2726 = vmul.f32 %v2674, %v2674
      %v2727 = vmul.f32 %v2713, %v2713
      %v2728 = vmul.f32 %v2715, %v2715
      %v2729 = vadd.f32 %v2725, %v2726
      %v2730 = vadd.f32 %v2729, %v2727
      %v2731 = vadd.f32 %v2730, %v2728
      %2732 = vadd.xlane.f32.xlu0 %v2731
      %v2733 = vpop.xlane.xlu0 %2732
      %v2734 = vmul.f32 %v2733, 0.001953125
      %v2735 = vmul.f32 %v2724, %v2724
      %v2736 = vsub.f32 %v2734, %v2735
      %v2737 = vmax.f32 %v2736, 0.0
      %v2738 = vsub.f32 %v2672, %v2724
      %v2739 = vsub.f32 %v2674, %v2724
      %v2740 = vsub.f32 %v2713, %v2724
      %v2741 = vsub.f32 %v2715, %v2724
      %v2742 = vadd.f32 %v2737, 1e-05
      %v2743 = vrsqrt.pop %v2742
      %v2744 = vmul.f32 %v2738, %v2743
      %v2745 = vmul.f32 %v2739, %v2743
      %v2746 = vmul.f32 %v2740, %v2743
      %v2747 = vmul.f32 %v2741, %v2743
      %vm2748 = vcmp.ge.f32.partialorder %v2744, 0.0
      %vm2749 = vcmp.ge.f32.partialorder %v2745, 0.0
      %vm2750 = vcmp.ge.f32.partialorder %v2746, 0.0
      %vm2751 = vcmp.ge.f32.partialorder %v2747, 0.0
      %v2752 = vmul.f32 %v2744, 0.01
      %v2753 = vmul.f32 %v2745, 0.01
      %v2754 = vmul.f32 %v2746, 0.01
      %v2755 = vmul.f32 %v2747, 0.01
      %v2756 = vsel %vm2748, %v2744, %v2752
      %v2757 = vsel %vm2749, %v2745, %v2753
      %v2758 = vsel %vm2750, %v2746, %v2754
      %v2759 = vsel %vm2751, %v2747, %v2755
      %v2760 = vpack.c.bf16 %v2756, %v2756
      %v2761 = vpack.c.bf16 %v2757, %v2757
      %v2762 = vpack.c.bf16 %v2758, %v2758
      %v2763 = vpack.c.bf16 %v2759, %v2759
      %2765 = vrot.lane.b32.xlu0 %v2763, 73
      %v2766 = vpop.permute.xlu0 %2765
      %2770 = vrot.lane.b32.xlu0 %v2760, 73
      %v2771 = vpop.permute.xlu0 %2770
      %2772 = vrot.lane.b32.xlu0 %v2761, 73
      %v2773 = vpop.permute.xlu0 %2772
      %2774 = vrot.lane.b32.xlu0 %v2762, 73
      %v2775 = vpop.permute.xlu0 %2774
      %v2776 = vsel %vm320, %v2771, %v2773
      %v2777 = vsel %vm320, %v2773, %v2775
      %v2778 = vsel %vm320, %v2775, %v2766
      %v2784 = vsel %vm327, %v2766, %v2771
      %v2786 = vld [vmem:[%s0] ss:$8 sm:$0xf]
      %v2788 = vlaneseq
      %v2789 = vshrl.u32 %v2788, 7
      %v2790 = vsub.s32 0, %v2789
      %v2791 = vrot.slane %v2786, %v2790
      %v2792 = vlaneseq
      %v2793 = vshrl.u32 %v2792, 7
      %v2794 = vsub.s32 1, %v2793
      %v2795 = vrot.slane %v2786, %v2794
      %v2796 = vlaneseq
      %v2797 = vshrl.u32 %v2796, 7
      %v2798 = vsub.s32 2, %v2797
      %v2799 = vrot.slane %v2786, %v2798
      %v2800 = vlaneseq
      %v2801 = vshrl.u32 %v2800, 7
      %v2802 = vsub.s32 3, %v2801
      %v2803 = vrot.slane %v2786, %v2802
      %v2808 = vpack.c.bf16 %v2791, %v2791
      %v2809 = vpack.c.bf16 %v2795, %v2795
      %v2810 = vpack.c.bf16 %v2799, %v2799
      %v2811 = vpack.c.bf16 %v2803, %v2803
      %v2813 = vpack.i.b16 %v2808, %v2808
      %v2815 = vlaneseq
      %v2816 = vshrl.u32 %v2815, 7
      %v2817 = vsub.s32 0, %v2816
      %v2818 = vrot.slane %v2813, %v2817
      %v2820 = vpack.i.b16 %v2809, %v2809
      %v2822 = vlaneseq
      %v2823 = vshrl.u32 %v2822, 7
      %v2824 = vsub.s32 0, %v2823
      %v2825 = vrot.slane %v2820, %v2824
      %v2827 = vpack.i.b16 %v2810, %v2810
      %v2829 = vlaneseq
      %v2830 = vshrl.u32 %v2829, 7
      %v2831 = vsub.s32 0, %v2830
      %v2832 = vrot.slane %v2827, %v2831
      %v2834 = vpack.i.b16 %v2811, %v2811
      %v2836 = vlaneseq
      %v2837 = vshrl.u32 %v2836, 7
      %v2838 = vsub.s32 0, %v2837
      %v2839 = vrot.slane %v2834, %v2838
      %v2840 = vmul.bf16 %v2784, %v2818
      %v2841 = vmul.bf16 %v2776, %v2825
      %v2842 = vmul.bf16 %v2777, %v2832
      %v2843 = vmul.bf16 %v2778, %v2839
      %2844 = vrot.lane.b32.xlu0 %v2763, 72
      %v2845 = vpop.permute.xlu0 %2844
      %2846 = vrot.lane.b32.xlu0 %v2760, 72
      %v2847 = vpop.permute.xlu0 %2846
      %2848 = vrot.lane.b32.xlu0 %v2761, 72
      %v2849 = vpop.permute.xlu0 %2848
      %2850 = vrot.lane.b32.xlu0 %v2762, 72
      %v2851 = vpop.permute.xlu0 %2850
      %v2852 = vsel %vm398, %v2847, %v2849
      %v2853 = vsel %vm398, %v2849, %v2851
      %v2854 = vsel %vm398, %v2851, %v2845
      %v2860 = vsel %vm405, %v2845, %v2847
      %v2862 = vld [vmem:[%s410] ss:$8 sm:$0xf]
      %v2864 = vlaneseq
      %v2865 = vshrl.u32 %v2864, 7
      %v2866 = vsub.s32 0, %v2865
      %v2867 = vrot.slane %v2862, %v2866
      %v2868 = vlaneseq
      %v2869 = vshrl.u32 %v2868, 7
      %v2870 = vsub.s32 1, %v2869
      %v2871 = vrot.slane %v2862, %v2870
      %v2872 = vlaneseq
      %v2873 = vshrl.u32 %v2872, 7
      %v2874 = vsub.s32 2, %v2873
      %v2875 = vrot.slane %v2862, %v2874
      %v2876 = vlaneseq
      %v2877 = vshrl.u32 %v2876, 7
      %v2878 = vsub.s32 3, %v2877
      %v2879 = vrot.slane %v2862, %v2878
      %v2884 = vpack.c.bf16 %v2867, %v2867
      %v2885 = vpack.c.bf16 %v2871, %v2871
      %v2886 = vpack.c.bf16 %v2875, %v2875
      %v2887 = vpack.c.bf16 %v2879, %v2879
      %v2889 = vpack.i.b16 %v2884, %v2884
      %v2891 = vlaneseq
      %v2892 = vshrl.u32 %v2891, 7
      %v2893 = vsub.s32 0, %v2892
      %v2894 = vrot.slane %v2889, %v2893
      %v2896 = vpack.i.b16 %v2885, %v2885
      %v2898 = vlaneseq
      %v2899 = vshrl.u32 %v2898, 7
      %v2900 = vsub.s32 0, %v2899
      %v2901 = vrot.slane %v2896, %v2900
      %v2903 = vpack.i.b16 %v2886, %v2886
      %v2905 = vlaneseq
      %v2906 = vshrl.u32 %v2905, 7
      %v2907 = vsub.s32 0, %v2906
      %v2908 = vrot.slane %v2903, %v2907
      %v2910 = vpack.i.b16 %v2887, %v2887
      %v2912 = vlaneseq
      %v2913 = vshrl.u32 %v2912, 7
      %v2914 = vsub.s32 0, %v2913
      %v2915 = vrot.slane %v2910, %v2914
      %v2916 = vmul.bf16 %v2860, %v2894
      %v2917 = vmul.bf16 %v2852, %v2901
      %v2918 = vmul.bf16 %v2853, %v2908
      %v2919 = vmul.bf16 %v2854, %v2915
      %v2924 = vrot.slane %v2916, 4
      %v2925 = vrot.slane %v2917, 4
      %v2926 = vrot.slane %v2918, 4
      %v2927 = vrot.slane %v2919, 4
      %v2930 = vsel %vm664, %v2840, %v2924
      %v2934 = vsel %vm664, %v2841, %v2925
      %v2938 = vsel %vm664, %v2842, %v2926
      %v2942 = vsel %vm664, %v2843, %v2927
      %2944 = vst [vmem:[#allocation2] sm:$0xff] %v2930
      %2945 = vst [vmem:[#allocation2 + $0x8] sm:$0xff] %v2934
      %2946 = vst [vmem:[#allocation2 + $0x10] sm:$0xff] %v2938
      %2947 = vst [vmem:[#allocation2 + $0x18] sm:$0xff] %v2942
      %2948 = vrot.lane.b32.xlu0 %v2763, 71
      %v2949 = vpop.permute.xlu0 %2948
      %2950 = vrot.lane.b32.xlu0 %v2760, 71
      %v2951 = vpop.permute.xlu0 %2950
      %2952 = vrot.lane.b32.xlu0 %v2761, 71
      %v2953 = vpop.permute.xlu0 %2952
      %2954 = vrot.lane.b32.xlu0 %v2762, 71
      %v2955 = vpop.permute.xlu0 %2954
      %v2956 = vsel %vm477, %v2951, %v2953
      %v2957 = vsel %vm477, %v2953, %v2955
      %v2958 = vsel %vm477, %v2955, %v2949
      %v2964 = vsel %vm484, %v2949, %v2951
      %v2966 = vld [vmem:[%s489] ss:$8 sm:$0xf]
      %v2968 = vlaneseq
      %v2969 = vshrl.u32 %v2968, 7
      %v2970 = vsub.s32 0, %v2969
      %v2971 = vrot.slane %v2966, %v2970
      %v2972 = vlaneseq
      %v2973 = vshrl.u32 %v2972, 7
      %v2974 = vsub.s32 1, %v2973
      %v2975 = vrot.slane %v2966, %v2974
      %v2976 = vlaneseq
      %v2977 = vshrl.u32 %v2976, 7
      %v2978 = vsub.s32 2, %v2977
      %v2979 = vrot.slane %v2966, %v2978
      %v2980 = vlaneseq
      %v2981 = vshrl.u32 %v2980, 7
      %v2982 = vsub.s32 3, %v2981
      %v2983 = vrot.slane %v2966, %v2982
      %v2988 = vpack.c.bf16 %v2971, %v2971
      %v2989 = vpack.c.bf16 %v2975, %v2975
      %v2990 = vpack.c.bf16 %v2979, %v2979
      %v2991 = vpack.c.bf16 %v2983, %v2983
      %v2993 = vpack.i.b16 %v2988, %v2988
      %v2995 = vlaneseq
      %v2996 = vshrl.u32 %v2995, 7
      %v2997 = vsub.s32 0, %v2996
      %v2998 = vrot.slane %v2993, %v2997
      %v3000 = vpack.i.b16 %v2989, %v2989
      %v3002 = vlaneseq
      %v3003 = vshrl.u32 %v3002, 7
      %v3004 = vsub.s32 0, %v3003
      %v3005 = vrot.slane %v3000, %v3004
      %v3007 = vpack.i.b16 %v2990, %v2990
      %v3009 = vlaneseq
      %v3010 = vshrl.u32 %v3009, 7
      %v3011 = vsub.s32 0, %v3010
      %v3012 = vrot.slane %v3007, %v3011
      %v3014 = vpack.i.b16 %v2991, %v2991
      %v3016 = vlaneseq
      %v3017 = vshrl.u32 %v3016, 7
      %v3018 = vsub.s32 0, %v3017
      %v3019 = vrot.slane %v3014, %v3018
      %v3020 = vmul.bf16 %v2964, %v2998
      %v3021 = vmul.bf16 %v2956, %v3005
      %v3022 = vmul.bf16 %v2957, %v3012
      %v3023 = vmul.bf16 %v2958, %v3019
      %3024 = vrot.lane.b32.xlu0 %v2763, 65
      %v3025 = vpop.permute.xlu0 %3024
      %3026 = vrot.lane.b32.xlu0 %v2760, 65
      %v3027 = vpop.permute.xlu0 %3026
      %3028 = vrot.lane.b32.xlu0 %v2761, 65
      %v3029 = vpop.permute.xlu0 %3028
      %3030 = vrot.lane.b32.xlu0 %v2762, 65
      %v3031 = vpop.permute.xlu0 %3030
      %v3032 = vsel %vm556, %v3027, %v3029
      %v3033 = vsel %vm556, %v3029, %v3031
      %v3034 = vsel %vm556, %v3031, %v3025
      %v3040 = vsel %vm563, %v3025, %v3027
      %v3042 = vld [vmem:[%s568] ss:$8 sm:$0xf]
      %v3044 = vlaneseq
      %v3045 = vshrl.u32 %v3044, 7
      %v3046 = vsub.s32 0, %v3045
      %v3047 = vrot.slane %v3042, %v3046
      %v3048 = vlaneseq
      %v3049 = vshrl.u32 %v3048, 7
      %v3050 = vsub.s32 1, %v3049
      %v3051 = vrot.slane %v3042, %v3050
      %v3052 = vlaneseq
      %v3053 = vshrl.u32 %v3052, 7
      %v3054 = vsub.s32 2, %v3053
      %v3055 = vrot.slane %v3042, %v3054
      %v3056 = vlaneseq
      %v3057 = vshrl.u32 %v3056, 7
      %v3058 = vsub.s32 3, %v3057
      %v3059 = vrot.slane %v3042, %v3058
      %v3064 = vpack.c.bf16 %v3047, %v3047
      %v3065 = vpack.c.bf16 %v3051, %v3051
      %v3066 = vpack.c.bf16 %v3055, %v3055
      %v3067 = vpack.c.bf16 %v3059, %v3059
      %v3069 = vpack.i.b16 %v3064, %v3064
      %v3071 = vlaneseq
      %v3072 = vshrl.u32 %v3071, 7
      %v3073 = vsub.s32 0, %v3072
      %v3074 = vrot.slane %v3069, %v3073
      %v3076 = vpack.i.b16 %v3065, %v3065
      %v3078 = vlaneseq
      %v3079 = vshrl.u32 %v3078, 7
      %v3080 = vsub.s32 0, %v3079
      %v3081 = vrot.slane %v3076, %v3080
      %v3083 = vpack.i.b16 %v3066, %v3066
      %v3085 = vlaneseq
      %v3086 = vshrl.u32 %v3085, 7
      %v3087 = vsub.s32 0, %v3086
      %v3088 = vrot.slane %v3083, %v3087
      %v3090 = vpack.i.b16 %v3067, %v3067
      %v3092 = vlaneseq
      %v3093 = vshrl.u32 %v3092, 7
      %v3094 = vsub.s32 0, %v3093
      %v3095 = vrot.slane %v3090, %v3094
      %v3096 = vmul.bf16 %v3040, %v3074
      %v3097 = vmul.bf16 %v3032, %v3081
      %v3098 = vmul.bf16 %v3033, %v3088
      %v3099 = vmul.bf16 %v3034, %v3095
      %v3104 = vrot.slane %v3096, 4
      %v3105 = vrot.slane %v3097, 4
      %v3106 = vrot.slane %v3098, 4
      %v3107 = vrot.slane %v3099, 4
      %v3110 = vsel %vm664, %v3020, %v3104
      %v3114 = vsel %vm664, %v3021, %v3105
      %v3118 = vsel %vm664, %v3022, %v3106
      %v3122 = vsel %vm664, %v3023, %v3107
      %3124 = vst [vmem:[#allocation2 + $0x20] sm:$0xff] %v3110
      %3125 = vst [vmem:[#allocation2 + $0x28] sm:$0xff] %v3114
      %3126 = vst [vmem:[#allocation2 + $0x30] sm:$0xff] %v3118
      %3127 = vst [vmem:[#allocation2 + $0x38] sm:$0xff] %v3122
      %3128 = vrot.lane.b32.xlu0 %v2763, 64
      %v3129 = vpop.permute.xlu0 %3128
      %3130 = vrot.lane.b32.xlu0 %v2760, 64
      %v3131 = vpop.permute.xlu0 %3130
      %3132 = vrot.lane.b32.xlu0 %v2761, 64
      %v3133 = vpop.permute.xlu0 %3132
      %3134 = vrot.lane.b32.xlu0 %v2762, 64
      %v3135 = vpop.permute.xlu0 %3134
      %v3136 = vsel %vm698, %v3131, %v3133
      %v3137 = vsel %vm698, %v3133, %v3135
      %v3138 = vsel %vm698, %v3135, %v3129
      %v3144 = vsel %vm705, %v3129, %v3131
      %v3146 = vld [vmem:[%s710] ss:$8 sm:$0xf]
      %v3148 = vlaneseq
      %v3149 = vshrl.u32 %v3148, 7
      %v3150 = vsub.s32 0, %v3149
      %v3151 = vrot.slane %v3146, %v3150
      %v3152 = vlaneseq
      %v3153 = vshrl.u32 %v3152, 7
      %v3154 = vsub.s32 1, %v3153
      %v3155 = vrot.slane %v3146, %v3154
      %v3156 = vlaneseq
      %v3157 = vshrl.u32 %v3156, 7
      %v3158 = vsub.s32 2, %v3157
      %v3159 = vrot.slane %v3146, %v3158
      %v3160 = vlaneseq
      %v3161 = vshrl.u32 %v3160, 7
      %v3162 = vsub.s32 3, %v3161
      %v3163 = vrot.slane %v3146, %v3162
      %v3168 = vpack.c.bf16 %v3151, %v3151
      %v3169 = vpack.c.bf16 %v3155, %v3155
      %v3170 = vpack.c.bf16 %v3159, %v3159
      %v3171 = vpack.c.bf16 %v3163, %v3163
      %v3173 = vpack.i.b16 %v3168, %v3168
      %v3175 = vlaneseq
      %v3176 = vshrl.u32 %v3175, 7
      %v3177 = vsub.s32 0, %v3176
      %v3178 = vrot.slane %v3173, %v3177
      %v3180 = vpack.i.b16 %v3169, %v3169
      %v3182 = vlaneseq
      %v3183 = vshrl.u32 %v3182, 7
      %v3184 = vsub.s32 0, %v3183
      %v3185 = vrot.slane %v3180, %v3184
      %v3187 = vpack.i.b16 %v3170, %v3170
      %v3189 = vlaneseq
      %v3190 = vshrl.u32 %v3189, 7
      %v3191 = vsub.s32 0, %v3190
      %v3192 = vrot.slane %v3187, %v3191
      %v3194 = vpack.i.b16 %v3171, %v3171
      %v3196 = vlaneseq
      %v3197 = vshrl.u32 %v3196, 7
      %v3198 = vsub.s32 0, %v3197
      %v3199 = vrot.slane %v3194, %v3198
      %v3200 = vmul.bf16 %v3144, %v3178
      %v3201 = vmul.bf16 %v3136, %v3185
      %v3202 = vmul.bf16 %v3137, %v3192
      %v3203 = vmul.bf16 %v3138, %v3199
      %3204 = vrot.lane.b32.xlu0 %v2763, 63
      %v3205 = vpop.permute.xlu0 %3204
      %3206 = vrot.lane.b32.xlu0 %v2760, 63
      %v3207 = vpop.permute.xlu0 %3206
      %3208 = vrot.lane.b32.xlu0 %v2761, 63
      %v3209 = vpop.permute.xlu0 %3208
      %3210 = vrot.lane.b32.xlu0 %v2762, 63
      %v3211 = vpop.permute.xlu0 %3210
      %v3212 = vsel %vm777, %v3207, %v3209
      %v3213 = vsel %vm777, %v3209, %v3211
      %v3214 = vsel %vm777, %v3211, %v3205
      %v3220 = vsel %vm784, %v3205, %v3207
      %v3222 = vld [vmem:[%s789] ss:$8 sm:$0xf]
      %v3224 = vlaneseq
      %v3225 = vshrl.u32 %v3224, 7
      %v3226 = vsub.s32 0, %v3225
      %v3227 = vrot.slane %v3222, %v3226
      %v3228 = vlaneseq
      %v3229 = vshrl.u32 %v3228, 7
      %v3230 = vsub.s32 1, %v3229
      %v3231 = vrot.slane %v3222, %v3230
      %v3232 = vlaneseq
      %v3233 = vshrl.u32 %v3232, 7
      %v3234 = vsub.s32 2, %v3233
      %v3235 = vrot.slane %v3222, %v3234
      %v3236 = vlaneseq
      %v3237 = vshrl.u32 %v3236, 7
      %v3238 = vsub.s32 3, %v3237
      %v3239 = vrot.slane %v3222, %v3238
      %v3244 = vpack.c.bf16 %v3227, %v3227
      %v3245 = vpack.c.bf16 %v3231, %v3231
      %v3246 = vpack.c.bf16 %v3235, %v3235
      %v3247 = vpack.c.bf16 %v3239, %v3239
      %v3249 = vpack.i.b16 %v3244, %v3244
      %v3251 = vlaneseq
      %v3252 = vshrl.u32 %v3251, 7
      %v3253 = vsub.s32 0, %v3252
      %v3254 = vrot.slane %v3249, %v3253
      %v3256 = vpack.i.b16 %v3245, %v3245
      %v3258 = vlaneseq
      %v3259 = vshrl.u32 %v3258, 7
      %v3260 = vsub.s32 0, %v3259
      %v3261 = vrot.slane %v3256, %v3260
      %v3263 = vpack.i.b16 %v3246, %v3246
      %v3265 = vlaneseq
      %v3266 = vshrl.u32 %v3265, 7
      %v3267 = vsub.s32 0, %v3266
      %v3268 = vrot.slane %v3263, %v3267
      %v3270 = vpack.i.b16 %v3247, %v3247
      %v3272 = vlaneseq
      %v3273 = vshrl.u32 %v3272, 7
      %v3274 = vsub.s32 0, %v3273
      %v3275 = vrot.slane %v3270, %v3274
      %v3276 = vmul.bf16 %v3220, %v3254
      %v3277 = vmul.bf16 %v3212, %v3261
      %v3278 = vmul.bf16 %v3213, %v3268
      %v3279 = vmul.bf16 %v3214, %v3275
      %v3284 = vrot.slane %v3276, 4
      %v3285 = vrot.slane %v3277, 4
      %v3286 = vrot.slane %v3278, 4
      %v3287 = vrot.slane %v3279, 4
      %v3290 = vsel %vm664, %v3200, %v3284
      %v3294 = vsel %vm664, %v3201, %v3285
      %v3298 = vsel %vm664, %v3202, %v3286
      %v3302 = vsel %vm664, %v3203, %v3287
      %3304 = vst [vmem:[#allocation2 + $0x40] sm:$0xff] %v3290
      %3305 = vst [vmem:[#allocation2 + $0x48] sm:$0xff] %v3294
      %3306 = vst [vmem:[#allocation2 + $0x50] sm:$0xff] %v3298
      %3307 = vst [vmem:[#allocation2 + $0x58] sm:$0xff] %v3302
      %3308 = vrot.lane.b32.xlu0 %v2763, 57
      %v3309 = vpop.permute.xlu0 %3308
      %3310 = vrot.lane.b32.xlu0 %v2760, 57
      %v3311 = vpop.permute.xlu0 %3310
      %3312 = vrot.lane.b32.xlu0 %v2761, 57
      %v3313 = vpop.permute.xlu0 %3312
      %3314 = vrot.lane.b32.xlu0 %v2762, 57
      %v3315 = vpop.permute.xlu0 %3314
      %v3316 = vsel %vm856, %v3311, %v3313
      %v3317 = vsel %vm856, %v3313, %v3315
      %v3318 = vsel %vm856, %v3315, %v3309
      %v3324 = vsel %vm863, %v3309, %v3311
      %v3326 = vld [vmem:[%s868] ss:$8 sm:$0xf]
      %v3328 = vlaneseq
      %v3329 = vshrl.u32 %v3328, 7
      %v3330 = vsub.s32 0, %v3329
      %v3331 = vrot.slane %v3326, %v3330
      %v3332 = vlaneseq
      %v3333 = vshrl.u32 %v3332, 7
      %v3334 = vsub.s32 1, %v3333
      %v3335 = vrot.slane %v3326, %v3334
      %v3336 = vlaneseq
      %v3337 = vshrl.u32 %v3336, 7
      %v3338 = vsub.s32 2, %v3337
      %v3339 = vrot.slane %v3326, %v3338
      %v3340 = vlaneseq
      %v3341 = vshrl.u32 %v3340, 7
      %v3342 = vsub.s32 3, %v3341
      %v3343 = vrot.slane %v3326, %v3342
      %v3348 = vpack.c.bf16 %v3331, %v3331
      %v3349 = vpack.c.bf16 %v3335, %v3335
      %v3350 = vpack.c.bf16 %v3339, %v3339
      %v3351 = vpack.c.bf16 %v3343, %v3343
      %v3353 = vpack.i.b16 %v3348, %v3348
      %v3355 = vlaneseq
      %v3356 = vshrl.u32 %v3355, 7
      %v3357 = vsub.s32 0, %v3356
      %v3358 = vrot.slane %v3353, %v3357
      %v3360 = vpack.i.b16 %v3349, %v3349
      %v3362 = vlaneseq
      %v3363 = vshrl.u32 %v3362, 7
      %v3364 = vsub.s32 0, %v3363
      %v3365 = vrot.slane %v3360, %v3364
      %v3367 = vpack.i.b16 %v3350, %v3350
      %v3369 = vlaneseq
      %v3370 = vshrl.u32 %v3369, 7
      %v3371 = vsub.s32 0, %v3370
      %v3372 = vrot.slane %v3367, %v3371
      %v3374 = vpack.i.b16 %v3351, %v3351
      %v3376 = vlaneseq
      %v3377 = vshrl.u32 %v3376, 7
      %v3378 = vsub.s32 0, %v3377
      %v3379 = vrot.slane %v3374, %v3378
      %v3380 = vmul.bf16 %v3324, %v3358
      %v3381 = vmul.bf16 %v3316, %v3365
      %v3382 = vmul.bf16 %v3317, %v3372
      %v3383 = vmul.bf16 %v3318, %v3379
      %3384 = vrot.lane.b32.xlu0 %v2763, 56
      %v3385 = vpop.permute.xlu0 %3384
      %3386 = vrot.lane.b32.xlu0 %v2760, 56
      %v3387 = vpop.permute.xlu0 %3386
      %3388 = vrot.lane.b32.xlu0 %v2761, 56
      %v3389 = vpop.permute.xlu0 %3388
      %3390 = vrot.lane.b32.xlu0 %v2762, 56
      %v3391 = vpop.permute.xlu0 %3390
      %v3392 = vsel %vm935, %v3387, %v3389
      %v3393 = vsel %vm935, %v3389, %v3391
      %v3394 = vsel %vm935, %v3391, %v3385
      %v3400 = vsel %vm942, %v3385, %v3387
      %v3402 = vld [vmem:[%s947] ss:$8 sm:$0xf]
      %v3404 = vlaneseq
      %v3405 = vshrl.u32 %v3404, 7
      %v3406 = vsub.s32 0, %v3405
      %v3407 = vrot.slane %v3402, %v3406
      %v3408 = vlaneseq
      %v3409 = vshrl.u32 %v3408, 7
      %v3410 = vsub.s32 1, %v3409
      %v3411 = vrot.slane %v3402, %v3410
      %v3412 = vlaneseq
      %v3413 = vshrl.u32 %v3412, 7
      %v3414 = vsub.s32 2, %v3413
      %v3415 = vrot.slane %v3402, %v3414
      %v3416 = vlaneseq
      %v3417 = vshrl.u32 %v3416, 7
      %v3418 = vsub.s32 3, %v3417
      %v3419 = vrot.slane %v3402, %v3418
      %v3424 = vpack.c.bf16 %v3407, %v3407
      %v3425 = vpack.c.bf16 %v3411, %v3411
      %v3426 = vpack.c.bf16 %v3415, %v3415
      %v3427 = vpack.c.bf16 %v3419, %v3419
      %v3429 = vpack.i.b16 %v3424, %v3424
      %v3431 = vlaneseq
      %v3432 = vshrl.u32 %v3431, 7
      %v3433 = vsub.s32 0, %v3432
      %v3434 = vrot.slane %v3429, %v3433
      %v3436 = vpack.i.b16 %v3425, %v3425
      %v3438 = vlaneseq
      %v3439 = vshrl.u32 %v3438, 7
      %v3440 = vsub.s32 0, %v3439
      %v3441 = vrot.slane %v3436, %v3440
      %v3443 = vpack.i.b16 %v3426, %v3426
      %v3445 = vlaneseq
      %v3446 = vshrl.u32 %v3445, 7
      %v3447 = vsub.s32 0, %v3446
      %v3448 = vrot.slane %v3443, %v3447
      %v3450 = vpack.i.b16 %v3427, %v3427
      %v3452 = vlaneseq
      %v3453 = vshrl.u32 %v3452, 7
      %v3454 = vsub.s32 0, %v3453
      %v3455 = vrot.slane %v3450, %v3454
      %v3456 = vmul.bf16 %v3400, %v3434
      %v3457 = vmul.bf16 %v3392, %v3441
      %v3458 = vmul.bf16 %v3393, %v3448
      %v3459 = vmul.bf16 %v3394, %v3455
      %v3464 = vrot.slane %v3456, 4
      %v3465 = vrot.slane %v3457, 4
      %v3466 = vrot.slane %v3458, 4
      %v3467 = vrot.slane %v3459, 4
      %v3470 = vsel %vm664, %v3380, %v3464
      %v3474 = vsel %vm664, %v3381, %v3465
      %v3478 = vsel %vm664, %v3382, %v3466
      %v3482 = vsel %vm664, %v3383, %v3467
      %3484 = vst [vmem:[#allocation2 + $0x60] sm:$0xff] %v3470
      %3485 = vst [vmem:[#allocation2 + $0x68] sm:$0xff] %v3474
      %3486 = vst [vmem:[#allocation2 + $0x70] sm:$0xff] %v3478
      %3487 = vst [vmem:[#allocation2 + $0x78] sm:$0xff] %v3482
      %3488 = vrot.lane.b32.xlu0 %v2763, 55
      %v3489 = vpop.permute.xlu0 %3488
      %3490 = vrot.lane.b32.xlu0 %v2760, 55
      %v3491 = vpop.permute.xlu0 %3490
      %3492 = vrot.lane.b32.xlu0 %v2761, 55
      %v3493 = vpop.permute.xlu0 %3492
      %3494 = vrot.lane.b32.xlu0 %v2762, 55
      %v3495 = vpop.permute.xlu0 %3494
      %v3496 = vsel %vm1074, %v3491, %v3493
      %v3497 = vsel %vm1074, %v3493, %v3495
      %v3498 = vsel %vm1074, %v3495, %v3489
      %v3504 = vsel %vm1081, %v3489, %v3491
      %v3506 = vld [vmem:[%s1086] ss:$8 sm:$0xf]
      %v3508 = vlaneseq
      %v3509 = vshrl.u32 %v3508, 7
      %v3510 = vsub.s32 0, %v3509
      %v3511 = vrot.slane %v3506, %v3510
      %v3512 = vlaneseq
      %v3513 = vshrl.u32 %v3512, 7
      %v3514 = vsub.s32 1, %v3513
      %v3515 = vrot.slane %v3506, %v3514
      %v3516 = vlaneseq
      %v3517 = vshrl.u32 %v3516, 7
      %v3518 = vsub.s32 2, %v3517
      %v3519 = vrot.slane %v3506, %v3518
      %v3520 = vlaneseq
      %v3521 = vshrl.u32 %v3520, 7
      %v3522 = vsub.s32 3, %v3521
      %v3523 = vrot.slane %v3506, %v3522
      %v3528 = vpack.c.bf16 %v3511, %v3511
      %v3529 = vpack.c.bf16 %v3515, %v3515
      %v3530 = vpack.c.bf16 %v3519, %v3519
      %v3531 = vpack.c.bf16 %v3523, %v3523
      %v3533 = vpack.i.b16 %v3528, %v3528
      %v3535 = vlaneseq
      %v3536 = vshrl.u32 %v3535, 7
      %v3537 = vsub.s32 0, %v3536
      %v3538 = vrot.slane %v3533, %v3537
      %v3540 = vpack.i.b16 %v3529, %v3529
      %v3542 = vlaneseq
      %v3543 = vshrl.u32 %v3542, 7
      %v3544 = vsub.s32 0, %v3543
      %v3545 = vrot.slane %v3540, %v3544
      %v3547 = vpack.i.b16 %v3530, %v3530
      %v3549 = vlaneseq
      %v3550 = vshrl.u32 %v3549, 7
      %v3551 = vsub.s32 0, %v3550
      %v3552 = vrot.slane %v3547, %v3551
      %v3554 = vpack.i.b16 %v3531, %v3531
      %v3556 = vlaneseq
      %v3557 = vshrl.u32 %v3556, 7
      %v3558 = vsub.s32 0, %v3557
      %v3559 = vrot.slane %v3554, %v3558
      %v3560 = vmul.bf16 %v3504, %v3538
      %v3561 = vmul.bf16 %v3496, %v3545
      %v3562 = vmul.bf16 %v3497, %v3552
      %v3563 = vmul.bf16 %v3498, %v3559
      %3564 = vrot.lane.b32.xlu0 %v2763, 9
      %v3565 = vpop.permute.xlu0 %3564
      %3566 = vrot.lane.b32.xlu0 %v2760, 9
      %v3567 = vpop.permute.xlu0 %3566
      %3568 = vrot.lane.b32.xlu0 %v2761, 9
      %v3569 = vpop.permute.xlu0 %3568
      %3570 = vrot.lane.b32.xlu0 %v2762, 9
      %v3571 = vpop.permute.xlu0 %3570
      %v3572 = vsel %vm1153, %v3567, %v3569
      %v3573 = vsel %vm1153, %v3569, %v3571
      %v3574 = vsel %vm1153, %v3571, %v3565
      %v3580 = vsel %vm1160, %v3565, %v3567
      %v3582 = vld [vmem:[%s1165] ss:$8 sm:$0xf]
      %v3584 = vlaneseq
      %v3585 = vshrl.u32 %v3584, 7
      %v3586 = vsub.s32 0, %v3585
      %v3587 = vrot.slane %v3582, %v3586
      %v3588 = vlaneseq
      %v3589 = vshrl.u32 %v3588, 7
      %v3590 = vsub.s32 1, %v3589
      %v3591 = vrot.slane %v3582, %v3590
      %v3592 = vlaneseq
      %v3593 = vshrl.u32 %v3592, 7
      %v3594 = vsub.s32 2, %v3593
      %v3595 = vrot.slane %v3582, %v3594
      %v3596 = vlaneseq
      %v3597 = vshrl.u32 %v3596, 7
      %v3598 = vsub.s32 3, %v3597
      %v3599 = vrot.slane %v3582, %v3598
      %v3604 = vpack.c.bf16 %v3587, %v3587
      %v3605 = vpack.c.bf16 %v3591, %v3591
      %v3606 = vpack.c.bf16 %v3595, %v3595
      %v3607 = vpack.c.bf16 %v3599, %v3599
      %v3609 = vpack.i.b16 %v3604, %v3604
      %v3611 = vlaneseq
      %v3612 = vshrl.u32 %v3611, 7
      %v3613 = vsub.s32 0, %v3612
      %v3614 = vrot.slane %v3609, %v3613
      %v3616 = vpack.i.b16 %v3605, %v3605
      %v3618 = vlaneseq
      %v3619 = vshrl.u32 %v3618, 7
      %v3620 = vsub.s32 0, %v3619
      %v3621 = vrot.slane %v3616, %v3620
      %v3623 = vpack.i.b16 %v3606, %v3606
      %v3625 = vlaneseq
      %v3626 = vshrl.u32 %v3625, 7
      %v3627 = vsub.s32 0, %v3626
      %v3628 = vrot.slane %v3623, %v3627
      %v3630 = vpack.i.b16 %v3607, %v3607
      %v3632 = vlaneseq
      %v3633 = vshrl.u32 %v3632, 7
      %v3634 = vsub.s32 0, %v3633
      %v3635 = vrot.slane %v3630, %v3634
      %v3636 = vmul.bf16 %v3580, %v3614
      %v3637 = vmul.bf16 %v3572, %v3621
      %v3638 = vmul.bf16 %v3573, %v3628
      %v3639 = vmul.bf16 %v3574, %v3635
      %v3644 = vrot.slane %v3636, 4
      %v3645 = vrot.slane %v3637, 4
      %v3646 = vrot.slane %v3638, 4
      %v3647 = vrot.slane %v3639, 4
      %v3650 = vsel %vm664, %v3560, %v3644
      %v3654 = vsel %vm664, %v3561, %v3645
      %v3658 = vsel %vm664, %v3562, %v3646
      %v3662 = vsel %vm664, %v3563, %v3647
      %3664 = vst [vmem:[#allocation2 + $0x80] sm:$0xff] %v3650
      %3665 = vst [vmem:[#allocation2 + $0x88] sm:$0xff] %v3654
      %3666 = vst [vmem:[#allocation2 + $0x90] sm:$0xff] %v3658
      %3667 = vst [vmem:[#allocation2 + $0x98] sm:$0xff] %v3662
      %3668 = vrot.lane.b32.xlu0 %v2763, 8
      %v3669 = vpop.permute.xlu0 %3668
      %3670 = vrot.lane.b32.xlu0 %v2760, 8
      %v3671 = vpop.permute.xlu0 %3670
      %3672 = vrot.lane.b32.xlu0 %v2761, 8
      %v3673 = vpop.permute.xlu0 %3672
      %3674 = vrot.lane.b32.xlu0 %v2762, 8
      %v3675 = vpop.permute.xlu0 %3674
      %v3676 = vsel %vm1232, %v3671, %v3673
      %v3677 = vsel %vm1232, %v3673, %v3675
      %v3678 = vsel %vm1232, %v3675, %v3669
      %v3684 = vsel %vm1239, %v3669, %v3671
      %v3686 = vld [vmem:[%s1244] ss:$8 sm:$0xf]
      %v3688 = vlaneseq
      %v3689 = vshrl.u32 %v3688, 7
      %v3690 = vsub.s32 0, %v3689
      %v3691 = vrot.slane %v3686, %v3690
      %v3692 = vlaneseq
      %v3693 = vshrl.u32 %v3692, 7
      %v3694 = vsub.s32 1, %v3693
      %v3695 = vrot.slane %v3686, %v3694
      %v3696 = vlaneseq
      %v3697 = vshrl.u32 %v3696, 7
      %v3698 = vsub.s32 2, %v3697
      %v3699 = vrot.slane %v3686, %v3698
      %v3700 = vlaneseq
      %v3701 = vshrl.u32 %v3700, 7
      %v3702 = vsub.s32 3, %v3701
      %v3703 = vrot.slane %v3686, %v3702
      %v3708 = vpack.c.bf16 %v3691, %v3691
      %v3709 = vpack.c.bf16 %v3695, %v3695
      %v3710 = vpack.c.bf16 %v3699, %v3699
      %v3711 = vpack.c.bf16 %v3703, %v3703
      %v3713 = vpack.i.b16 %v3708, %v3708
      %v3715 = vlaneseq
      %v3716 = vshrl.u32 %v3715, 7
      %v3717 = vsub.s32 0, %v3716
      %v3718 = vrot.slane %v3713, %v3717
      %v3720 = vpack.i.b16 %v3709, %v3709
      %v3722 = vlaneseq
      %v3723 = vshrl.u32 %v3722, 7
      %v3724 = vsub.s32 0, %v3723
      %v3725 = vrot.slane %v3720, %v3724
      %v3727 = vpack.i.b16 %v3710, %v3710
      %v3729 = vlaneseq
      %v3730 = vshrl.u32 %v3729, 7
      %v3731 = vsub.s32 0, %v3730
      %v3732 = vrot.slane %v3727, %v3731
      %v3734 = vpack.i.b16 %v3711, %v3711
      %v3736 = vlaneseq
      %v3737 = vshrl.u32 %v3736, 7
      %v3738 = vsub.s32 0, %v3737
      %v3739 = vrot.slane %v3734, %v3738
      %v3740 = vmul.bf16 %v3684, %v3718
      %v3741 = vmul.bf16 %v3676, %v3725
      %v3742 = vmul.bf16 %v3677, %v3732
      %v3743 = vmul.bf16 %v3678, %v3739
      %3744 = vrot.lane.b32.xlu0 %v2763, 7
      %v3745 = vpop.permute.xlu0 %3744
      %3746 = vrot.lane.b32.xlu0 %v2760, 7
      %v3747 = vpop.permute.xlu0 %3746
      %3748 = vrot.lane.b32.xlu0 %v2761, 7
      %v3749 = vpop.permute.xlu0 %3748
      %3750 = vrot.lane.b32.xlu0 %v2762, 7
      %v3751 = vpop.permute.xlu0 %3750
      %v3752 = vsel %vm1311, %v3747, %v3749
      %v3753 = vsel %vm1311, %v3749, %v3751
      %v3754 = vsel %vm1311, %v3751, %v3745
      %v3760 = vsel %vm1318, %v3745, %v3747
      %v3762 = vld [vmem:[%s1323] ss:$8 sm:$0xf]
      %v3764 = vlaneseq
      %v3765 = vshrl.u32 %v3764, 7
      %v3766 = vsub.s32 0, %v3765
      %v3767 = vrot.slane %v3762, %v3766
      %v3768 = vlaneseq
      %v3769 = vshrl.u32 %v3768, 7
      %v3770 = vsub.s32 1, %v3769
      %v3771 = vrot.slane %v3762, %v3770
      %v3772 = vlaneseq
      %v3773 = vshrl.u32 %v3772, 7
      %v3774 = vsub.s32 2, %v3773
      %v3775 = vrot.slane %v3762, %v3774
      %v3776 = vlaneseq
      %v3777 = vshrl.u32 %v3776, 7
      %v3778 = vsub.s32 3, %v3777
      %v3779 = vrot.slane %v3762, %v3778
      %v3784 = vpack.c.bf16 %v3767, %v3767
      %v3785 = vpack.c.bf16 %v3771, %v3771
      %v3786 = vpack.c.bf16 %v3775, %v3775
      %v3787 = vpack.c.bf16 %v3779, %v3779
      %v3789 = vpack.i.b16 %v3784, %v3784
      %v3791 = vlaneseq
      %v3792 = vshrl.u32 %v3791, 7
      %v3793 = vsub.s32 0, %v3792
      %v3794 = vrot.slane %v3789, %v3793
      %v3796 = vpack.i.b16 %v3785, %v3785
      %v3798 = vlaneseq
      %v3799 = vshrl.u32 %v3798, 7
      %v3800 = vsub.s32 0, %v3799
      %v3801 = vrot.slane %v3796, %v3800
      %v3803 = vpack.i.b16 %v3786, %v3786
      %v3805 = vlaneseq
      %v3806 = vshrl.u32 %v3805, 7
      %v3807 = vsub.s32 0, %v3806
      %v3808 = vrot.slane %v3803, %v3807
      %v3810 = vpack.i.b16 %v3787, %v3787
      %v3812 = vlaneseq
      %v3813 = vshrl.u32 %v3812, 7
      %v3814 = vsub.s32 0, %v3813
      %v3815 = vrot.slane %v3810, %v3814
      %v3816 = vmul.bf16 %v3760, %v3794
      %v3817 = vmul.bf16 %v3752, %v3801
      %v3818 = vmul.bf16 %v3753, %v3808
      %v3819 = vmul.bf16 %v3754, %v3815
      %v3824 = vrot.slane %v3816, 4
      %v3825 = vrot.slane %v3817, 4
      %v3826 = vrot.slane %v3818, 4
      %v3827 = vrot.slane %v3819, 4
      %v3830 = vsel %vm664, %v3740, %v3824
      %v3834 = vsel %vm664, %v3741, %v3825
      %v3838 = vsel %vm664, %v3742, %v3826
      %v3842 = vsel %vm664, %v3743, %v3827
      %3844 = vst [vmem:[#allocation2 + $0xa0] sm:$0xff] %v3830
      %3845 = vst [vmem:[#allocation2 + $0xa8] sm:$0xff] %v3834
      %3846 = vst [vmem:[#allocation2 + $0xb0] sm:$0xff] %v3838
      %3847 = vst [vmem:[#allocation2 + $0xb8] sm:$0xff] %v3842
      %3848 = vrot.lane.b32.xlu0 %v2763, 1
      %v3849 = vpop.permute.xlu0 %3848
      %3850 = vrot.lane.b32.xlu0 %v2760, 1
      %v3851 = vpop.permute.xlu0 %3850
      %3852 = vrot.lane.b32.xlu0 %v2761, 1
      %v3853 = vpop.permute.xlu0 %3852
      %3854 = vrot.lane.b32.xlu0 %v2762, 1
      %v3855 = vpop.permute.xlu0 %3854
      %v3856 = vsel %vm1450, %v3851, %v3853
      %v3857 = vsel %vm1450, %v3853, %v3855
      %v3858 = vsel %vm1450, %v3855, %v3849
      %v3864 = vsel %vm1457, %v3849, %v3851
      %v3866 = vld [vmem:[%s1462] ss:$8 sm:$0xf]
      %v3868 = vlaneseq
      %v3869 = vshrl.u32 %v3868, 7
      %v3870 = vsub.s32 0, %v3869
      %v3871 = vrot.slane %v3866, %v3870
      %v3872 = vlaneseq
      %v3873 = vshrl.u32 %v3872, 7
      %v3874 = vsub.s32 1, %v3873
      %v3875 = vrot.slane %v3866, %v3874
      %v3876 = vlaneseq
      %v3877 = vshrl.u32 %v3876, 7
      %v3878 = vsub.s32 2, %v3877
      %v3879 = vrot.slane %v3866, %v3878
      %v3880 = vlaneseq
      %v3881 = vshrl.u32 %v3880, 7
      %v3882 = vsub.s32 3, %v3881
      %v3883 = vrot.slane %v3866, %v3882
      %v3888 = vpack.c.bf16 %v3871, %v3871
      %v3889 = vpack.c.bf16 %v3875, %v3875
      %v3890 = vpack.c.bf16 %v3879, %v3879
      %v3891 = vpack.c.bf16 %v3883, %v3883
      %v3893 = vpack.i.b16 %v3888, %v3888
      %v3895 = vlaneseq
      %v3896 = vshrl.u32 %v3895, 7
      %v3897 = vsub.s32 0, %v3896
      %v3898 = vrot.slane %v3893, %v3897
      %v3900 = vpack.i.b16 %v3889, %v3889
      %v3902 = vlaneseq
      %v3903 = vshrl.u32 %v3902, 7
      %v3904 = vsub.s32 0, %v3903
      %v3905 = vrot.slane %v3900, %v3904
      %v3907 = vpack.i.b16 %v3890, %v3890
      %v3909 = vlaneseq
      %v3910 = vshrl.u32 %v3909, 7
      %v3911 = vsub.s32 0, %v3910
      %v3912 = vrot.slane %v3907, %v3911
      %v3914 = vpack.i.b16 %v3891, %v3891
      %v3916 = vlaneseq
      %v3917 = vshrl.u32 %v3916, 7
      %v3918 = vsub.s32 0, %v3917
      %v3919 = vrot.slane %v3914, %v3918
      %v3920 = vmul.bf16 %v3864, %v3898
      %v3921 = vmul.bf16 %v3856, %v3905
      %v3922 = vmul.bf16 %v3857, %v3912
      %v3923 = vmul.bf16 %v3858, %v3919
      %v3924 = vrot.slane %v2760, 4
      %v3925 = vrot.slane %v2761, 4
      %v3926 = vrot.slane %v2762, 4
      %v3927 = vrot.slane %v2763, 4
      %v3930 = vsel %vm664, %v3920, %v3924
      %v3934 = vsel %vm664, %v3921, %v3925
      %v3938 = vsel %vm664, %v3922, %v3926
      %v3942 = vsel %vm664, %v3923, %v3927
      %3944 = vst [vmem:[#allocation2 + $0xc0] sm:$0xff] %v3930
      %3945 = vst [vmem:[#allocation2 + $0xc8] sm:$0xff] %v3934
      %3946 = vst [vmem:[#allocation2 + $0xd0] sm:$0xff] %v3938
      %3947 = vst [vmem:[#allocation2 + $0xd8] sm:$0xff] %v3942
      %3948 = vrot.lane.b32.xlu0 %v2760, 127
      %v3949 = vpop.permute.xlu0 %3948
      %3950 = vrot.lane.b32.xlu0 %v2761, 127
      %v3951 = vpop.permute.xlu0 %3950
      %3952 = vrot.lane.b32.xlu0 %v2762, 127
      %v3953 = vpop.permute.xlu0 %3952
      %3954 = vrot.lane.b32.xlu0 %v2763, 127
      %v3955 = vpop.permute.xlu0 %3954
      %v3956 = vsel %vm1529, %v3949, %v3951
      %v3957 = vsel %vm1529, %v3951, %v3953
      %v3958 = vsel %vm1529, %v3953, %v3955
      %v3964 = vsel %vm1536, %v3955, %v3949
      %v3966 = vld [vmem:[%s1541] ss:$8 sm:$0xf]
      %v3968 = vlaneseq
      %v3969 = vshrl.u32 %v3968, 7
      %v3970 = vsub.s32 0, %v3969
      %v3971 = vrot.slane %v3966, %v3970
      %v3972 = vlaneseq
      %v3973 = vshrl.u32 %v3972, 7
      %v3974 = vsub.s32 1, %v3973
      %v3975 = vrot.slane %v3966, %v3974
      %v3976 = vlaneseq
      %v3977 = vshrl.u32 %v3976, 7
      %v3978 = vsub.s32 2, %v3977
      %v3979 = vrot.slane %v3966, %v3978
      %v3980 = vlaneseq
      %v3981 = vshrl.u32 %v3980, 7
      %v3982 = vsub.s32 3, %v3981
      %v3983 = vrot.slane %v3966, %v3982
      %v3988 = vpack.c.bf16 %v3971, %v3971
      %v3989 = vpack.c.bf16 %v3975, %v3975
      %v3990 = vpack.c.bf16 %v3979, %v3979
      %v3991 = vpack.c.bf16 %v3983, %v3983
      %v3993 = vpack.i.b16 %v3988, %v3988
      %v3995 = vlaneseq
      %v3996 = vshrl.u32 %v3995, 7
      %v3997 = vsub.s32 0, %v3996
      %v3998 = vrot.slane %v3993, %v3997
      %v4000 = vpack.i.b16 %v3989, %v3989
      %v4002 = vlaneseq
      %v4003 = vshrl.u32 %v4002, 7
      %v4004 = vsub.s32 0, %v4003
      %v4005 = vrot.slane %v4000, %v4004
      %v4007 = vpack.i.b16 %v3990, %v3990
      %v4009 = vlaneseq
      %v4010 = vshrl.u32 %v4009, 7
      %v4011 = vsub.s32 0, %v4010
      %v4012 = vrot.slane %v4007, %v4011
      %v4014 = vpack.i.b16 %v3991, %v3991
      %v4016 = vlaneseq
      %v4017 = vshrl.u32 %v4016, 7
      %v4018 = vsub.s32 0, %v4017
      %v4019 = vrot.slane %v4014, %v4018
      %v4020 = vmul.bf16 %v3956, %v3998
      %v4021 = vmul.bf16 %v3957, %v4005
      %v4022 = vmul.bf16 %v3958, %v4012
      %v4023 = vmul.bf16 %v3964, %v4019
      %4024 = vrot.lane.b32.xlu0 %v2760, 121
      %v4025 = vpop.permute.xlu0 %4024
      %4026 = vrot.lane.b32.xlu0 %v2761, 121
      %v4027 = vpop.permute.xlu0 %4026
      %4028 = vrot.lane.b32.xlu0 %v2762, 121
      %v4029 = vpop.permute.xlu0 %4028
      %4030 = vrot.lane.b32.xlu0 %v2763, 121
      %v4031 = vpop.permute.xlu0 %4030
      %v4032 = vsel %vm1608, %v4025, %v4027
      %v4033 = vsel %vm1608, %v4027, %v4029
      %v4034 = vsel %vm1608, %v4029, %v4031
      %v4040 = vsel %vm1615, %v4031, %v4025
      %v4042 = vld [vmem:[%s1620] ss:$8 sm:$0xf]
      %v4044 = vlaneseq
      %v4045 = vshrl.u32 %v4044, 7
      %v4046 = vsub.s32 0, %v4045
      %v4047 = vrot.slane %v4042, %v4046
      %v4048 = vlaneseq
      %v4049 = vshrl.u32 %v4048, 7
      %v4050 = vsub.s32 1, %v4049
      %v4051 = vrot.slane %v4042, %v4050
      %v4052 = vlaneseq
      %v4053 = vshrl.u32 %v4052, 7
      %v4054 = vsub.s32 2, %v4053
      %v4055 = vrot.slane %v4042, %v4054
      %v4056 = vlaneseq
      %v4057 = vshrl.u32 %v4056, 7
      %v4058 = vsub.s32 3, %v4057
      %v4059 = vrot.slane %v4042, %v4058
      %v4064 = vpack.c.bf16 %v4047, %v4047
      %v4065 = vpack.c.bf16 %v4051, %v4051
      %v4066 = vpack.c.bf16 %v4055, %v4055
      %v4067 = vpack.c.bf16 %v4059, %v4059
      %v4069 = vpack.i.b16 %v4064, %v4064
      %v4071 = vlaneseq
      %v4072 = vshrl.u32 %v4071, 7
      %v4073 = vsub.s32 0, %v4072
      %v4074 = vrot.slane %v4069, %v4073
      %v4076 = vpack.i.b16 %v4065, %v4065
      %v4078 = vlaneseq
      %v4079 = vshrl.u32 %v4078, 7
      %v4080 = vsub.s32 0, %v4079
      %v4081 = vrot.slane %v4076, %v4080
      %v4083 = vpack.i.b16 %v4066, %v4066
      %v4085 = vlaneseq
      %v4086 = vshrl.u32 %v4085, 7
      %v4087 = vsub.s32 0, %v4086
      %v4088 = vrot.slane %v4083, %v4087
      %v4090 = vpack.i.b16 %v4067, %v4067
      %v4092 = vlaneseq
      %v4093 = vshrl.u32 %v4092, 7
      %v4094 = vsub.s32 0, %v4093
      %v4095 = vrot.slane %v4090, %v4094
      %v4096 = vmul.bf16 %v4032, %v4074
      %v4097 = vmul.bf16 %v4033, %v4081
      %v4098 = vmul.bf16 %v4034, %v4088
      %v4099 = vmul.bf16 %v4040, %v4095
      %v4104 = vrot.slane %v4096, 4
      %v4105 = vrot.slane %v4097, 4
      %v4106 = vrot.slane %v4098, 4
      %v4107 = vrot.slane %v4099, 4
      %v4110 = vsel %vm664, %v4020, %v4104
      %v4114 = vsel %vm664, %v4021, %v4105
      %v4118 = vsel %vm664, %v4022, %v4106
      %v4122 = vsel %vm664, %v4023, %v4107
      %4124 = vst [vmem:[#allocation2 + $0xe0] sm:$0xff] %v4110
      %4125 = vst [vmem:[#allocation2 + $0xe8] sm:$0xff] %v4114
      %4126 = vst [vmem:[#allocation2 + $0xf0] sm:$0xff] %v4118
      %4127 = vst [vmem:[#allocation2 + $0xf8] sm:$0xff] %v4122
      %4128 = vrot.lane.b32.xlu0 %v2760, 120
      %v4129 = vpop.permute.xlu0 %4128
      %4130 = vrot.lane.b32.xlu0 %v2761, 120
      %v4131 = vpop.permute.xlu0 %4130
      %4132 = vrot.lane.b32.xlu0 %v2762, 120
      %v4133 = vpop.permute.xlu0 %4132
      %4134 = vrot.lane.b32.xlu0 %v2763, 120
      %v4135 = vpop.permute.xlu0 %4134
      %v4136 = vsel %vm1748, %v4129, %v4131
      %v4137 = vsel %vm1748, %v4131, %v4133
      %v4138 = vsel %vm1748, %v4133, %v4135
      %v4144 = vsel %vm1755, %v4135, %v4129
      %v4146 = vld [vmem:[%s1760] ss:$8 sm:$0xf]
      %v4148 = vlaneseq
      %v4149 = vshrl.u32 %v4148, 7
      %v4150 = vsub.s32 0, %v4149
      %v4151 = vrot.slane %v4146, %v4150
      %v4152 = vlaneseq
      %v4153 = vshrl.u32 %v4152, 7
      %v4154 = vsub.s32 1, %v4153
      %v4155 = vrot.slane %v4146, %v4154
      %v4156 = vlaneseq
      %v4157 = vshrl.u32 %v4156, 7
      %v4158 = vsub.s32 2, %v4157
      %v4159 = vrot.slane %v4146, %v4158
      %v4160 = vlaneseq
      %v4161 = vshrl.u32 %v4160, 7
      %v4162 = vsub.s32 3, %v4161
      %v4163 = vrot.slane %v4146, %v4162
      %v4168 = vpack.c.bf16 %v4151, %v4151
      %v4169 = vpack.c.bf16 %v4155, %v4155
      %v4170 = vpack.c.bf16 %v4159, %v4159
      %v4171 = vpack.c.bf16 %v4163, %v4163
      %v4173 = vpack.i.b16 %v4168, %v4168
      %v4175 = vlaneseq
      %v4176 = vshrl.u32 %v4175, 7
      %v4177 = vsub.s32 0, %v4176
      %v4178 = vrot.slane %v4173, %v4177
      %v4180 = vpack.i.b16 %v4169, %v4169
      %v4182 = vlaneseq
      %v4183 = vshrl.u32 %v4182, 7
      %v4184 = vsub.s32 0, %v4183
      %v4185 = vrot.slane %v4180, %v4184
      %v4187 = vpack.i.b16 %v4170, %v4170
      %v4189 = vlaneseq
      %v4190 = vshrl.u32 %v4189, 7
      %v4191 = vsub.s32 0, %v4190
      %v4192 = vrot.slane %v4187, %v4191
      %v4194 = vpack.i.b16 %v4171, %v4171
      %v4196 = vlaneseq
      %v4197 = vshrl.u32 %v4196, 7
      %v4198 = vsub.s32 0, %v4197
      %v4199 = vrot.slane %v4194, %v4198
      %v4200 = vmul.bf16 %v4136, %v4178
      %v4201 = vmul.bf16 %v4137, %v4185
      %v4202 = vmul.bf16 %v4138, %v4192
      %v4203 = vmul.bf16 %v4144, %v4199
      %4204 = vrot.lane.b32.xlu0 %v2760, 119
      %v4205 = vpop.permute.xlu0 %4204
      %4206 = vrot.lane.b32.xlu0 %v2761, 119
      %v4207 = vpop.permute.xlu0 %4206
      %4208 = vrot.lane.b32.xlu0 %v2762, 119
      %v4209 = vpop.permute.xlu0 %4208
      %4210 = vrot.lane.b32.xlu0 %v2763, 119
      %v4211 = vpop.permute.xlu0 %4210
      %v4212 = vsel %vm1827, %v4205, %v4207
      %v4213 = vsel %vm1827, %v4207, %v4209
      %v4214 = vsel %vm1827, %v4209, %v4211
      %v4220 = vsel %vm1834, %v4211, %v4205
      %v4222 = vld [vmem:[%s1839] ss:$8 sm:$0xf]
      %v4224 = vlaneseq
      %v4225 = vshrl.u32 %v4224, 7
      %v4226 = vsub.s32 0, %v4225
      %v4227 = vrot.slane %v4222, %v4226
      %v4228 = vlaneseq
      %v4229 = vshrl.u32 %v4228, 7
      %v4230 = vsub.s32 1, %v4229
      %v4231 = vrot.slane %v4222, %v4230
      %v4232 = vlaneseq
      %v4233 = vshrl.u32 %v4232, 7
      %v4234 = vsub.s32 2, %v4233
      %v4235 = vrot.slane %v4222, %v4234
      %v4236 = vlaneseq
      %v4237 = vshrl.u32 %v4236, 7
      %v4238 = vsub.s32 3, %v4237
      %v4239 = vrot.slane %v4222, %v4238
      %v4244 = vpack.c.bf16 %v4227, %v4227
      %v4245 = vpack.c.bf16 %v4231, %v4231
      %v4246 = vpack.c.bf16 %v4235, %v4235
      %v4247 = vpack.c.bf16 %v4239, %v4239
      %v4249 = vpack.i.b16 %v4244, %v4244
      %v4251 = vlaneseq
      %v4252 = vshrl.u32 %v4251, 7
      %v4253 = vsub.s32 0, %v4252
      %v4254 = vrot.slane %v4249, %v4253
      %v4256 = vpack.i.b16 %v4245, %v4245
      %v4258 = vlaneseq
      %v4259 = vshrl.u32 %v4258, 7
      %v4260 = vsub.s32 0, %v4259
      %v4261 = vrot.slane %v4256, %v4260
      %v4263 = vpack.i.b16 %v4246, %v4246
      %v4265 = vlaneseq
      %v4266 = vshrl.u32 %v4265, 7
      %v4267 = vsub.s32 0, %v4266
      %v4268 = vrot.slane %v4263, %v4267
      %v4270 = vpack.i.b16 %v4247, %v4247
      %v4272 = vlaneseq
      %v4273 = vshrl.u32 %v4272, 7
      %v4274 = vsub.s32 0, %v4273
      %v4275 = vrot.slane %v4270, %v4274
      %v4276 = vmul.bf16 %v4212, %v4254
      %v4277 = vmul.bf16 %v4213, %v4261
      %v4278 = vmul.bf16 %v4214, %v4268
      %v4279 = vmul.bf16 %v4220, %v4275
      %v4284 = vrot.slane %v4276, 4
      %v4285 = vrot.slane %v4277, 4
      %v4286 = vrot.slane %v4278, 4
      %v4287 = vrot.slane %v4279, 4
      %v4290 = vsel %vm664, %v4200, %v4284
      %v4294 = vsel %vm664, %v4201, %v4285
      %v4298 = vsel %vm664, %v4202, %v4286
      %v4302 = vsel %vm664, %v4203, %v4287
      %4304 = vst [vmem:[#allocation2 + $0x100] sm:$0xff] %v4290
      %4305 = vst [vmem:[#allocation2 + $0x108] sm:$0xff] %v4294
      %4306 = vst [vmem:[#allocation2 + $0x110] sm:$0xff] %v4298
      %4307 = vst [vmem:[#allocation2 + $0x118] sm:$0xff] %v4302
      %v4308 = vld [vmem:[%s1898] ss:$8 sm:$0xf]
      %v4310 = vlaneseq
      %v4311 = vshrl.u32 %v4310, 7
      %v4312 = vsub.s32 0, %v4311
      %v4313 = vrot.slane %v4308, %v4312
      %v4314 = vlaneseq
      %v4315 = vshrl.u32 %v4314, 7
      %v4316 = vsub.s32 1, %v4315
      %v4317 = vrot.slane %v4308, %v4316
      %v4318 = vlaneseq
      %v4319 = vshrl.u32 %v4318, 7
      %v4320 = vsub.s32 2, %v4319
      %v4321 = vrot.slane %v4308, %v4320
      %v4322 = vlaneseq
      %v4323 = vshrl.u32 %v4322, 7
      %v4324 = vsub.s32 3, %v4323
      %v4325 = vrot.slane %v4308, %v4324
      %v4330 = vpack.c.bf16 %v4313, %v4313
      %v4331 = vpack.c.bf16 %v4317, %v4317
      %v4332 = vpack.c.bf16 %v4321, %v4321
      %v4333 = vpack.c.bf16 %v4325, %v4325
      %v4335 = vpack.i.b16 %v4330, %v4330
      %v4337 = vlaneseq
      %v4338 = vshrl.u32 %v4337, 7
      %v4339 = vsub.s32 0, %v4338
      %v4340 = vrot.slane %v4335, %v4339
      %v4342 = vpack.i.b16 %v4331, %v4331
      %v4344 = vlaneseq
      %v4345 = vshrl.u32 %v4344, 7
      %v4346 = vsub.s32 0, %v4345
      %v4347 = vrot.slane %v4342, %v4346
      %v4349 = vpack.i.b16 %v4332, %v4332
      %v4351 = vlaneseq
      %v4352 = vshrl.u32 %v4351, 7
      %v4353 = vsub.s32 0, %v4352
      %v4354 = vrot.slane %v4349, %v4353
      %v4356 = vpack.i.b16 %v4333, %v4333
      %v4358 = vlaneseq
      %v4359 = vshrl.u32 %v4358, 7
      %v4360 = vsub.s32 0, %v4359
      %v4361 = vrot.slane %v4356, %v4360
      %v4362 = vmul.bf16 %v2776, %v4340
      %v4363 = vmul.bf16 %v2777, %v4347
      %v4364 = vmul.bf16 %v2778, %v4354
      %v4365 = vmul.bf16 %v2784, %v4361
      %v4366 = vld [vmem:[%s1957] ss:$8 sm:$0xf]
      %v4368 = vlaneseq
      %v4369 = vshrl.u32 %v4368, 7
      %v4370 = vsub.s32 0, %v4369
      %v4371 = vrot.slane %v4366, %v4370
      %v4372 = vlaneseq
      %v4373 = vshrl.u32 %v4372, 7
      %v4374 = vsub.s32 1, %v4373
      %v4375 = vrot.slane %v4366, %v4374
      %v4376 = vlaneseq
      %v4377 = vshrl.u32 %v4376, 7
      %v4378 = vsub.s32 2, %v4377
      %v4379 = vrot.slane %v4366, %v4378
      %v4380 = vlaneseq
      %v4381 = vshrl.u32 %v4380, 7
      %v4382 = vsub.s32 3, %v4381
      %v4383 = vrot.slane %v4366, %v4382
      %v4388 = vpack.c.bf16 %v4371, %v4371
      %v4389 = vpack.c.bf16 %v4375, %v4375
      %v4390 = vpack.c.bf16 %v4379, %v4379
      %v4391 = vpack.c.bf16 %v4383, %v4383
      %v4393 = vpack.i.b16 %v4388, %v4388
      %v4395 = vlaneseq
      %v4396 = vshrl.u32 %v4395, 7
      %v4397 = vsub.s32 0, %v4396
      %v4398 = vrot.slane %v4393, %v4397
      %v4400 = vpack.i.b16 %v4389, %v4389
      %v4402 = vlaneseq
      %v4403 = vshrl.u32 %v4402, 7
      %v4404 = vsub.s32 0, %v4403
      %v4405 = vrot.slane %v4400, %v4404
      %v4407 = vpack.i.b16 %v4390, %v4390
      %v4409 = vlaneseq
      %v4410 = vshrl.u32 %v4409, 7
      %v4411 = vsub.s32 0, %v4410
      %v4412 = vrot.slane %v4407, %v4411
      %v4414 = vpack.i.b16 %v4391, %v4391
      %v4416 = vlaneseq
      %v4417 = vshrl.u32 %v4416, 7
      %v4418 = vsub.s32 0, %v4417
      %v4419 = vrot.slane %v4414, %v4418
      %v4420 = vmul.bf16 %v2852, %v4398
      %v4421 = vmul.bf16 %v2853, %v4405
      %v4422 = vmul.bf16 %v2854, %v4412
      %v4423 = vmul.bf16 %v2860, %v4419
      %v4428 = vrot.slane %v4420, 4
      %v4429 = vrot.slane %v4421, 4
      %v4430 = vrot.slane %v4422, 4
      %v4431 = vrot.slane %v4423, 4
      %v4434 = vsel %vm664, %v4362, %v4428
      %v4438 = vsel %vm664, %v4363, %v4429
      %v4442 = vsel %vm664, %v4364, %v4430
      %v4446 = vsel %vm664, %v4365, %v4431
      %4448 = vst [vmem:[#allocation2 + $0x120] sm:$0xff] %v4434
      %4449 = vst [vmem:[#allocation2 + $0x128] sm:$0xff] %v4438
      %4450 = vst [vmem:[#allocation2 + $0x130] sm:$0xff] %v4442
      %4451 = vst [vmem:[#allocation2 + $0x138] sm:$0xff] %v4446
      %v4452 = vld [vmem:[%s2076] ss:$8 sm:$0xf]
      %v4454 = vlaneseq
      %v4455 = vshrl.u32 %v4454, 7
      %v4456 = vsub.s32 0, %v4455
      %v4457 = vrot.slane %v4452, %v4456
      %v4458 = vlaneseq
      %v4459 = vshrl.u32 %v4458, 7
      %v4460 = vsub.s32 1, %v4459
      %v4461 = vrot.slane %v4452, %v4460
      %v4462 = vlaneseq
      %v4463 = vshrl.u32 %v4462, 7
      %v4464 = vsub.s32 2, %v4463
      %v4465 = vrot.slane %v4452, %v4464
      %v4466 = vlaneseq
      %v4467 = vshrl.u32 %v4466, 7
      %v4468 = vsub.s32 3, %v4467
      %v4469 = vrot.slane %v4452, %v4468
      %v4474 = vpack.c.bf16 %v4457, %v4457
      %v4475 = vpack.c.bf16 %v4461, %v4461
      %v4476 = vpack.c.bf16 %v4465, %v4465
      %v4477 = vpack.c.bf16 %v4469, %v4469
      %v4479 = vpack.i.b16 %v4474, %v4474
      %v4481 = vlaneseq
      %v4482 = vshrl.u32 %v4481, 7
      %v4483 = vsub.s32 0, %v4482
      %v4484 = vrot.slane %v4479, %v4483
      %v4486 = vpack.i.b16 %v4475, %v4475
      %v4488 = vlaneseq
      %v4489 = vshrl.u32 %v4488, 7
      %v4490 = vsub.s32 0, %v4489
      %v4491 = vrot.slane %v4486, %v4490
      %v4493 = vpack.i.b16 %v4476, %v4476
      %v4495 = vlaneseq
      %v4496 = vshrl.u32 %v4495, 7
      %v4497 = vsub.s32 0, %v4496
      %v4498 = vrot.slane %v4493, %v4497
      %v4500 = vpack.i.b16 %v4477, %v4477
      %v4502 = vlaneseq
      %v4503 = vshrl.u32 %v4502, 7
      %v4504 = vsub.s32 0, %v4503
      %v4505 = vrot.slane %v4500, %v4504
      %v4506 = vmul.bf16 %v2956, %v4484
      %v4507 = vmul.bf16 %v2957, %v4491
      %v4508 = vmul.bf16 %v2958, %v4498
      %v4509 = vmul.bf16 %v2964, %v4505
      %v4510 = vld [vmem:[%s2135] ss:$8 sm:$0xf]
      %v4512 = vlaneseq
      %v4513 = vshrl.u32 %v4512, 7
      %v4514 = vsub.s32 0, %v4513
      %v4515 = vrot.slane %v4510, %v4514
      %v4516 = vlaneseq
      %v4517 = vshrl.u32 %v4516, 7
      %v4518 = vsub.s32 1, %v4517
      %v4519 = vrot.slane %v4510, %v4518
      %v4520 = vlaneseq
      %v4521 = vshrl.u32 %v4520, 7
      %v4522 = vsub.s32 2, %v4521
      %v4523 = vrot.slane %v4510, %v4522
      %v4524 = vlaneseq
      %v4525 = vshrl.u32 %v4524, 7
      %v4526 = vsub.s32 3, %v4525
      %v4527 = vrot.slane %v4510, %v4526
      %v4532 = vpack.c.bf16 %v4515, %v4515
      %v4533 = vpack.c.bf16 %v4519, %v4519
      %v4534 = vpack.c.bf16 %v4523, %v4523
      %v4535 = vpack.c.bf16 %v4527, %v4527
      %v4537 = vpack.i.b16 %v4532, %v4532
      %v4539 = vlaneseq
      %v4540 = vshrl.u32 %v4539, 7
      %v4541 = vsub.s32 0, %v4540
      %v4542 = vrot.slane %v4537, %v4541
      %v4544 = vpack.i.b16 %v4533, %v4533
      %v4546 = vlaneseq
      %v4547 = vshrl.u32 %v4546, 7
      %v4548 = vsub.s32 0, %v4547
      %v4549 = vrot.slane %v4544, %v4548
      %v4551 = vpack.i.b16 %v4534, %v4534
      %v4553 = vlaneseq
      %v4554 = vshrl.u32 %v4553, 7
      %v4555 = vsub.s32 0, %v4554
      %v4556 = vrot.slane %v4551, %v4555
      %v4558 = vpack.i.b16 %v4535, %v4535
      %v4560 = vlaneseq
      %v4561 = vshrl.u32 %v4560, 7
      %v4562 = vsub.s32 0, %v4561
      %v4563 = vrot.slane %v4558, %v4562
      %v4564 = vmul.bf16 %v3032, %v4542
      %v4565 = vmul.bf16 %v3033, %v4549
      %v4566 = vmul.bf16 %v3034, %v4556
      %v4567 = vmul.bf16 %v3040, %v4563
      %v4572 = vrot.slane %v4564, 4
      %v4573 = vrot.slane %v4565, 4
      %v4574 = vrot.slane %v4566, 4
      %v4575 = vrot.slane %v4567, 4
      %v4578 = vsel %vm664, %v4506, %v4572
      %v4582 = vsel %vm664, %v4507, %v4573
      %v4586 = vsel %vm664, %v4508, %v4574
      %v4590 = vsel %vm664, %v4509, %v4575
      %4592 = vst [vmem:[#allocation2 + $0x140] sm:$0xff] %v4578
      %4593 = vst [vmem:[#allocation2 + $0x148] sm:$0xff] %v4582
      %4594 = vst [vmem:[#allocation2 + $0x150] sm:$0xff] %v4586
      %4595 = vst [vmem:[#allocation2 + $0x158] sm:$0xff] %v4590
      %v4596 = vld [vmem:[%s2194] ss:$8 sm:$0xf]
      %v4598 = vlaneseq
      %v4599 = vshrl.u32 %v4598, 7
      %v4600 = vsub.s32 0, %v4599
      %v4601 = vrot.slane %v4596, %v4600
      %v4602 = vlaneseq
      %v4603 = vshrl.u32 %v4602, 7
      %v4604 = vsub.s32 1, %v4603
      %v4605 = vrot.slane %v4596, %v4604
      %v4606 = vlaneseq
      %v4607 = vshrl.u32 %v4606, 7
      %v4608 = vsub.s32 2, %v4607
      %v4609 = vrot.slane %v4596, %v4608
      %v4610 = vlaneseq
      %v4611 = vshrl.u32 %v4610, 7
      %v4612 = vsub.s32 3, %v4611
      %v4613 = vrot.slane %v4596, %v4612
      %v4618 = vpack.c.bf16 %v4601, %v4601
      %v4619 = vpack.c.bf16 %v4605, %v4605
      %v4620 = vpack.c.bf16 %v4609, %v4609
      %v4621 = vpack.c.bf16 %v4613, %v4613
      %v4623 = vpack.i.b16 %v4618, %v4618
      %v4625 = vlaneseq
      %v4626 = vshrl.u32 %v4625, 7
      %v4627 = vsub.s32 0, %v4626
      %v4628 = vrot.slane %v4623, %v4627
      %v4630 = vpack.i.b16 %v4619, %v4619
      %v4632 = vlaneseq
      %v4633 = vshrl.u32 %v4632, 7
      %v4634 = vsub.s32 0, %v4633
      %v4635 = vrot.slane %v4630, %v4634
      %v4637 = vpack.i.b16 %v4620, %v4620
      %v4639 = vlaneseq
      %v4640 = vshrl.u32 %v4639, 7
      %v4641 = vsub.s32 0, %v4640
      %v4642 = vrot.slane %v4637, %v4641
      %v4644 = vpack.i.b16 %v4621, %v4621
      %v4646 = vlaneseq
      %v4647 = vshrl.u32 %v4646, 7
      %v4648 = vsub.s32 0, %v4647
      %v4649 = vrot.slane %v4644, %v4648
      %v4650 = vmul.bf16 %v3136, %v4628
      %v4651 = vmul.bf16 %v3137, %v4635
      %v4652 = vmul.bf16 %v3138, %v4642
      %v4653 = vmul.bf16 %v3144, %v4649
      %v4654 = vld [vmem:[%s2253] ss:$8 sm:$0xf]
      %v4656 = vlaneseq
      %v4657 = vshrl.u32 %v4656, 7
      %v4658 = vsub.s32 0, %v4657
      %v4659 = vrot.slane %v4654, %v4658
      %v4660 = vlaneseq
      %v4661 = vshrl.u32 %v4660, 7
      %v4662 = vsub.s32 1, %v4661
      %v4663 = vrot.slane %v4654, %v4662
      %v4664 = vlaneseq
      %v4665 = vshrl.u32 %v4664, 7
      %v4666 = vsub.s32 2, %v4665
      %v4667 = vrot.slane %v4654, %v4666
      %v4668 = vlaneseq
      %v4669 = vshrl.u32 %v4668, 7
      %v4670 = vsub.s32 3, %v4669
      %v4671 = vrot.slane %v4654, %v4670
      %v4676 = vpack.c.bf16 %v4659, %v4659
      %v4677 = vpack.c.bf16 %v4663, %v4663
      %v4678 = vpack.c.bf16 %v4667, %v4667
      %v4679 = vpack.c.bf16 %v4671, %v4671
      %v4681 = vpack.i.b16 %v4676, %v4676
      %v4683 = vlaneseq
      %v4684 = vshrl.u32 %v4683, 7
      %v4685 = vsub.s32 0, %v4684
      %v4686 = vrot.slane %v4681, %v4685
      %v4688 = vpack.i.b16 %v4677, %v4677
      %v4690 = vlaneseq
      %v4691 = vshrl.u32 %v4690, 7
      %v4692 = vsub.s32 0, %v4691
      %v4693 = vrot.slane %v4688, %v4692
      %v4695 = vpack.i.b16 %v4678, %v4678
      %v4697 = vlaneseq
      %v4698 = vshrl.u32 %v4697, 7
      %v4699 = vsub.s32 0, %v4698
      %v4700 = vrot.slane %v4695, %v4699
      %v4702 = vpack.i.b16 %v4679, %v4679
      %v4704 = vlaneseq
      %v4705 = vshrl.u32 %v4704, 7
      %v4706 = vsub.s32 0, %v4705
      %v4707 = vrot.slane %v4702, %v4706
      %v4708 = vmul.bf16 %v3212, %v4686
      %v4709 = vmul.bf16 %v3213, %v4693
      %v4710 = vmul.bf16 %v3214, %v4700
      %v4711 = vmul.bf16 %v3220, %v4707
      %v4716 = vrot.slane %v4708, 4
      %v4717 = vrot.slane %v4709, 4
      %v4718 = vrot.slane %v4710, 4
      %v4719 = vrot.slane %v4711, 4
      %v4722 = vsel %vm664, %v4650, %v4716
      %v4726 = vsel %vm664, %v4651, %v4717
      %v4730 = vsel %vm664, %v4652, %v4718
      %v4734 = vsel %vm664, %v4653, %v4719
      %4736 = vst [vmem:[#allocation2 + $0x160] sm:$0xff] %v4722
      %4737 = vst [vmem:[#allocation2 + $0x168] sm:$0xff] %v4726
      %4738 = vst [vmem:[#allocation2 + $0x170] sm:$0xff] %v4730
      %4739 = vst [vmem:[#allocation2 + $0x178] sm:$0xff] %v4734
      %v4740 = vld [vmem:[%s2372] ss:$8 sm:$0xf]
      %v4742 = vlaneseq
      %v4743 = vshrl.u32 %v4742, 7
      %v4744 = vsub.s32 0, %v4743
      %v4745 = vrot.slane %v4740, %v4744
      %v4746 = vlaneseq
      %v4747 = vshrl.u32 %v4746, 7
      %v4748 = vsub.s32 1, %v4747
      %v4749 = vrot.slane %v4740, %v4748
      %v4750 = vlaneseq
      %v4751 = vshrl.u32 %v4750, 7
      %v4752 = vsub.s32 2, %v4751
      %v4753 = vrot.slane %v4740, %v4752
      %v4754 = vlaneseq
      %v4755 = vshrl.u32 %v4754, 7
      %v4756 = vsub.s32 3, %v4755
      %v4757 = vrot.slane %v4740, %v4756
      %v4762 = vpack.c.bf16 %v4745, %v4745
      %v4763 = vpack.c.bf16 %v4749, %v4749
      %v4764 = vpack.c.bf16 %v4753, %v4753
      %v4765 = vpack.c.bf16 %v4757, %v4757
      %v4767 = vpack.i.b16 %v4762, %v4762
      %v4769 = vlaneseq
      %v4770 = vshrl.u32 %v4769, 7
      %v4771 = vsub.s32 0, %v4770
      %v4772 = vrot.slane %v4767, %v4771
      %v4774 = vpack.i.b16 %v4763, %v4763
      %v4776 = vlaneseq
      %v4777 = vshrl.u32 %v4776, 7
      %v4778 = vsub.s32 0, %v4777
      %v4779 = vrot.slane %v4774, %v4778
      %v4781 = vpack.i.b16 %v4764, %v4764
      %v4783 = vlaneseq
      %v4784 = vshrl.u32 %v4783, 7
      %v4785 = vsub.s32 0, %v4784
      %v4786 = vrot.slane %v4781, %v4785
      %v4788 = vpack.i.b16 %v4765, %v4765
      %v4790 = vlaneseq
      %v4791 = vshrl.u32 %v4790, 7
      %v4792 = vsub.s32 0, %v4791
      %v4793 = vrot.slane %v4788, %v4792
      %v4794 = vmul.bf16 %v3316, %v4772
      %v4795 = vmul.bf16 %v3317, %v4779
      %v4796 = vmul.bf16 %v3318, %v4786
      %v4797 = vmul.bf16 %v3324, %v4793
      %v4798 = vld [vmem:[%s2431] ss:$8 sm:$0xf]
      %v4800 = vlaneseq
      %v4801 = vshrl.u32 %v4800, 7
      %v4802 = vsub.s32 0, %v4801
      %v4803 = vrot.slane %v4798, %v4802
      %v4804 = vlaneseq
      %v4805 = vshrl.u32 %v4804, 7
      %v4806 = vsub.s32 1, %v4805
      %v4807 = vrot.slane %v4798, %v4806
      %v4808 = vlaneseq
      %v4809 = vshrl.u32 %v4808, 7
      %v4810 = vsub.s32 2, %v4809
      %v4811 = vrot.slane %v4798, %v4810
      %v4812 = vlaneseq
      %v4813 = vshrl.u32 %v4812, 7
      %v4814 = vsub.s32 3, %v4813
      %v4815 = vrot.slane %v4798, %v4814
      %v4820 = vpack.c.bf16 %v4803, %v4803
      %v4821 = vpack.c.bf16 %v4807, %v4807
      %v4822 = vpack.c.bf16 %v4811, %v4811
      %v4823 = vpack.c.bf16 %v4815, %v4815
      %v4825 = vpack.i.b16 %v4820, %v4820
      %v4827 = vlaneseq
      %v4828 = vshrl.u32 %v4827, 7
      %v4829 = vsub.s32 0, %v4828
      %v4830 = vrot.slane %v4825, %v4829
      %v4832 = vpack.i.b16 %v4821, %v4821
      %v4834 = vlaneseq
      %v4835 = vshrl.u32 %v4834, 7
      %v4836 = vsub.s32 0, %v4835
      %v4837 = vrot.slane %v4832, %v4836
      %v4839 = vpack.i.b16 %v4822, %v4822
      %v4841 = vlaneseq
      %v4842 = vshrl.u32 %v4841, 7
      %v4843 = vsub.s32 0, %v4842
      %v4844 = vrot.slane %v4839, %v4843
      %v4846 = vpack.i.b16 %v4823, %v4823
      %v4848 = vlaneseq
      %v4849 = vshrl.u32 %v4848, 7
      %v4850 = vsub.s32 0, %v4849
      %v4851 = vrot.slane %v4846, %v4850
      %v4852 = vmul.bf16 %v3392, %v4830
      %v4853 = vmul.bf16 %v3393, %v4837
      %v4854 = vmul.bf16 %v3394, %v4844
      %v4855 = vmul.bf16 %v3400, %v4851
      %v4860 = vrot.slane %v4852, 4
      %v4861 = vrot.slane %v4853, 4
      %v4862 = vrot.slane %v4854, 4
      %v4863 = vrot.slane %v4855, 4
      %v4866 = vsel %vm664, %v4794, %v4860
      %v4870 = vsel %vm664, %v4795, %v4861
      %v4874 = vsel %vm664, %v4796, %v4862
      %v4878 = vsel %vm664, %v4797, %v4863
      %4880 = vst [vmem:[#allocation2 + $0x180] sm:$0xff] %v4866
      %4881 = vst [vmem:[#allocation2 + $0x188] sm:$0xff] %v4870
      %4882 = vst [vmem:[#allocation2 + $0x190] sm:$0xff] %v4874
      %4883 = vst [vmem:[#allocation2 + $0x198] sm:$0xff] %v4878
      %v4884 = vld [vmem:[%s2490] ss:$8 sm:$0xf]
      %v4886 = vlaneseq
      %v4887 = vshrl.u32 %v4886, 7
      %v4888 = vsub.s32 0, %v4887
      %v4889 = vrot.slane %v4884, %v4888
      %v4890 = vlaneseq
      %v4891 = vshrl.u32 %v4890, 7
      %v4892 = vsub.s32 1, %v4891
      %v4893 = vrot.slane %v4884, %v4892
      %v4894 = vlaneseq
      %v4895 = vshrl.u32 %v4894, 7
      %v4896 = vsub.s32 2, %v4895
      %v4897 = vrot.slane %v4884, %v4896
      %v4898 = vlaneseq
      %v4899 = vshrl.u32 %v4898, 7
      %v4900 = vsub.s32 3, %v4899
      %v4901 = vrot.slane %v4884, %v4900
      %v4906 = vpack.c.bf16 %v4889, %v4889
      %v4907 = vpack.c.bf16 %v4893, %v4893
      %v4908 = vpack.c.bf16 %v4897, %v4897
      %v4909 = vpack.c.bf16 %v4901, %v4901
      %v4911 = vpack.i.b16 %v4906, %v4906
      %v4913 = vlaneseq
      %v4914 = vshrl.u32 %v4913, 7
      %v4915 = vsub.s32 0, %v4914
      %v4916 = vrot.slane %v4911, %v4915
      %v4918 = vpack.i.b16 %v4907, %v4907
      %v4920 = vlaneseq
      %v4921 = vshrl.u32 %v4920, 7
      %v4922 = vsub.s32 0, %v4921
      %v4923 = vrot.slane %v4918, %v4922
      %v4925 = vpack.i.b16 %v4908, %v4908
      %v4927 = vlaneseq
      %v4928 = vshrl.u32 %v4927, 7
      %v4929 = vsub.s32 0, %v4928
      %v4930 = vrot.slane %v4925, %v4929
      %v4932 = vpack.i.b16 %v4909, %v4909
      %v4934 = vlaneseq
      %v4935 = vshrl.u32 %v4934, 7
      %v4936 = vsub.s32 0, %v4935
      %v4937 = vrot.slane %v4932, %v4936
      %v4938 = vmul.bf16 %v3496, %v4916
      %v4939 = vmul.bf16 %v3497, %v4923
      %v4940 = vmul.bf16 %v3498, %v4930
      %v4941 = vmul.bf16 %v3504, %v4937
      %v4943 = vsel %vm664, %v4938, 0
      %v4946 = vsel %vm664, %v4939, 0
      %v4949 = vsel %vm664, %v4940, 0
      %v4952 = vsel %vm664, %v4941, 0
      %4954 = vst [vmem:[#allocation2 + $0x1a0] sm:$0xff] %v4943
      %4955 = vst [vmem:[#allocation2 + $0x1a8] sm:$0xff] %v4946
      %4956 = vst [vmem:[#allocation2 + $0x1b0] sm:$0xff] %v4949
      %4957 = vst [vmem:[#allocation2 + $0x1b8] sm:$0xff] %v4952
      %v4958 = vld [vmem:[%s4] sm:$0xff]
      %v4959 = vld [vmem:[#allocation2] sm:$0xff]
      %v4960 = vld [vmem:[#allocation2 + $0x8] sm:$0xff]
      %v4961 = vld [vmem:[#allocation2 + $0x10] sm:$0xff]
      %v4962 = vld [vmem:[#allocation2 + $0x18] sm:$0xff]
      %v4963 = vld [vmem:[#allocation2 + $0x20] sm:$0xff]
      %v4964 = vld [vmem:[#allocation2 + $0x28] sm:$0xff]
      %v4965 = vld [vmem:[#allocation2 + $0x30] sm:$0xff]
      %v4966 = vld [vmem:[#allocation2 + $0x38] sm:$0xff]
      %v4967 = vld [vmem:[#allocation2 + $0x40] sm:$0xff]
      %v4968 = vld [vmem:[#allocation2 + $0x48] sm:$0xff]
      %v4969 = vld [vmem:[#allocation2 + $0x50] sm:$0xff]
      %v4970 = vld [vmem:[#allocation2 + $0x58] sm:$0xff]
      %v4971 = vld [vmem:[#allocation2 + $0x60] sm:$0xff]
      %v4972 = vld [vmem:[#allocation2 + $0x68] sm:$0xff]
      %v4973 = vld [vmem:[#allocation2 + $0x70] sm:$0xff]
      %v4974 = vld [vmem:[#allocation2 + $0x78] sm:$0xff]
      %v4975 = vld [vmem:[#allocation2 + $0x80] sm:$0xff]
      %v4976 = vld [vmem:[#allocation2 + $0x88] sm:$0xff]
      %v4977 = vld [vmem:[#allocation2 + $0x90] sm:$0xff]
      %v4978 = vld [vmem:[#allocation2 + $0x98] sm:$0xff]
      %v4979 = vld [vmem:[#allocation2 + $0xa0] sm:$0xff]
      %v4980 = vld [vmem:[#allocation2 + $0xa8] sm:$0xff]
      %v4981 = vld [vmem:[#allocation2 + $0xb0] sm:$0xff]
      %v4982 = vld [vmem:[#allocation2 + $0xb8] sm:$0xff]
      %v4983 = vld [vmem:[#allocation2 + $0xc0] sm:$0xff]
      %v4984 = vld [vmem:[#allocation2 + $0xc8] sm:$0xff]
      %v4985 = vld [vmem:[#allocation2 + $0xd0] sm:$0xff]
      %v4986 = vld [vmem:[#allocation2 + $0xd8] sm:$0xff]
      %v4987 = vld [vmem:[#allocation2 + $0xe0] sm:$0xff]
      %v4988 = vld [vmem:[#allocation2 + $0xe8] sm:$0xff]
      %v4989 = vld [vmem:[#allocation2 + $0xf0] sm:$0xff]
      %v4990 = vld [vmem:[#allocation2 + $0xf8] sm:$0xff]
      %v4991 = vld [vmem:[#allocation2 + $0x100] sm:$0xff]
      %v4992 = vld [vmem:[#allocation2 + $0x108] sm:$0xff]
      %v4993 = vld [vmem:[#allocation2 + $0x110] sm:$0xff]
      %v4994 = vld [vmem:[#allocation2 + $0x118] sm:$0xff]
      %v4995 = vld [vmem:[#allocation2 + $0x120] sm:$0xff]
      %v4996 = vld [vmem:[#allocation2 + $0x128] sm:$0xff]
      %v4997 = vld [vmem:[#allocation2 + $0x130] sm:$0xff]
      %v4998 = vld [vmem:[#allocation2 + $0x138] sm:$0xff]
      %v4999 = vld [vmem:[#allocation2 + $0x140] sm:$0xff]
      %v5000 = vld [vmem:[#allocation2 + $0x148] sm:$0xff]
      %v5001 = vld [vmem:[#allocation2 + $0x150] sm:$0xff]
      %v5002 = vld [vmem:[#allocation2 + $0x158] sm:$0xff]
      %v5003 = vld [vmem:[#allocation2 + $0x160] sm:$0xff]
      %v5004 = vld [vmem:[#allocation2 + $0x168] sm:$0xff]
      %v5005 = vld [vmem:[#allocation2 + $0x170] sm:$0xff]
      %v5006 = vld [vmem:[#allocation2 + $0x178] sm:$0xff]
      %v5007 = vld [vmem:[#allocation2 + $0x180] sm:$0xff]
      %v5008 = vld [vmem:[#allocation2 + $0x188] sm:$0xff]
      %v5009 = vld [vmem:[#allocation2 + $0x190] sm:$0xff]
      %v5010 = vld [vmem:[#allocation2 + $0x198] sm:$0xff]
      %v5011 = vld [vmem:[#allocation2 + $0x1a0] sm:$0xff]
      %v5012 = vld [vmem:[#allocation2 + $0x1a8] sm:$0xff]
      %v5013 = vld [vmem:[#allocation2 + $0x1b0] sm:$0xff]
      %v5014 = vld [vmem:[#allocation2 + $0x1b8] sm:$0xff]
      %v5015 = vld [vmem:[%s5] sm:$0xff]
      %5017 = vset.pattern.permute.xlu0 0
      %5018 = vperm.xlu0 %5017, %v5015
      %v5019 = vpop.permute.xlu0 %5018
      %v5022 = vunpack.c.l.b16 %v4958
      %v5023 = vunpack.c.h.b16 %v4958
      %v5024 = vpack.c.b16 %v5022, %v5022
      %v5025 = vpack.c.b16 %v5023, %v5023
      %vm5027 = vcmask 785408
      %v5029 = vsel %vm5027, %v5025, 0
      %5031 = vmatprep.subr.bf16.mxu0 %v4960
      %5032 = vmatpush1.bf16.msra.mxu0 %v4959
      %5033 = vmatprep.subr.bf16.mxu0 %v4964
      %5034 = vmatpush1.bf16.msra.mxu0 %v4963
      %5035 = vmatprep.subr.bf16.mxu0 %v4968
      %5036 = vmatpush1.bf16.msra.mxu0 %v4967
      %5037 = vmatprep.subr.bf16.mxu0 %v4972
      %5038 = vmatpush1.bf16.msra.mxu0 %v4971
      %5039 = vmatprep.subr.bf16.mxu0 %v4976
      %5040 = vmatpush1.bf16.msra.mxu0 %v4975
      %5041 = vmatprep.subr.bf16.mxu0 %v4980
      %5042 = vmatpush1.bf16.msra.mxu0 %v4979
      %5043 = vmatprep.subr.bf16.mxu0 %v4984
      %5044 = vmatpush1.bf16.msra.mxu0 %v4983
      %5045 = vmatprep.subr.bf16.mxu0 %v4988
      %5046 = vmatpush1.bf16.msra.mxu0 %v4987
      %5047 = vmatprep.subr.bf16.mxu0 %v4992
      %5048 = vmatpush1.bf16.msra.mxu0 %v4991
      %5049 = vmatprep.subr.bf16.mxu0 %v4996
      %5050 = vmatpush1.bf16.msra.mxu0 %v4995
      %5051 = vmatprep.subr.bf16.mxu0 %v5000
      %5052 = vmatpush1.bf16.msra.mxu0 %v4999
      %5053 = vmatprep.subr.bf16.mxu0 %v5004
      %5054 = vmatpush1.bf16.msra.mxu0 %v5003
      %5055 = vmatprep.subr.bf16.mxu0 %v5008
      %5056 = vmatpush1.bf16.msra.mxu0 %v5007
      %5057 = vmatprep.subr.bf16.mxu0 %v5012
      %5058 = vmatpush1.bf16.msra.mxu0 %v5011
      %5059 = vmatprep.subr.bf16.mxu0 0
      %5060 = vmatpush1.bf16.msra.mxu0 0
      %5061 = vmatprep.subr.bf16.mxu0 0
      %5062 = vmatpush1.bf16.msra.mxu0 0
      %5063 = vmatprep.mubr.bf16.mxu0 %v5029
      %5064 = vmatmul.mubr.bf16.gmra.mrb[0].mxu0 %v5024
      %v5065 = vpop.f32.mrb[0].mxu0
      %v5066 = vadd.f32 %v5019, %v5065
      %v5067 = vpop.f32.mrb[0].mxu0
      %v5068 = vadd.f32 %v5019, %v5067
      %v5069 = vpop.f32.mrb[0].mxu0
      %v5070 = vpop.f32.mrb[0].mxu0
      %5071 = vdwg.mxu0
      %5072 = vmatprep.subr.bf16.mxu0 %v4962
      %5073 = vmatpush1.bf16.msra.mxu0 %v4961
      %5074 = vmatprep.subr.bf16.mxu0 %v4966
      %5075 = vmatpush1.bf16.msra.mxu0 %v4965
      %5076 = vmatprep.subr.bf16.mxu0 %v4970
      %5077 = vmatpush1.bf16.msra.mxu0 %v4969
      %5078 = vmatprep.subr.bf16.mxu0 %v4974
      %5079 = vmatpush1.bf16.msra.mxu0 %v4973
      %5080 = vmatprep.subr.bf16.mxu0 %v4978
      %5081 = vmatpush1.bf16.msra.mxu0 %v4977
      %5082 = vmatprep.subr.bf16.mxu0 %v4982
      %5083 = vmatpush1.bf16.msra.mxu0 %v4981
      %5084 = vmatprep.subr.bf16.mxu0 %v4986
      %5085 = vmatpush1.bf16.msra.mxu0 %v4985
      %5086 = vmatprep.subr.bf16.mxu0 %v4990
      %5087 = vmatpush1.bf16.msra.mxu0 %v4989
      %5088 = vmatprep.subr.bf16.mxu0 %v4994
      %5089 = vmatpush1.bf16.msra.mxu0 %v4993
      %5090 = vmatprep.subr.bf16.mxu0 %v4998
      %5091 = vmatpush1.bf16.msra.mxu0 %v4997
      %5092 = vmatprep.subr.bf16.mxu0 %v5002
      %5093 = vmatpush1.bf16.msra.mxu0 %v5001
      %5094 = vmatprep.subr.bf16.mxu0 %v5006
      %5095 = vmatpush1.bf16.msra.mxu0 %v5005
      %5096 = vmatprep.subr.bf16.mxu0 %v5010
      %5097 = vmatpush1.bf16.msra.mxu0 %v5009
      %5098 = vmatprep.subr.bf16.mxu0 %v5014
      %5099 = vmatpush1.bf16.msra.mxu0 %v5013
      %5100 = vmatprep.subr.bf16.mxu0 0
      %5101 = vmatpush1.bf16.msra.mxu0 0
      %5102 = vmatprep.subr.bf16.mxu0 0
      %5103 = vmatpush1.bf16.msra.mxu0 0
      %5104 = vmatprep.mubr.bf16.mxu0 %v5029
      %5105 = vmatmul.mubr.bf16.gmra.mrb[0].mxu0 %v5024
      %v5106 = vpop.f32.mrb[0].mxu0
      %v5107 = vadd.f32 %v5019, %v5106
      %v5108 = vpop.f32.mrb[0].mxu0
      %v5109 = vadd.f32 %v5019, %v5108
      %v5110 = vpop.f32.mrb[0].mxu0
      %v5111 = vpop.f32.mrb[0].mxu0
      %5112 = vdwg.mxu0
      %v5113 = vadd.f32 %v5066, %v5068
      %v5114 = vadd.f32 %v5113, %v5107
      %v5115 = vadd.f32 %v5114, %v5109
      %5116 = vadd.xlane.f32.xlu0 %v5115
      %v5117 = vpop.xlane.xlu0 %5116
      %v5118 = vmul.f32 %v5117, 0.001953125
      %v5119 = vmul.f32 %v5066, %v5066
      %v5120 = vmul.f32 %v5068, %v5068
      %v5121 = vmul.f32 %v5107, %v5107
      %v5122 = vmul.f32 %v5109, %v5109
      %v5123 = vadd.f32 %v5119, %v5120
      %v5124 = vadd.f32 %v5123, %v5121
      %v5125 = vadd.f32 %v5124, %v5122
      %5126 = vadd.xlane.f32.xlu0 %v5125
      %v5127 = vpop.xlane.xlu0 %5126
      %v5128 = vmul.f32 %v5127, 0.001953125
      %v5129 = vmul.f32 %v5118, %v5118
      %v5130 = vsub.f32 %v5128, %v5129
      %v5131 = vmax.f32 %v5130, 0.0
      %v5132 = vsub.f32 %v5066, %v5118
      %v5133 = vsub.f32 %v5068, %v5118
      %v5134 = vsub.f32 %v5107, %v5118
      %v5135 = vsub.f32 %v5109, %v5118
      %v5136 = vadd.f32 %v5131, 1e-05
      %v5137 = vrsqrt.pop %v5136
      %v5138 = vmul.f32 %v5132, %v5137
      %v5139 = vmul.f32 %v5133, %v5137
      %v5140 = vmul.f32 %v5134, %v5137
      %v5141 = vmul.f32 %v5135, %v5137
      %vm5142 = vcmp.ge.f32.partialorder %v5138, 0.0
      %vm5143 = vcmp.ge.f32.partialorder %v5139, 0.0
      %vm5144 = vcmp.ge.f32.partialorder %v5140, 0.0
      %vm5145 = vcmp.ge.f32.partialorder %v5141, 0.0
      %v5146 = vmul.f32 %v5138, 0.01
      %v5147 = vmul.f32 %v5139, 0.01
      %v5148 = vmul.f32 %v5140, 0.01
      %v5149 = vmul.f32 %v5141, 0.01
      %v5150 = vsel %vm5142, %v5138, %v5146
      %v5151 = vsel %vm5143, %v5139, %v5147
      %v5152 = vsel %vm5144, %v5140, %v5148
      %v5153 = vsel %vm5145, %v5141, %v5149
      %v5154 = vlaneseq
      %v5155 = vand.u32 %v5154, 127
      %v5156 = vadd.s32 %v5155, 128
      %v5157 = vadd.s32 %v5155, 256
      %v5158 = vadd.s32 %v5155, 384
      %5163 = vrot.lane.b32.xlu0 %v5150, 127
      %v5164 = vpop.permute.xlu0 %5163
      %5165 = vrot.lane.b32.xlu0 %v5151, 127
      %v5166 = vpop.permute.xlu0 %5165
      %5167 = vrot.lane.b32.xlu0 %v5152, 127
      %v5168 = vpop.permute.xlu0 %5167
      %5169 = vrot.lane.b32.xlu0 %v5153, 127
      %v5170 = vpop.permute.xlu0 %5169
      %v5171 = vsel %vm1536, %v5164, %v5166
      %v5172 = vsel %vm1536, %v5166, %v5168
      %v5173 = vsel %vm1536, %v5168, %v5170
      %v5179 = vsel %vm1536, %v5170, %v5164
      %vm5180 = vcmp.gt.f32.partialorder %v5171, %v5150
      %vm5181 = vcmp.gt.f32.partialorder %v5172, %v5151
      %vm5182 = vcmp.gt.f32.partialorder %v5173, %v5152
      %vm5183 = vcmp.gt.f32.partialorder %v5179, %v5153
      %v5184 = vsel %vm5180, %v5171, %v5150
      %v5185 = vsel %vm5181, %v5172, %v5151
      %v5186 = vsel %vm5182, %v5173, %v5152
      %v5187 = vsel %vm5183, %v5179, %v5153
      %v5188 = vadd.s32 %v5155, 1
      %v5189 = vadd.s32 %v5156, 1
      %v5190 = vadd.s32 %v5157, 1
      %v5191 = vadd.s32 %v5158, 1
      %v5192 = vsel %vm5180, %v5188, %v5155
      %v5193 = vsel %vm5181, %v5189, %v5156
      %v5194 = vsel %vm5182, %v5190, %v5157
      %v5195 = vsel %vm5183, %v5191, %v5158
      %5200 = vrot.lane.b32.xlu0 %v5184, 120
      %v5201 = vpop.permute.xlu0 %5200
      %5202 = vrot.lane.b32.xlu0 %v5185, 120
      %v5203 = vpop.permute.xlu0 %5202
      %5204 = vrot.lane.b32.xlu0 %v5186, 120
      %v5205 = vpop.permute.xlu0 %5204
      %5206 = vrot.lane.b32.xlu0 %v5187, 120
      %v5207 = vpop.permute.xlu0 %5206
      %v5208 = vsel %vm1755, %v5201, %v5203
      %v5209 = vsel %vm1755, %v5203, %v5205
      %v5210 = vsel %vm1755, %v5205, %v5207
      %v5216 = vsel %vm1755, %v5207, %v5201
      %5217 = vrot.lane.b32.xlu0 %v5192, 120
      %v5218 = vpop.permute.xlu0 %5217
      %5219 = vrot.lane.b32.xlu0 %v5193, 120
      %v5220 = vpop.permute.xlu0 %5219
      %5221 = vrot.lane.b32.xlu0 %v5194, 120
      %v5222 = vpop.permute.xlu0 %5221
      %5223 = vrot.lane.b32.xlu0 %v5195, 120
      %v5224 = vpop.permute.xlu0 %5223
      %v5225 = vsel %vm1755, %v5218, %v5220
      %v5226 = vsel %vm1755, %v5220, %v5222
      %v5227 = vsel %vm1755, %v5222, %v5224
      %v5228 = vsel %vm1755, %v5224, %v5218
      %vm5229 = vcmp.gt.f32.partialorder %v5208, %v5184
      %vm5230 = vcmp.gt.f32.partialorder %v5209, %v5185
      %vm5231 = vcmp.gt.f32.partialorder %v5210, %v5186
      %vm5232 = vcmp.gt.f32.partialorder %v5216, %v5187
      %v5233 = vsel %vm5229, %v5208, %v5184
      %v5234 = vsel %vm5230, %v5209, %v5185
      %v5235 = vsel %vm5231, %v5210, %v5186
      %v5236 = vsel %vm5232, %v5216, %v5187
      %v5237 = vsel %vm5229, %v5225, %v5192
      %v5238 = vsel %vm5230, %v5226, %v5193
      %v5239 = vsel %vm5231, %v5227, %v5194
      %v5240 = vsel %vm5232, %v5228, %v5195
      %5245 = vrot.lane.b32.xlu0 %v5233, 64
      %v5246 = vpop.permute.xlu0 %5245
      %5247 = vrot.lane.b32.xlu0 %v5234, 64
      %v5248 = vpop.permute.xlu0 %5247
      %5249 = vrot.lane.b32.xlu0 %v5235, 64
      %v5250 = vpop.permute.xlu0 %5249
      %5251 = vrot.lane.b32.xlu0 %v5236, 64
      %v5252 = vpop.permute.xlu0 %5251
      %v5253 = vsel %vm705, %v5246, %v5248
      %v5254 = vsel %vm705, %v5248, %v5250
      %v5255 = vsel %vm705, %v5250, %v5252
      %v5261 = vsel %vm705, %v5252, %v5246
      %5262 = vrot.lane.b32.xlu0 %v5237, 64
      %v5263 = vpop.permute.xlu0 %5262
      %5264 = vrot.lane.b32.xlu0 %v5238, 64
      %v5265 = vpop.permute.xlu0 %5264
      %5266 = vrot.lane.b32.xlu0 %v5239, 64
      %v5267 = vpop.permute.xlu0 %5266
      %5268 = vrot.lane.b32.xlu0 %v5240, 64
      %v5269 = vpop.permute.xlu0 %5268
      %v5270 = vsel %vm705, %v5263, %v5265
      %v5271 = vsel %vm705, %v5265, %v5267
      %v5272 = vsel %vm705, %v5267, %v5269
      %v5273 = vsel %vm705, %v5269, %v5263
      %vm5274 = vcmp.gt.f32.partialorder %v5253, %v5233
      %vm5275 = vcmp.gt.f32.partialorder %v5254, %v5234
      %vm5276 = vcmp.gt.f32.partialorder %v5255, %v5235
      %vm5277 = vcmp.gt.f32.partialorder %v5261, %v5236
      %v5278 = vsel %vm5274, %v5253, %v5233
      %v5279 = vsel %vm5275, %v5254, %v5234
      %v5280 = vsel %vm5276, %v5255, %v5235
      %v5281 = vsel %vm5277, %v5261, %v5236
      %v5282 = vsel %vm5274, %v5270, %v5237
      %v5283 = vsel %vm5275, %v5271, %v5238
      %v5284 = vsel %vm5276, %v5272, %v5239
      %v5285 = vsel %vm5277, %v5273, %v5240
      %5286 = vst [vmem:[%s286] sm:$0xff] %v5278
      %5287 = vst [vmem:[%s286 + $0x8] sm:$0xff] %v5279
      %5288 = vst [vmem:[%s286 + $0x10] sm:$0xff] %v5280
      %5289 = vst [vmem:[%s286 + $0x18] sm:$0xff] %v5281
      %5290 = vst [vmem:[%s291] sm:$0xff] %v5282
      %5291 = vst [vmem:[%s291 + $0x8] sm:$0xff] %v5283
      %5292 = vst [vmem:[%s291 + $0x10] sm:$0xff] %v5284
      %5293 = vst [vmem:[%s291 + $0x18] sm:$0xff] %v5285
      %p5294 = scmp.lt.s32.totalorder %s19, 1
      %s5295 = scalar_select %p5294, %s19, 1
      %s5296 = smul.addr %s5295, 4
      %s5297 = smul.addr %s5296, 8
      %s5298 = scalar_lea.vmem %s6, %s5297
      %p5299 = scmp.lt.s32.totalorder %s19, 1
      %s5300 = scalar_select %p5299, %s19, 1
      %s5301 = smul.addr %s5300, 4
      %s5302 = smul.addr %s5301, 8
      %s5303 = scalar_lea.vmem %s7, %s5302
      // Predicated region
      $region45: #{down_forward.1} parent=43 // pred_check
        %p5304 = pneg %p168
      $region46: #{down_forward.1} parent=43 // pred_check_branch
        %5306 = sbr.rel (%p5304) target = $region48
      $region47: #{down_forward.1} parent=43 // pred_region
        _
      $region48: #{down_forward.1} parent=43 // pred_fallthru
        _
      // Predicated region
      $region49: #{down_forward.1} parent=43 // pred_check
        %p5307 = pneg %p194
      $region50: #{down_forward.1} parent=43 // pred_check_branch
        %5309 = sbr.rel (%p5307) target = $region52
      $region51: #{down_forward.1} parent=43 // pred_region
        _
      $region52: #{down_forward.1} parent=43 // pred_fallthru
        _
    $region44: #{down_forward.1} parent=5 // pred_fallthru
      _
    %p5310 = scmp.le.s32.totalorder 2, %s14
    // Predicated region
    $region53: #{down_forward.1} parent=5 // pred_check
      %p5311 = pneg %p5310
    $region54: #{down_forward.1} parent=5 // pred_check_branch
      %5313 = sbr.rel (%p5311) target = $region56
    $region55: #{down_forward.1} parent=5 // pred_region
      %s5314 = ssub.s32 %s14, 2
      // Predicated region
      $region57: #{down_forward.1} parent=55 // pred_check
        %p5315 = pneg %p174
      $region58: #{down_forward.1} parent=55 // pred_check_branch
        %5317 = sbr.rel (%p5315) target = $region60
      $region59: #{down_forward.1} parent=55 // pred_region
        %p5318 = scmp.lt.s32.totalorder %s20, 1
        %s5319 = scalar_select %p5318, %s20, 1
        %s5320 = smul.addr %s5319, 4
        %s5321 = smul.addr %s5320, 8
        %s5322 = scalar_lea.vmem %s6, %s5321
      $region60: #{down_forward.1} parent=55 // pred_fallthru
        _
      // Predicated region
      $region61: #{down_forward.1} parent=55 // pred_check
        %p5323 = pneg %p200
      $region62: #{down_forward.1} parent=55 // pred_check_branch
        %5325 = sbr.rel (%p5323) target = $region64
      $region63: #{down_forward.1} parent=55 // pred_region
        %p5326 = scmp.lt.s32.totalorder %s20, 1
        %s5327 = scalar_select %p5326, %s20, 1
        %s5328 = smul.addr %s5327, 4
        %s5329 = smul.addr %s5328, 8
        %s5330 = scalar_lea.vmem %s7, %s5329
      $region64: #{down_forward.1} parent=55 // pred_fallthru
        _
    $region56: #{down_forward.1} parent=5 // pred_fallthru
      _
  $region6: #{down_forward.1} parent=0 // loop_footer
    %s18 = sadd.s32 1, %s14
  $region7: #{down_forward.1} parent=0 // loop_footer_branch
    %13 = sbr.rel target = $region3
  $region8: #{down_forward.1} parent=0 // loop_exit
    _

</llo_original>
